<compile_context>
chip_gen: v7x
topology: tpu7x:2x2x1
jax: 0.10.0
libtpu: 0.0.40
codegen_flags: <defaults>
</compile_context>

<pallas_src>
from functools import partial

import numpy as np
import jax
import jax.numpy as jnp
from jax import lax
from jax.experimental import pallas as pl
from jax.experimental.pallas import tpu as pltpu


def _round_up(x, m):
    return ((x + m - 1) // m) * m


# --------------------------------------------------------------------------
# Mel filterbank (librosa-style: slaney mel scale, htk=False, norm="slaney"),
# same as audiotools AudioSignal.get_mel_filters.  Pure-numpy setup glue.
# --------------------------------------------------------------------------
def _hz_to_mel(f):
    f = np.asarray(f, dtype=np.float64)
    f_sp = 200.0 / 3.0
    mels = f / f_sp
    min_log_hz = 1000.0
    min_log_mel = min_log_hz / f_sp
    logstep = np.log(6.4) / 27.0
    return np.where(
        f >= min_log_hz,
        min_log_mel + np.log(np.maximum(f, 1e-10) / min_log_hz) / logstep,
        mels,
    )


def _mel_to_hz(m):
    m = np.asarray(m, dtype=np.float64)
    f_sp = 200.0 / 3.0
    freqs = f_sp * m
    min_log_hz = 1000.0
    min_log_mel = min_log_hz / f_sp
    logstep = np.log(6.4) / 27.0
    return np.where(
        m >= min_log_mel,
        min_log_hz * np.exp(logstep * (m - min_log_mel)),
        freqs,
    )


def mel_filterbank(sr, n_fft, n_mels, fmin, fmax):
    if fmax is None:
        fmax = sr / 2.0
    fftfreqs = np.linspace(0.0, sr / 2.0, n_fft // 2 + 1)
    mel_f = _mel_to_hz(np.linspace(_hz_to_mel(fmin), _hz_to_mel(fmax), n_mels + 2))
    fdiff = np.diff(mel_f)
    ramps = mel_f[:, None] - fftfreqs[None, :]
    lower = -ramps[:-2] / fdiff[:-1, None]
    upper = ramps[2:] / fdiff[1:, None]
    weights = np.maximum(0.0, np.minimum(lower, upper))
    enorm = 2.0 / (mel_f[2 : n_mels + 2] - mel_f[:n_mels])
    weights = weights * enorm[:, None]
    return weights.astype(np.float32)  # (n_mels, n_fft//2 + 1)


# --------------------------------------------------------------------------
# Wrapper-side prep: reflect-pad and reshape into hop-sized rows (bf16).
# No 4x frame expansion, no gather -- frames are rebuilt inside the kernel.
# --------------------------------------------------------------------------
def _signal_rows(audio, window_length, hop_length, tf):
    """audio (B, C, L) -> rows (B*C, steps*tf + 8, hop) bf16, T frames, steps."""
    B, C, L = audio.shape
    S = B * C
    pad = window_length // 2
    flat = audio.reshape(S, L).astype(jnp.bfloat16)
    padded = jnp.pad(flat, ((0, 0), (pad, pad)), mode="reflect")
    Lp = L + 2 * pad
    T = 1 + (Lp - window_length) // hop_length      # torch.stft(center=True)
    steps = -(-T // tf)                              # ceil
    R = steps * tf + 8                               # +8 boundary rows
    need = R * hop_length
    if need > Lp:
        padded = jnp.pad(padded, ((0, 0), (0, need - Lp)))
    elif need < Lp:
        padded = padded[:, :need]
    rows = padded.reshape(S, R, hop_length)
    return rows, T, steps


# --------------------------------------------------------------------------
# Pallas kernel: in-kernel framing -> windowed DFT magnitude -> mel -> masked
# L1 partial sums (mag + log domain), accumulated into resident (8, Mp) outputs.
# Grid = (signals, frame-tiles), both "arbitrary" (pure reduction).
# --------------------------------------------------------------------------
def _mel_l1_kernel(
    xm_ref, xe_ref, ym_ref, ye_ref, cs_ref, melT_ref,
    mag_ref, log_ref,
    *, n_frames, tf, Fp, clamp_eps, pow_, sqrt_bf16,
):
    sig = pl.program_id(0)
    it = pl.program_id(1)
    Mp = mag_ref.shape[1]

    @pl.when(jnp.logical_and(sig == 0, it == 0))
    def _init():
        mag_ref[...] = jnp.zeros_like(mag_ref)
        log_ref[...] = jnp.zeros_like(log_ref)

    def build_frames(main_ref, extra_ref):
        # main: (tf, hop) rows, extra: next 8 rows of the same signal.
        rows = jnp.concatenate([main_ref[0], extra_ref[0]], axis=0)  # (tf+8, hop)
        # frame t = rows[t : t+4] flattened (hop = W/4) -> 4 row-shifted slices
        return jnp.concatenate([rows[j : j + tf, :] for j in range(4)], axis=1)

    xfr = build_frames(xm_ref, xe_ref)    # (tf, W) bf16
    yfr = build_frames(ym_ref, ye_ref)

    cs = cs_ref[...]                      # (W, 2*Fp) bf16: [hann*cos | hann*sin]
    xri = jnp.dot(xfr, cs, preferred_element_type=jnp.float32)   # (tf, 2*Fp)
    yri = jnp.dot(yfr, cs, preferred_element_type=jnp.float32)

    xr, xi = xri[:, :Fp], xri[:, Fp:]
    yr, yi = yri[:, :Fp], yri[:, Fp:]
    xpwr = xr * xr + xi * xi
    ypwr = yr * yr + yi * yi
    if sqrt_bf16:       # v6e/v7x: bf16 EUP sqrt (result fed to bf16 MXU anyway)
        xmag = jnp.sqrt(xpwr.astype(jnp.bfloat16))
        ymag = jnp.sqrt(ypwr.astype(jnp.bfloat16))
    else:               # v5e and older: no bf16 EUP
        xmag = jnp.sqrt(xpwr).astype(jnp.bfloat16)
        ymag = jnp.sqrt(ypwr).astype(jnp.bfloat16)

    melT = melT_ref[...]                  # (Fp, Mp) bf16
    xmel = jnp.dot(xmag, melT, preferred_element_type=jnp.float32)  # (tf, Mp)
    ymel = jnp.dot(ymag, melT, preferred_element_type=jnp.float32)

    # Mask out padding frames (they would see real-but-different audio tails).
    frame_idx = it * tf + lax.broadcasted_iota(jnp.int32, (tf, Mp), 0)
    valid = frame_idx < n_frames

    mag_d = jnp.where(valid, jnp.abs(xmel - ymel), 0.0)
    # exact rewrite of log10(clamp(x, eps) ** p) -> p * log10(max(x, eps))
    xlog = pow_ * jnp.log10(jnp.maximum(xmel, clamp_eps))
    ylog = pow_ * jnp.log10(jnp.maximum(ymel, clamp_eps))
    log_d = jnp.where(valid, jnp.abs(xlog - ylog), 0.0)

    # Lane-parallel partial reduce: (tf, Mp) -> (8, Mp) with VPU-only vreg adds.
    mag_ref[...] += mag_d.reshape(tf // 8, 8, Mp).sum(axis=0)
    log_ref[...] += log_d.reshape(tf // 8, 8, Mp).sum(axis=0)


def _mel_l1_sums(x_rows, y_rows, cs, melT, *, n_frames, tf,
                 clamp_eps, pow_, sqrt_bf16, vmem_cap):
    S, R, hop = x_rows.shape
    W = cs.shape[0]
    Fp = cs.shape[1] // 2
    Mp = melT.shape[1]
    steps = (R - 8) // tf
    tf8 = tf // 8

    kernel = partial(
        _mel_l1_kernel, n_frames=n_frames, tf=tf, Fp=Fp,
        clamp_eps=clamp_eps, pow_=pow_, sqrt_bf16=sqrt_bf16,
    )

    in_specs = [
        pl.BlockSpec((1, tf, hop), lambda s, i: (s, i, 0)),             # x rows (main)
        pl.BlockSpec((1, 8, hop), lambda s, i: (s, (i + 1) * tf8, 0)),  # x rows (boundary)
        pl.BlockSpec((1, tf, hop), lambda s, i: (s, i, 0)),             # y rows (main)
        pl.BlockSpec((1, 8, hop), lambda s, i: (s, (i + 1) * tf8, 0)),  # y rows (boundary)
        pl.BlockSpec((W, 2 * Fp), lambda s, i: (0, 0)),                 # [cos|sin]*hann
        pl.BlockSpec((Fp, Mp), lambda s, i: (0, 0)),                    # mel^T
    ]
    out_specs = [
        pl.BlockSpec((8, Mp), lambda s, i: (0, 0)),
        pl.BlockSpec((8, Mp), lambda s, i: (0, 0)),
    ]

    # VMEM budget: double-buffered inputs + f32 intermediates + headroom.
    in_db = (2 * 2 * (tf + 8) * hop * 2              # x/y row tiles, bf16, 2 bufs
             + 2 * (W * 2 * Fp + Fp * Mp) * 2)       # cs / melT, bf16, 2 bufs
    interm = (2 * tf * W * 2                          # rebuilt frames (bf16)
              + 4 * tf * 2 * Fp * 4                   # xri/yri + pwr (f32)
              + 8 * tf * Mp * 4)                      # mel / log / diff headroom
    vmem_limit = int(min(vmem_cap, max(32 << 20, in_db + interm + (16 << 20))))

    flops = 2 * S * steps * (2 * tf * W * (2 * Fp) + 2 * tf * Fp * Mp)
    transcend = 2 * S * steps * tf * (Fp + Mp)
    bytes_acc = ((x_rows.size + y_rows.size) * 2
                 + (cs.size + melT.size) * 2 + 2 * 8 * Mp * 4)
    cost = pl.CostEstimate(flops=int(flops), transcendentals=int(transcend),
                           bytes_accessed=int(bytes_acc))

    mag_p, log_p = pl.pallas_call(
        kernel,
        out_shape=(
            jax.ShapeDtypeStruct((8, Mp), jnp.float32),
            jax.ShapeDtypeStruct((8, Mp), jnp.float32),
        ),
        grid_spec=pltpu.PrefetchScalarGridSpec(
            num_scalar_prefetch=0,
            grid=(S, steps),
            in_specs=in_specs,
            out_specs=out_specs,
        ),
        compiler_params=pltpu.CompilerParams(
            dimension_semantics=("arbitrary", "arbitrary"),
            vmem_limit_bytes=vmem_limit,
        ),
        cost_estimate=cost,
    )(x_rows, x_rows, y_rows, y_rows, cs, melT)

    return jnp.sum(mag_p), jnp.sum(log_p)


# --------------------------------------------------------------------------
# Module-equivalent wrapper
# --------------------------------------------------------------------------
class MelSpectrogramLoss:
    """JAX/Pallas equivalent of the PyTorch MelSpectrogramLoss (L1 loss_fn)."""

    def __init__(
        self,
        sample_rate=16000,
        n_mels=(150, 80),
        window_lengths=(2048, 512),
        clamp_eps=1e-5,
        mag_weight=1.0,
        log_weight=1.0,
        pow=2.0,
        weight=1.0,
        mel_fmin=(0.0, 0.0),
        mel_fmax=(None, None),
    ):
        self.sample_rate = sample_rate
        self.clamp_eps = float(clamp_eps)
        self.mag_weight = float(mag_weight)
        self.log_weight = float(log_weight)
        self.pow = float(pow)
        self.weight = float(weight)

        try:
            kind = jax.devices()[0].device_kind.lower()
        except Exception:  # pragma: no cover
            kind = ""
        is_v7 = ("v7" in kind) or ("7x" in kind)
        is_v5_or_older = any(t in kind for t in ("v2", "v3", "v4", "v5"))
        # bf16 EUP sqrt only on v6e/v7x (v5e has no bf16 VPU/EUP).
        self._sqrt_bf16 = bool(kind) and not is_v5_or_older
        # v7x has 64 MiB physical VMEM; v5e/v6e have 128 MiB.
        self._vmem_cap = (48 << 20) if is_v7 else (100 << 20)

        self.configs = []
        for nm, fmin, fmax, W in zip(n_mels, mel_fmin, mel_fmax, window_lengths):
            W = int(W)
            nm = int(nm)
            hop = W // 4
            F = W // 2 + 1
            Fp = _round_up(F, 128)
            Mp = _round_up(nm, 128)

            # per-config / per-chip frame tile
            if is_v7:
                tf_base = 256 if W >= 1024 else 512
            else:
                tf_base = 512 if W >= 1024 else 1024

            # periodic hann window (scipy.signal.get_window('hann', W))
            n = np.arange(W, dtype=np.float64)
            win = 0.5 - 0.5 * np.cos(2.0 * np.pi * n / W)

            # onesided DFT matrices with the window folded in, cos|sin fused
            k = np.arange(F, dtype=np.float64)
            ang = 2.0 * np.pi * n[:, None] * k[None, :] / W
            cosw = (win[:, None] * np.cos(ang)).astype(np.float32)   # (W, F)
            sinw = (win[:, None] * np.sin(ang)).astype(np.float32)   # (W, F)
            mel_fb = mel_filterbank(sample_rate, W, nm, fmin, fmax)  # (M, F)

            cs_p = np.zeros((W, 2 * Fp), np.float32)
            cs_p[:, :F] = cosw
            cs_p[:, Fp:Fp + F] = sinw
            melT_p = np.zeros((Fp, Mp), np.float32)
            melT_p[:F, :nm] = mel_fb.T

            self.configs.append(
                dict(
                    window_length=W,
                    hop_length=hop,
                    n_mels=nm,
                    tf_base=tf_base,
                    cs=jnp.asarray(cs_p, dtype=jnp.bfloat16),      # (W, 2*Fp)
                    melT=jnp.asarray(melT_p, dtype=jnp.bfloat16),  # (Fp, Mp)
                    # full-precision copies for the pure-JAX reference
                    cosw_f32=jnp.asarray(cosw),                    # (W, F)
                    sinw_f32=jnp.asarray(sinw),                    # (W, F)
                    melT_f32=jnp.asarray(mel_fb.T),                # (F, M)
                )
            )

    def __call__(self, x, y):
        """x, y: (B, C, L) float32 waveforms."""
        B, C, L = x.shape
        loss = jnp.float32(0.0)
        for cfg in self.configs:
            W, hop = cfg["window_length"], cfg["hop_length"]
            T = 1 + (L + 2 * (W // 2) - W) // hop
            tf = max(8, min(cfg["tf_base"], _round_up(T, 8)))
            x_rows, _, _ = _signal_rows(x, W, hop, tf)
            y_rows, _, _ = _signal_rows(y, W, hop, tf)
            mag_sum, log_sum = _mel_l1_sums(
                x_rows, y_rows, cfg["cs"], cfg["melT"],
                n_frames=T, tf=tf,
                clamp_eps=self.clamp_eps, pow_=self.pow,
                sqrt_bf16=self._sqrt_bf16, vmem_cap=self._vmem_cap,
            )
            count = jnp.float32(B * C * T * cfg["n_mels"])  # L1Loss 'mean' denom
            loss = loss + self.log_weight * (log_sum / count)
            loss = loss + self.mag_weight * (mag_sum / count)
        return loss


# --------------------------------------------------------------------------
# Pure-JAX f32 reference (correctness sanity check)
# --------------------------------------------------------------------------
def _frame_signal_ref(audio, window_length, hop_length):
    B, C, L = audio.shape
    pad = window_length // 2
    flat = audio.reshape(B * C, L)
    padded = jnp.pad(flat, ((0, 0), (pad, pad)), mode="reflect")
    Lp = L + 2 * pad
    T = 1 + (Lp - window_length) // hop_length
    idx = jnp.arange(T)[:, None] * hop_length + jnp.arange(window_length)[None, :]
    frames = padded[:, idx]
    return frames.reshape(-1, window_length), T


def _reference_loss(mod, x, y):
    loss = 0.0
    for cfg in mod.configs:
        xf, _ = _frame_signal_ref(x, cfg["window_length"], cfg["hop_length"])
        yf, _ = _frame_signal_ref(y, cfg["window_length"], cfg["hop_length"])

        def mel(frames):
            r = frames @ cfg["cosw_f32"]
            i = frames @ cfg["sinw_f32"]
            mag = jnp.sqrt(r * r + i * i)
            return mag @ cfg["melT_f32"]

        xm, ym = mel(xf), mel(yf)
        xl = jnp.log10(jnp.power(jnp.maximum(xm, mod.clamp_eps), mod.pow))
        yl = jnp.log10(jnp.power(jnp.maximum(ym, mod.clamp_eps), mod.pow))
        loss = loss + mod.log_weight * jnp.mean(jnp.abs(xl - yl))
        loss = loss + mod.mag_weight * jnp.mean(jnp.abs(xm - ym))
    return loss


if __name__ == "__main__":
    key = jax.random.PRNGKey(0)
    kx, ky = jax.random.split(key)
    B, C, L = 2, 1, 1024  # small synthetic mono signals
    x = 0.1 * jax.random.normal(kx, (B, C, L), dtype=jnp.float32)
    y = 0.1 * jax.random.normal(ky, (B, C, L), dtype=jnp.float32)

    # Small-but-faithful instantiation of the module (constructor params).
    loss_mod = MelSpectrogramLoss(
        sample_rate=16000,
        n_mels=[48, 32],
        window_lengths=[256, 128],
        mel_fmin=[0.0, 0.0],
        mel_fmax=[None, None],
    )

    loss = jax.jit(lambda a, b: loss_mod(a, b))(x, y)
    loss = jax.block_until_ready(loss)

    ref = jax.block_until_ready(_reference_loss(loss_mod, x, y))
    np.testing.assert_allclose(np.asarray(loss), np.asarray(ref), rtol=2e-2, atol=1e-3)

    print("KERNEL_OK")
</pallas_src>

<mosaic_0001>
module attributes {stable_mosaic.version = 11 : i64} {
  func.func @_mel_l1_kernel(%arg0: i32, %arg1: i32, %arg2: memref<1x40x32xbf16, #tpu.memory_space<vmem>>, %arg3: memref<1x8x32xbf16, #tpu.memory_space<vmem>>, %arg4: memref<1x40x32xbf16, #tpu.memory_space<vmem>>, %arg5: memref<1x8x32xbf16, #tpu.memory_space<vmem>>, %arg6: memref<128x256xbf16, #tpu.memory_space<vmem>>, %arg7: memref<128x128xbf16, #tpu.memory_space<vmem>>, %arg8: memref<8x128xf32, #tpu.memory_space<vmem>>, %arg9: memref<8x128xf32, #tpu.memory_space<vmem>>) attributes {dimension_semantics = [#tpu.dimension_semantics<arbitrary>, #tpu.dimension_semantics<arbitrary>], iteration_bounds = array<i64: 2, 1>, scalar_prefetch = 0 : i64, scratch_operands = 0 : i64, tpu.core_type = #tpu.core_type<tc>, window_params = [{transform_indices = @transform_0, window_bounds = array<i64: 1, 40, 32>}, {transform_indices = @transform_1, window_bounds = array<i64: 1, 8, 32>}, {transform_indices = @transform_2, window_bounds = array<i64: 1, 40, 32>}, {transform_indices = @transform_3, window_bounds = array<i64: 1, 8, 32>}, {pipeline_mode = #tpu.pipeline_mode<synchronous>, transform_indices = @transform_4, window_bounds = array<i64: 128, 256>}, {pipeline_mode = #tpu.pipeline_mode<synchronous>, transform_indices = @transform_5, window_bounds = array<i64: 128, 128>}, {pipeline_mode = #tpu.pipeline_mode<synchronous>, transform_indices = @transform_6, window_bounds = array<i64: 8, 128>}, {pipeline_mode = #tpu.pipeline_mode<synchronous>, transform_indices = @transform_7, window_bounds = array<i64: 8, 128>}]} {
    %c0_i32 = arith.constant 0 : i32
    %0 = arith.cmpi eq, %arg0, %c0_i32 : i32
    %c0_i32_0 = arith.constant 0 : i32
    %1 = arith.cmpi eq, %arg1, %c0_i32_0 : i32
    %2 = arith.andi %0, %1 : i1
    %3 = arith.extui %2 : i1 to i32
    %c0_i32_1 = arith.constant 0 : i32
    %4 = arith.cmpi ne, %3, %c0_i32_1 : i32
    scf.if %4 {
      %cst_38 = arith.constant 0.000000e+00 : f32
      %83 = vector.broadcast %cst_38 : f32 to vector<8x128xf32>
      %c0_39 = arith.constant 0 : index
      %c0_40 = arith.constant 0 : index
      %84 = vector.load %arg8[%c0_39, %c0_40] : memref<8x128xf32, #tpu.memory_space<vmem>>, vector<8x128xf32>
      tpu.vector_store %arg8[%c0_39, %c0_40], %83 {strides = array<i32>} : memref<8x128xf32, #tpu.memory_space<vmem>>, vector<8x128xf32>,
      %cst_41 = arith.constant 0.000000e+00 : f32
      %85 = vector.broadcast %cst_41 : f32 to vector<8x128xf32>
      %c0_42 = arith.constant 0 : index
      %c0_43 = arith.constant 0 : index
      %86 = vector.load %arg9[%c0_42, %c0_43] : memref<8x128xf32, #tpu.memory_space<vmem>>, vector<8x128xf32>
      tpu.vector_store %arg9[%c0_42, %c0_43], %85 {strides = array<i32>} : memref<8x128xf32, #tpu.memory_space<vmem>>, vector<8x128xf32>,
    } else {
    }
    %c0 = arith.constant 0 : index
    %c0_2 = arith.constant 0 : index
    %c0_3 = arith.constant 0 : index
    %5 = vector.load %arg2[%c0, %c0_2, %c0_3] : memref<1x40x32xbf16, #tpu.memory_space<vmem>>, vector<1x40x32xbf16>
    %6 = vector.shape_cast %5 : vector<1x40x32xbf16> to vector<40x32xbf16>
    %c0_4 = arith.constant 0 : index
    %c0_5 = arith.constant 0 : index
    %c0_6 = arith.constant 0 : index
    %7 = vector.load %arg3[%c0_4, %c0_5, %c0_6] : memref<1x8x32xbf16, #tpu.memory_space<vmem>>, vector<1x8x32xbf16>
    %8 = vector.shape_cast %7 : vector<1x8x32xbf16> to vector<8x32xbf16>
    %9 = tpu.concatenate %6, %8 in 0 : vector<40x32xbf16>, vector<8x32xbf16> -> vector<48x32xbf16>
    %10 = vector.extract_strided_slice %9 {offsets = [0, 0], sizes = [40, 32], strides = [1, 1]} : vector<48x32xbf16> to vector<40x32xbf16>
    %11 = vector.extract_strided_slice %9 {offsets = [1, 0], sizes = [40, 32], strides = [1, 1]} : vector<48x32xbf16> to vector<40x32xbf16>
    %12 = vector.extract_strided_slice %9 {offsets = [2, 0], sizes = [40, 32], strides = [1, 1]} : vector<48x32xbf16> to vector<40x32xbf16>
    %13 = vector.extract_strided_slice %9 {offsets = [3, 0], sizes = [40, 32], strides = [1, 1]} : vector<48x32xbf16> to vector<40x32xbf16>
    %14 = tpu.concatenate %10, %11, %12, %13 in 1 : vector<40x32xbf16>, vector<40x32xbf16>, vector<40x32xbf16>, vector<40x32xbf16> -> vector<40x128xbf16>
    %c0_7 = arith.constant 0 : index
    %c0_8 = arith.constant 0 : index
    %c0_9 = arith.constant 0 : index
    %15 = vector.load %arg4[%c0_7, %c0_8, %c0_9] : memref<1x40x32xbf16, #tpu.memory_space<vmem>>, vector<1x40x32xbf16>
    %16 = vector.shape_cast %15 : vector<1x40x32xbf16> to vector<40x32xbf16>
    %c0_10 = arith.constant 0 : index
    %c0_11 = arith.constant 0 : index
    %c0_12 = arith.constant 0 : index
    %17 = vector.load %arg5[%c0_10, %c0_11, %c0_12] : memref<1x8x32xbf16, #tpu.memory_space<vmem>>, vector<1x8x32xbf16>
    %18 = vector.shape_cast %17 : vector<1x8x32xbf16> to vector<8x32xbf16>
    %19 = tpu.concatenate %16, %18 in 0 : vector<40x32xbf16>, vector<8x32xbf16> -> vector<48x32xbf16>
    %20 = vector.extract_strided_slice %19 {offsets = [0, 0], sizes = [40, 32], strides = [1, 1]} : vector<48x32xbf16> to vector<40x32xbf16>
    %21 = vector.extract_strided_slice %19 {offsets = [1, 0], sizes = [40, 32], strides = [1, 1]} : vector<48x32xbf16> to vector<40x32xbf16>
    %22 = vector.extract_strided_slice %19 {offsets = [2, 0], sizes = [40, 32], strides = [1, 1]} : vector<48x32xbf16> to vector<40x32xbf16>
    %23 = vector.extract_strided_slice %19 {offsets = [3, 0], sizes = [40, 32], strides = [1, 1]} : vector<48x32xbf16> to vector<40x32xbf16>
    %24 = tpu.concatenate %20, %21, %22, %23 in 1 : vector<40x32xbf16>, vector<40x32xbf16>, vector<40x32xbf16>, vector<40x32xbf16> -> vector<40x128xbf16>
    %c0_13 = arith.constant 0 : index
    %c0_14 = arith.constant 0 : index
    %25 = vector.load %arg6[%c0_13, %c0_14] : memref<128x256xbf16, #tpu.memory_space<vmem>>, vector<128x256xbf16>
    %cst = arith.constant dense<0.000000e+00> : vector<40x256xf32>
    %26 = tpu.matmul %14, %25, %cst {dimension_numbers = #tpu.dot_dimension_numbers<[1], [0], [0], [1], [0, 0, 1, 1], [], []>} : vector<40x128xbf16>, vector<128x256xbf16>, vector<40x256xf32> -> vector<40x256xf32>
    %cst_15 = arith.constant dense<0.000000e+00> : vector<40x256xf32>
    %27 = tpu.matmul %24, %25, %cst_15 {dimension_numbers = #tpu.dot_dimension_numbers<[1], [0], [0], [1], [0, 0, 1, 1], [], []>} : vector<40x128xbf16>, vector<128x256xbf16>, vector<40x256xf32> -> vector<40x256xf32>
    %28 = vector.extract_strided_slice %26 {offsets = [0, 0], sizes = [40, 128], strides = [1, 1]} : vector<40x256xf32> to vector<40x128xf32>
    %29 = vector.extract_strided_slice %26 {offsets = [0, 128], sizes = [40, 128], strides = [1, 1]} : vector<40x256xf32> to vector<40x128xf32>
    %30 = vector.extract_strided_slice %27 {offsets = [0, 0], sizes = [40, 128], strides = [1, 1]} : vector<40x256xf32> to vector<40x128xf32>
    %31 = vector.extract_strided_slice %27 {offsets = [0, 128], sizes = [40, 128], strides = [1, 1]} : vector<40x256xf32> to vector<40x128xf32>
    %32 = arith.mulf %28, %28 : vector<40x128xf32>
    %33 = arith.mulf %29, %29 : vector<40x128xf32>
    %34 = arith.addf %32, %33 : vector<40x128xf32>
    %35 = arith.mulf %30, %30 : vector<40x128xf32>
    %36 = arith.mulf %31, %31 : vector<40x128xf32>
    %37 = arith.addf %35, %36 : vector<40x128xf32>
    %38 = arith.truncf %34 : vector<40x128xf32> to vector<40x128xbf16>
    %39 = math.sqrt %38 : vector<40x128xbf16>
    %40 = arith.truncf %37 : vector<40x128xf32> to vector<40x128xbf16>
    %41 = math.sqrt %40 : vector<40x128xbf16>
    %c0_16 = arith.constant 0 : index
    %c0_17 = arith.constant 0 : index
    %42 = vector.load %arg7[%c0_16, %c0_17] : memref<128x128xbf16, #tpu.memory_space<vmem>>, vector<128x128xbf16>
    %cst_18 = arith.constant dense<0.000000e+00> : vector<40x128xf32>
    %43 = tpu.matmul %39, %42, %cst_18 {dimension_numbers = #tpu.dot_dimension_numbers<[1], [0], [0], [1], [0, 0, 1, 1], [], []>} : vector<40x128xbf16>, vector<128x128xbf16>, vector<40x128xf32> -> vector<40x128xf32>
    %cst_19 = arith.constant dense<0.000000e+00> : vector<40x128xf32>
    %44 = tpu.matmul %41, %42, %cst_19 {dimension_numbers = #tpu.dot_dimension_numbers<[1], [0], [0], [1], [0, 0, 1, 1], [], []>} : vector<40x128xbf16>, vector<128x128xbf16>, vector<40x128xf32> -> vector<40x128xf32>
    %c40_i32 = arith.constant 40 : i32
    %45 = arith.muli %arg1, %c40_i32 : i32
    %46 = tpu.iota {dimensions = array<i32: 0>} : vector<40x128xi32>
    %47 = vector.broadcast %45 : i32 to vector<40x128xi32>
    %48 = arith.addi %47, %46 : vector<40x128xi32>
    %c33_i32 = arith.constant 33 : i32
    %49 = vector.broadcast %c33_i32 : i32 to vector<40x128xi32>
    %50 = arith.cmpi slt, %48, %49 : vector<40x128xi32>
    %51 = arith.subf %43, %44 : vector<40x128xf32>
    %52 = math.absf %51 : vector<40x128xf32>
    %cst_20 = arith.constant 0.000000e+00 : f32
    %53 = vector.broadcast %cst_20 : f32 to vector<40x128xf32>
    %54 = arith.select %50, %52, %53 : vector<40x128xi1>, vector<40x128xf32>
    %cst_21 = arith.constant 9.99999974E-6 : f32
    %55 = vector.broadcast %cst_21 : f32 to vector<40x128xf32>
    %56 = arith.maximumf %43, %55 : vector<40x128xf32>
    %57 = math.log %56 : vector<40x128xf32>
    %cst_22 = arith.constant 0.434294492 : f32
    %58 = vector.broadcast %cst_22 : f32 to vector<40x128xf32>
    %59 = arith.mulf %57, %58 : vector<40x128xf32>
    %cst_23 = arith.constant 2.000000e+00 : f32
    %60 = vector.broadcast %cst_23 : f32 to vector<40x128xf32>
    %61 = arith.mulf %60, %59 : vector<40x128xf32>
    %cst_24 = arith.constant 9.99999974E-6 : f32
    %62 = vector.broadcast %cst_24 : f32 to vector<40x128xf32>
    %63 = arith.maximumf %44, %62 : vector<40x128xf32>
    %64 = math.log %63 : vector<40x128xf32>
    %cst_25 = arith.constant 0.434294492 : f32
    %65 = vector.broadcast %cst_25 : f32 to vector<40x128xf32>
    %66 = arith.mulf %64, %65 : vector<40x128xf32>
    %cst_26 = arith.constant 2.000000e+00 : f32
    %67 = vector.broadcast %cst_26 : f32 to vector<40x128xf32>
    %68 = arith.mulf %67, %66 : vector<40x128xf32>
    %69 = arith.subf %61, %68 : vector<40x128xf32>
    %70 = math.absf %69 : vector<40x128xf32>
    %cst_27 = arith.constant 0.000000e+00 : f32
    %71 = vector.broadcast %cst_27 : f32 to vector<40x128xf32>
    %72 = arith.select %50, %70, %71 : vector<40x128xi1>, vector<40x128xf32>
    %c0_28 = arith.constant 0 : index
    %c0_29 = arith.constant 0 : index
    %73 = vector.load %arg8[%c0_28, %c0_29] : memref<8x128xf32, #tpu.memory_space<vmem>>, vector<8x128xf32>
    %74 = vector.shape_cast %54 : vector<40x128xf32> to vector<5x8x128xf32>
    %cst_30 = arith.constant dense<0.000000e+00> : vector<8x128xf32>
    %75 = vector.multi_reduction <add>, %74, %cst_30 [0] : vector<5x8x128xf32> to vector<8x128xf32>
    %76 = arith.addf %73, %75 : vector<8x128xf32>
    %c0_31 = arith.constant 0 : index
    %c0_32 = arith.constant 0 : index
    %77 = vector.load %arg8[%c0_31, %c0_32] : memref<8x128xf32, #tpu.memory_space<vmem>>, vector<8x128xf32>
    tpu.vector_store %arg8[%c0_31, %c0_32], %76 {strides = array<i32>} : memref<8x128xf32, #tpu.memory_space<vmem>>, vector<8x128xf32>,
    %c0_33 = arith.constant 0 : index
    %c0_34 = arith.constant 0 : index
    %78 = vector.load %arg9[%c0_33, %c0_34] : memref<8x128xf32, #tpu.memory_space<vmem>>, vector<8x128xf32>
    %79 = vector.shape_cast %72 : vector<40x128xf32> to vector<5x8x128xf32>
    %cst_35 = arith.constant dense<0.000000e+00> : vector<8x128xf32>
    %80 = vector.multi_reduction <add>, %79, %cst_35 [0] : vector<5x8x128xf32> to vector<8x128xf32>
    %81 = arith.addf %78, %80 : vector<8x128xf32>
    %c0_36 = arith.constant 0 : index
    %c0_37 = arith.constant 0 : index
    %82 = vector.load %arg9[%c0_36, %c0_37] : memref<8x128xf32, #tpu.memory_space<vmem>>, vector<8x128xf32>
    tpu.vector_store %arg9[%c0_36, %c0_37], %81 {strides = array<i32>} : memref<8x128xf32, #tpu.memory_space<vmem>>, vector<8x128xf32>,
    return
  }
  func.func @transform_0(%arg0: i32, %arg1: i32) -> (i32, i32, i32) {
    %c0_i32 = arith.constant 0 : i32
    %c0_i32_0 = arith.constant 0 : i32
    return %arg0, %arg1, %c0_i32 : i32, i32, i32
  }
  func.func @transform_1(%arg0: i32, %arg1: i32) -> (i32, i32, i32) {
    %c1_i32 = arith.constant 1 : i32
    %0 = arith.addi %arg1, %c1_i32 : i32
    %c5_i32 = arith.constant 5 : i32
    %1 = arith.muli %0, %c5_i32 : i32
    %c0_i32 = arith.constant 0 : i32
    %c0_i32_0 = arith.constant 0 : i32
    return %arg0, %1, %c0_i32 : i32, i32, i32
  }
  func.func @transform_2(%arg0: i32, %arg1: i32) -> (i32, i32, i32) {
    %c0_i32 = arith.constant 0 : i32
    %c0_i32_0 = arith.constant 0 : i32
    return %arg0, %arg1, %c0_i32 : i32, i32, i32
  }
  func.func @transform_3(%arg0: i32, %arg1: i32) -> (i32, i32, i32) {
    %c1_i32 = arith.constant 1 : i32
    %0 = arith.addi %arg1, %c1_i32 : i32
    %c5_i32 = arith.constant 5 : i32
    %1 = arith.muli %0, %c5_i32 : i32
    %c0_i32 = arith.constant 0 : i32
    %c0_i32_0 = arith.constant 0 : i32
    return %arg0, %1, %c0_i32 : i32, i32, i32
  }
  func.func @transform_4(%arg0: i32, %arg1: i32) -> (i32, i32) {
    %c0_i32 = arith.constant 0 : i32
    %c0_i32_0 = arith.constant 0 : i32
    %c0_i32_1 = arith.constant 0 : i32
    return %c0_i32, %c0_i32_0 : i32, i32
  }
  func.func @transform_5(%arg0: i32, %arg1: i32) -> (i32, i32) {
    %c0_i32 = arith.constant 0 : i32
    %c0_i32_0 = arith.constant 0 : i32
    %c0_i32_1 = arith.constant 0 : i32
    return %c0_i32, %c0_i32_0 : i32, i32
  }
  func.func @transform_6(%arg0: i32, %arg1: i32) -> (i32, i32) {
    %c0_i32 = arith.constant 0 : i32
    %c0_i32_0 = arith.constant 0 : i32
    %c0_i32_1 = arith.constant 0 : i32
    return %c0_i32, %c0_i32_0 : i32, i32
  }
  func.func @transform_7(%arg0: i32, %arg1: i32) -> (i32, i32) {
    %c0_i32 = arith.constant 0 : i32
    %c0_i32_0 = arith.constant 0 : i32
    %c0_i32_1 = arith.constant 0 : i32
    return %c0_i32, %c0_i32_0 : i32, i32
  }
}

module attributes {stable_mosaic.version = 11 : i64} {
  func.func @_mel_l1_kernel(%arg0: i32, %arg1: i32, %arg2: memref<1x24x64xbf16, #tpu.memory_space<vmem>>, %arg3: memref<1x8x64xbf16, #tpu.memory_space<vmem>>, %arg4: memref<1x24x64xbf16, #tpu.memory_space<vmem>>, %arg5: memref<1x8x64xbf16, #tpu.memory_space<vmem>>, %arg6: memref<256x512xbf16, #tpu.memory_space<vmem>>, %arg7: memref<256x128xbf16, #tpu.memory_space<vmem>>, %arg8: memref<8x128xf32, #tpu.memory_space<vmem>>, %arg9: memref<8x128xf32, #tpu.memory_space<vmem>>) attributes {dimension_semantics = [#tpu.dimension_semantics<arbitrary>, #tpu.dimension_semantics<arbitrary>], iteration_bounds = array<i64: 2, 1>, scalar_prefetch = 0 : i64, scratch_operands = 0 : i64, tpu.core_type = #tpu.core_type<tc>, window_params = [{transform_indices = @transform_0, window_bounds = array<i64: 1, 24, 64>}, {transform_indices = @transform_1, window_bounds = array<i64: 1, 8, 64>}, {transform_indices = @transform_2, window_bounds = array<i64: 1, 24, 64>}, {transform_indices = @transform_3, window_bounds = array<i64: 1, 8, 64>}, {pipeline_mode = #tpu.pipeline_mode<synchronous>, transform_indices = @transform_4, window_bounds = array<i64: 256, 512>}, {pipeline_mode = #tpu.pipeline_mode<synchronous>, transform_indices = @transform_5, window_bounds = array<i64: 256, 128>}, {pipeline_mode = #tpu.pipeline_mode<synchronous>, transform_indices = @transform_6, window_bounds = array<i64: 8, 128>}, {pipeline_mode = #tpu.pipeline_mode<synchronous>, transform_indices = @transform_7, window_bounds = array<i64: 8, 128>}]} {
    %c0_i32 = arith.constant 0 : i32
    %0 = arith.cmpi eq, %arg0, %c0_i32 : i32
    %c0_i32_0 = arith.constant 0 : i32
    %1 = arith.cmpi eq, %arg1, %c0_i32_0 : i32
    %2 = arith.andi %0, %1 : i1
    %3 = arith.extui %2 : i1 to i32
    %c0_i32_1 = arith.constant 0 : i32
    %4 = arith.cmpi ne, %3, %c0_i32_1 : i32
    scf.if %4 {
      %cst_38 = arith.constant 0.000000e+00 : f32
      %83 = vector.broadcast %cst_38 : f32 to vector<8x128xf32>
      %c0_39 = arith.constant 0 : index
      %c0_40 = arith.constant 0 : index
      %84 = vector.load %arg8[%c0_39, %c0_40] : memref<8x128xf32, #tpu.memory_space<vmem>>, vector<8x128xf32>
      tpu.vector_store %arg8[%c0_39, %c0_40], %83 {strides = array<i32>} : memref<8x128xf32, #tpu.memory_space<vmem>>, vector<8x128xf32>,
      %cst_41 = arith.constant 0.000000e+00 : f32
      %85 = vector.broadcast %cst_41 : f32 to vector<8x128xf32>
      %c0_42 = arith.constant 0 : index
      %c0_43 = arith.constant 0 : index
      %86 = vector.load %arg9[%c0_42, %c0_43] : memref<8x128xf32, #tpu.memory_space<vmem>>, vector<8x128xf32>
      tpu.vector_store %arg9[%c0_42, %c0_43], %85 {strides = array<i32>} : memref<8x128xf32, #tpu.memory_space<vmem>>, vector<8x128xf32>,
    } else {
    }
    %c0 = arith.constant 0 : index
    %c0_2 = arith.constant 0 : index
    %c0_3 = arith.constant 0 : index
    %5 = vector.load %arg2[%c0, %c0_2, %c0_3] : memref<1x24x64xbf16, #tpu.memory_space<vmem>>, vector<1x24x64xbf16>
    %6 = vector.shape_cast %5 : vector<1x24x64xbf16> to vector<24x64xbf16>
    %c0_4 = arith.constant 0 : index
    %c0_5 = arith.constant 0 : index
    %c0_6 = arith.constant 0 : index
    %7 = vector.load %arg3[%c0_4, %c0_5, %c0_6] : memref<1x8x64xbf16, #tpu.memory_space<vmem>>, vector<1x8x64xbf16>
    %8 = vector.shape_cast %7 : vector<1x8x64xbf16> to vector<8x64xbf16>
    %9 = tpu.concatenate %6, %8 in 0 : vector<24x64xbf16>, vector<8x64xbf16> -> vector<32x64xbf16>
    %10 = vector.extract_strided_slice %9 {offsets = [0, 0], sizes = [24, 64], strides = [1, 1]} : vector<32x64xbf16> to vector<24x64xbf16>
    %11 = vector.extract_strided_slice %9 {offsets = [1, 0], sizes = [24, 64], strides = [1, 1]} : vector<32x64xbf16> to vector<24x64xbf16>
    %12 = vector.extract_strided_slice %9 {offsets = [2, 0], sizes = [24, 64], strides = [1, 1]} : vector<32x64xbf16> to vector<24x64xbf16>
    %13 = vector.extract_strided_slice %9 {offsets = [3, 0], sizes = [24, 64], strides = [1, 1]} : vector<32x64xbf16> to vector<24x64xbf16>
    %14 = tpu.concatenate %10, %11, %12, %13 in 1 : vector<24x64xbf16>, vector<24x64xbf16>, vector<24x64xbf16>, vector<24x64xbf16> -> vector<24x256xbf16>
    %c0_7 = arith.constant 0 : index
    %c0_8 = arith.constant 0 : index
    %c0_9 = arith.constant 0 : index
    %15 = vector.load %arg4[%c0_7, %c0_8, %c0_9] : memref<1x24x64xbf16, #tpu.memory_space<vmem>>, vector<1x24x64xbf16>
    %16 = vector.shape_cast %15 : vector<1x24x64xbf16> to vector<24x64xbf16>
    %c0_10 = arith.constant 0 : index
    %c0_11 = arith.constant 0 : index
    %c0_12 = arith.constant 0 : index
    %17 = vector.load %arg5[%c0_10, %c0_11, %c0_12] : memref<1x8x64xbf16, #tpu.memory_space<vmem>>, vector<1x8x64xbf16>
    %18 = vector.shape_cast %17 : vector<1x8x64xbf16> to vector<8x64xbf16>
    %19 = tpu.concatenate %16, %18 in 0 : vector<24x64xbf16>, vector<8x64xbf16> -> vector<32x64xbf16>
    %20 = vector.extract_strided_slice %19 {offsets = [0, 0], sizes = [24, 64], strides = [1, 1]} : vector<32x64xbf16> to vector<24x64xbf16>
    %21 = vector.extract_strided_slice %19 {offsets = [1, 0], sizes = [24, 64], strides = [1, 1]} : vector<32x64xbf16> to vector<24x64xbf16>
    %22 = vector.extract_strided_slice %19 {offsets = [2, 0], sizes = [24, 64], strides = [1, 1]} : vector<32x64xbf16> to vector<24x64xbf16>
    %23 = vector.extract_strided_slice %19 {offsets = [3, 0], sizes = [24, 64], strides = [1, 1]} : vector<32x64xbf16> to vector<24x64xbf16>
    %24 = tpu.concatenate %20, %21, %22, %23 in 1 : vector<24x64xbf16>, vector<24x64xbf16>, vector<24x64xbf16>, vector<24x64xbf16> -> vector<24x256xbf16>
    %c0_13 = arith.constant 0 : index
    %c0_14 = arith.constant 0 : index
    %25 = vector.load %arg6[%c0_13, %c0_14] : memref<256x512xbf16, #tpu.memory_space<vmem>>, vector<256x512xbf16>
    %cst = arith.constant dense<0.000000e+00> : vector<24x512xf32>
    %26 = tpu.matmul %14, %25, %cst {dimension_numbers = #tpu.dot_dimension_numbers<[1], [0], [0], [1], [0, 0, 1, 1], [], []>} : vector<24x256xbf16>, vector<256x512xbf16>, vector<24x512xf32> -> vector<24x512xf32>
    %cst_15 = arith.constant dense<0.000000e+00> : vector<24x512xf32>
    %27 = tpu.matmul %24, %25, %cst_15 {dimension_numbers = #tpu.dot_dimension_numbers<[1], [0], [0], [1], [0, 0, 1, 1], [], []>} : vector<24x256xbf16>, vector<256x512xbf16>, vector<24x512xf32> -> vector<24x512xf32>
    %28 = vector.extract_strided_slice %26 {offsets = [0, 0], sizes = [24, 256], strides = [1, 1]} : vector<24x512xf32> to vector<24x256xf32>
    %29 = vector.extract_strided_slice %26 {offsets = [0, 256], sizes = [24, 256], strides = [1, 1]} : vector<24x512xf32> to vector<24x256xf32>
    %30 = vector.extract_strided_slice %27 {offsets = [0, 0], sizes = [24, 256], strides = [1, 1]} : vector<24x512xf32> to vector<24x256xf32>
    %31 = vector.extract_strided_slice %27 {offsets = [0, 256], sizes = [24, 256], strides = [1, 1]} : vector<24x512xf32> to vector<24x256xf32>
    %32 = arith.mulf %28, %28 : vector<24x256xf32>
    %33 = arith.mulf %29, %29 : vector<24x256xf32>
    %34 = arith.addf %32, %33 : vector<24x256xf32>
    %35 = arith.mulf %30, %30 : vector<24x256xf32>
    %36 = arith.mulf %31, %31 : vector<24x256xf32>
    %37 = arith.addf %35, %36 : vector<24x256xf32>
    %38 = arith.truncf %34 : vector<24x256xf32> to vector<24x256xbf16>
    %39 = math.sqrt %38 : vector<24x256xbf16>
    %40 = arith.truncf %37 : vector<24x256xf32> to vector<24x256xbf16>
    %41 = math.sqrt %40 : vector<24x256xbf16>
    %c0_16 = arith.constant 0 : index
    %c0_17 = arith.constant 0 : index
    %42 = vector.load %arg7[%c0_16, %c0_17] : memref<256x128xbf16, #tpu.memory_space<vmem>>, vector<256x128xbf16>
    %cst_18 = arith.constant dense<0.000000e+00> : vector<24x128xf32>
    %43 = tpu.matmul %39, %42, %cst_18 {dimension_numbers = #tpu.dot_dimension_numbers<[1], [0], [0], [1], [0, 0, 1, 1], [], []>} : vector<24x256xbf16>, vector<256x128xbf16>, vector<24x128xf32> -> vector<24x128xf32>
    %cst_19 = arith.constant dense<0.000000e+00> : vector<24x128xf32>
    %44 = tpu.matmul %41, %42, %cst_19 {dimension_numbers = #tpu.dot_dimension_numbers<[1], [0], [0], [1], [0, 0, 1, 1], [], []>} : vector<24x256xbf16>, vector<256x128xbf16>, vector<24x128xf32> -> vector<24x128xf32>
    %c24_i32 = arith.constant 24 : i32
    %45 = arith.muli %arg1, %c24_i32 : i32
    %46 = tpu.iota {dimensions = array<i32: 0>} : vector<24x128xi32>
    %47 = vector.broadcast %45 : i32 to vector<24x128xi32>
    %48 = arith.addi %47, %46 : vector<24x128xi32>
    %c17_i32 = arith.constant 17 : i32
    %49 = vector.broadcast %c17_i32 : i32 to vector<24x128xi32>
    %50 = arith.cmpi slt, %48, %49 : vector<24x128xi32>
    %51 = arith.subf %43, %44 : vector<24x128xf32>
    %52 = math.absf %51 : vector<24x128xf32>
    %cst_20 = arith.constant 0.000000e+00 : f32
    %53 = vector.broadcast %cst_20 : f32 to vector<24x128xf32>
    %54 = arith.select %50, %52, %53 : vector<24x128xi1>, vector<24x128xf32>
    %cst_21 = arith.constant 9.99999974E-6 : f32
    %55 = vector.broadcast %cst_21 : f32 to vector<24x128xf32>
    %56 = arith.maximumf %43, %55 : vector<24x128xf32>
    %57 = math.log %56 : vector<24x128xf32>
    %cst_22 = arith.constant 0.434294492 : f32
    %58 = vector.broadcast %cst_22 : f32 to vector<24x128xf32>
    %59 = arith.mulf %57, %58 : vector<24x128xf32>
    %cst_23 = arith.constant 2.000000e+00 : f32
    %60 = vector.broadcast %cst_23 : f32 to vector<24x128xf32>
    %61 = arith.mulf %60, %59 : vector<24x128xf32>
    %cst_24 = arith.constant 9.99999974E-6 : f32
    %62 = vector.broadcast %cst_24 : f32 to vector<24x128xf32>
    %63 = arith.maximumf %44, %62 : vector<24x128xf32>
    %64 = math.log %63 : vector<24x128xf32>
    %cst_25 = arith.constant 0.434294492 : f32
    %65 = vector.broadcast %cst_25 : f32 to vector<24x128xf32>
    %66 = arith.mulf %64, %65 : vector<24x128xf32>
    %cst_26 = arith.constant 2.000000e+00 : f32
    %67 = vector.broadcast %cst_26 : f32 to vector<24x128xf32>
    %68 = arith.mulf %67, %66 : vector<24x128xf32>
    %69 = arith.subf %61, %68 : vector<24x128xf32>
    %70 = math.absf %69 : vector<24x128xf32>
    %cst_27 = arith.constant 0.000000e+00 : f32
    %71 = vector.broadcast %cst_27 : f32 to vector<24x128xf32>
    %72 = arith.select %50, %70, %71 : vector<24x128xi1>, vector<24x128xf32>
    %c0_28 = arith.constant 0 : index
    %c0_29 = arith.constant 0 : index
    %73 = vector.load %arg8[%c0_28, %c0_29] : memref<8x128xf32, #tpu.memory_space<vmem>>, vector<8x128xf32>
    %74 = vector.shape_cast %54 : vector<24x128xf32> to vector<3x8x128xf32>
    %cst_30 = arith.constant dense<0.000000e+00> : vector<8x128xf32>
    %75 = vector.multi_reduction <add>, %74, %cst_30 [0] : vector<3x8x128xf32> to vector<8x128xf32>
    %76 = arith.addf %73, %75 : vector<8x128xf32>
    %c0_31 = arith.constant 0 : index
    %c0_32 = arith.constant 0 : index
    %77 = vector.load %arg8[%c0_31, %c0_32] : memref<8x128xf32, #tpu.memory_space<vmem>>, vector<8x128xf32>
    tpu.vector_store %arg8[%c0_31, %c0_32], %76 {strides = array<i32>} : memref<8x128xf32, #tpu.memory_space<vmem>>, vector<8x128xf32>,
    %c0_33 = arith.constant 0 : index
    %c0_34 = arith.constant 0 : index
    %78 = vector.load %arg9[%c0_33, %c0_34] : memref<8x128xf32, #tpu.memory_space<vmem>>, vector<8x128xf32>
    %79 = vector.shape_cast %72 : vector<24x128xf32> to vector<3x8x128xf32>
    %cst_35 = arith.constant dense<0.000000e+00> : vector<8x128xf32>
    %80 = vector.multi_reduction <add>, %79, %cst_35 [0] : vector<3x8x128xf32> to vector<8x128xf32>
    %81 = arith.addf %78, %80 : vector<8x128xf32>
    %c0_36 = arith.constant 0 : index
    %c0_37 = arith.constant 0 : index
    %82 = vector.load %arg9[%c0_36, %c0_37] : memref<8x128xf32, #tpu.memory_space<vmem>>, vector<8x128xf32>
    tpu.vector_store %arg9[%c0_36, %c0_37], %81 {strides = array<i32>} : memref<8x128xf32, #tpu.memory_space<vmem>>, vector<8x128xf32>,
    return
  }
  func.func @transform_0(%arg0: i32, %arg1: i32) -> (i32, i32, i32) {
    %c0_i32 = arith.constant 0 : i32
    %c0_i32_0 = arith.constant 0 : i32
    return %arg0, %arg1, %c0_i32 : i32, i32, i32
  }
  func.func @transform_1(%arg0: i32, %arg1: i32) -> (i32, i32, i32) {
    %c1_i32 = arith.constant 1 : i32
    %0 = arith.addi %arg1, %c1_i32 : i32
    %c3_i32 = arith.constant 3 : i32
    %1 = arith.muli %0, %c3_i32 : i32
    %c0_i32 = arith.constant 0 : i32
    %c0_i32_0 = arith.constant 0 : i32
    return %arg0, %1, %c0_i32 : i32, i32, i32
  }
  func.func @transform_2(%arg0: i32, %arg1: i32) -> (i32, i32, i32) {
    %c0_i32 = arith.constant 0 : i32
    %c0_i32_0 = arith.constant 0 : i32
    return %arg0, %arg1, %c0_i32 : i32, i32, i32
  }
  func.func @transform_3(%arg0: i32, %arg1: i32) -> (i32, i32, i32) {
    %c1_i32 = arith.constant 1 : i32
    %0 = arith.addi %arg1, %c1_i32 : i32
    %c3_i32 = arith.constant 3 : i32
    %1 = arith.muli %0, %c3_i32 : i32
    %c0_i32 = arith.constant 0 : i32
    %c0_i32_0 = arith.constant 0 : i32
    return %arg0, %1, %c0_i32 : i32, i32, i32
  }
  func.func @transform_4(%arg0: i32, %arg1: i32) -> (i32, i32) {
    %c0_i32 = arith.constant 0 : i32
    %c0_i32_0 = arith.constant 0 : i32
    %c0_i32_1 = arith.constant 0 : i32
    return %c0_i32, %c0_i32_0 : i32, i32
  }
  func.func @transform_5(%arg0: i32, %arg1: i32) -> (i32, i32) {
    %c0_i32 = arith.constant 0 : i32
    %c0_i32_0 = arith.constant 0 : i32
    %c0_i32_1 = arith.constant 0 : i32
    return %c0_i32, %c0_i32_0 : i32, i32
  }
  func.func @transform_6(%arg0: i32, %arg1: i32) -> (i32, i32) {
    %c0_i32 = arith.constant 0 : i32
    %c0_i32_0 = arith.constant 0 : i32
    %c0_i32_1 = arith.constant 0 : i32
    return %c0_i32, %c0_i32_0 : i32, i32
  }
  func.func @transform_7(%arg0: i32, %arg1: i32) -> (i32, i32) {
    %c0_i32 = arith.constant 0 : i32
    %c0_i32_0 = arith.constant 0 : i32
    %c0_i32_1 = arith.constant 0 : i32
    return %c0_i32, %c0_i32_0 : i32, i32
  }
}

</mosaic_0001>

<llo_original>
// kernel: _lambda_.3
$region0: #{_lambda_.3}
  #allocation0 [shape = 'u32[]', space=smem, size = 0x4, offset = 0x4, fixed_abs, tag = 'smem constant byte address 0x4 - core index']
  #allocation1 [shape = 'u32[144,128]{1,0:T(1,128)}', space=vmem, size = 0x12000, scoped, tag = 'internal scratch']
  %s0 = inlined_call_operand.vmem [shape: bf16[2,48,32], index: 0, kind: input, shape index: {}, may-alias: {0,1}]
  %s1 = inlined_call_operand.vmem [shape: bf16[2,48,32], index: 1, kind: input, shape index: {}, may-alias: {0,1}]
  %s2 = inlined_call_operand.vmem [shape: bf16[2,48,32], index: 2, kind: input, shape index: {}, may-alias: {2,3}]
  %s3 = inlined_call_operand.vmem [shape: bf16[2,48,32], index: 3, kind: input, shape index: {}, may-alias: {2,3}]
  %s4 = inlined_call_operand.vmem [shape: bf16[128,256], index: 4, kind: input, shape index: {}]
  %s5 = inlined_call_operand.vmem [shape: bf16[128,128], index: 5, kind: input, shape index: {}]
  %s6 = inlined_call_operand.vmem [shape: f32[8,128], index: 6, kind: output, shape index: {0}]
  %s7 = inlined_call_operand.vmem [shape: f32[8,128], index: 7, kind: output, shape index: {1}]
  %8 = xla_tuple %s6, %s7
  %s9 = sld [smem:[#allocation0]]
  $region69: #{_lambda_.3} parent=0
    _
  %s11 = ssub.s32 1, %s9
  %s12 = scalar_select 0, %s11, %s9
  loop: start=0, step=1, limit=4
  $region2: #{_lambda_.3} parent=0 // loop_pre_header
    _
  $region3: #{_lambda_.3} parent=0 // loop_header
    %s14 = sphi 0, %s18
    %p15 = scmp.ge.s32.totalorder %s14, 4
    %s21 = sphi 0, %s33
    %s22 = sphi 0, %s29
    %s23 = sphi 0, %s21
    %s24 = sphi 0, %s22
    %s25 = sphi 0, %s23
    %s26 = sphi 0, %s24
    %s38 = sphi 0, %s40
    %s41 = sphi 0, %s38
    %s42 = sphi 0, %s41
    %s58 = sphi 0, %s42
    %s70 = sphi 0, %s72
    %s73 = sphi 0, %s70
    %s74 = sphi 0, %s73
    %s90 = sphi 0, %s74
    %s98 = sphi 0, %s100
    %s101 = sphi 0, %s98
    %s102 = sphi 0, %s101
    %s118 = sphi 0, %s102
    %s130 = sphi 0, %s132
    %s133 = sphi 0, %s130
    %s134 = sphi 0, %s133
    %s150 = sphi 0, %s134
    %s154 = sphi 0, %s154
    %s156 = sphi 0, %s154
    %s157 = sphi 0, %s156
    %s171 = sphi 0, %s157
    %s175 = sphi 0, %s175
    %s177 = sphi 0, %s175
    %s178 = sphi 0, %s177
    %s192 = sphi 0, %s178
    %s196 = sphi 0, %s196
    %s198 = sphi 0, %s196
    %s199 = sphi 0, %s198
    %s213 = sphi 0, %s199
    %s217 = sphi 0, %s217
    %s219 = sphi 0, %s217
    %s220 = sphi 0, %s219
    %s234 = sphi 0, %s220
  $region4: #{_lambda_.3} parent=0 // loop_header_branch
    %17 = sbr.rel (%p15) target = $region8
  $region5: #{_lambda_.3} parent=0 // loop_body
    %s19 = ssub.s32 %s14, 1
    %s20 = ssub.s32 %s14, 2
    %s27 = sadd.s32 1, %s22
    %p28 = scmp.ge.s32.totalorder %s27, 1
    %s29 = scalar_select %p28, 0, %s27
    %s30 = sadd.s32 1, %s21
    %s31 = scalar_select %p28, %s30, %s21
    %p32 = scmp.ge.s32.totalorder %s31, 2
    %s33 = scalar_select %p32, 0, %s31
    %s34 = ssub.s32 %s21, %s33
    %s35 = ssub.s32 %s22, %s29
    %s36 = sor.u32 %s34, %s35
    %p37 = scmp.eq.s32.totalorder %s36, 0
    %s39 = sadd.s32 %s38, 1
    %s40 = scalar_select %p37, %s38, %s39
    %p43 = pneg %p37
    %p44 = scmp.eq.s32.totalorder %s14, 1
    %p45 = por %p43, %p44
    %p46 = scmp.ne.s32.totalorder %s38, %s41
    %p47 = scmp.eq.s32.totalorder %s14, 0
    %p48 = por %p46, %p47
    %p49 = scmp.ne.s32.totalorder %s38, %s41
    %p50 = scmp.eq.s32.totalorder %s19, 1
    %p51 = por %p49, %p50
    %p52 = scmp.ne.s32.totalorder %s41, %s42
    %p53 = scmp.eq.s32.totalorder %s19, 0
    %p54 = por %p52, %p53
    %p55 = scmp.ne.s32.totalorder %s41, %s42
    %p56 = scmp.eq.s32.totalorder %s20, 1
    %p57 = por %p55, %p56
    %p59 = scmp.ne.s32.totalorder %s42, %s58
    %p60 = scmp.eq.s32.totalorder %s20, 0
    %p61 = por %p59, %p60
    %s62 = sadd.s32 %s22, 1
    %s63 = smul.u32 %s62, 5
    %s64 = sadd.s32 %s29, 1
    %s65 = smul.u32 %s64, 5
    %s66 = ssub.s32 %s21, %s33
    %s67 = ssub.s32 %s63, %s65
    %s68 = sor.u32 %s66, %s67
    %p69 = scmp.eq.s32.totalorder %s68, 0
    %s71 = sadd.s32 %s70, 1
    %s72 = scalar_select %p69, %s70, %s71
    %p75 = pneg %p69
    %p76 = scmp.eq.s32.totalorder %s14, 1
    %p77 = por %p75, %p76
    %p78 = scmp.ne.s32.totalorder %s70, %s73
    %p79 = scmp.eq.s32.totalorder %s14, 0
    %p80 = por %p78, %p79
    %p81 = scmp.ne.s32.totalorder %s70, %s73
    %p82 = scmp.eq.s32.totalorder %s19, 1
    %p83 = por %p81, %p82
    %p84 = scmp.ne.s32.totalorder %s73, %s74
    %p85 = scmp.eq.s32.totalorder %s19, 0
    %p86 = por %p84, %p85
    %p87 = scmp.ne.s32.totalorder %s73, %s74
    %p88 = scmp.eq.s32.totalorder %s20, 1
    %p89 = por %p87, %p88
    %p91 = scmp.ne.s32.totalorder %s74, %s90
    %p92 = scmp.eq.s32.totalorder %s20, 0
    %p93 = por %p91, %p92
    %s94 = ssub.s32 %s21, %s33
    %s95 = ssub.s32 %s22, %s29
    %s96 = sor.u32 %s94, %s95
    %p97 = scmp.eq.s32.totalorder %s96, 0
    %s99 = sadd.s32 %s98, 1
    %s100 = scalar_select %p97, %s98, %s99
    %p103 = pneg %p97
    %p104 = scmp.eq.s32.totalorder %s14, 1
    %p105 = por %p103, %p104
    %p106 = scmp.ne.s32.totalorder %s98, %s101
    %p107 = scmp.eq.s32.totalorder %s14, 0
    %p108 = por %p106, %p107
    %p109 = scmp.ne.s32.totalorder %s98, %s101
    %p110 = scmp.eq.s32.totalorder %s19, 1
    %p111 = por %p109, %p110
    %p112 = scmp.ne.s32.totalorder %s101, %s102
    %p113 = scmp.eq.s32.totalorder %s19, 0
    %p114 = por %p112, %p113
    %p115 = scmp.ne.s32.totalorder %s101, %s102
    %p116 = scmp.eq.s32.totalorder %s20, 1
    %p117 = por %p115, %p116
    %p119 = scmp.ne.s32.totalorder %s102, %s118
    %p120 = scmp.eq.s32.totalorder %s20, 0
    %p121 = por %p119, %p120
    %s122 = sadd.s32 %s22, 1
    %s123 = smul.u32 %s122, 5
    %s124 = sadd.s32 %s29, 1
    %s125 = smul.u32 %s124, 5
    %s126 = ssub.s32 %s21, %s33
    %s127 = ssub.s32 %s123, %s125
    %s128 = sor.u32 %s126, %s127
    %p129 = scmp.eq.s32.totalorder %s128, 0
    %s131 = sadd.s32 %s130, 1
    %s132 = scalar_select %p129, %s130, %s131
    %p135 = pneg %p129
    %p136 = scmp.eq.s32.totalorder %s14, 1
    %p137 = por %p135, %p136
    %p138 = scmp.ne.s32.totalorder %s130, %s133
    %p139 = scmp.eq.s32.totalorder %s14, 0
    %p140 = por %p138, %p139
    %p141 = scmp.ne.s32.totalorder %s130, %s133
    %p142 = scmp.eq.s32.totalorder %s19, 1
    %p143 = por %p141, %p142
    %p144 = scmp.ne.s32.totalorder %s133, %s134
    %p145 = scmp.eq.s32.totalorder %s19, 0
    %p146 = por %p144, %p145
    %p147 = scmp.ne.s32.totalorder %s133, %s134
    %p148 = scmp.eq.s32.totalorder %s20, 1
    %p149 = por %p147, %p148
    %p151 = scmp.ne.s32.totalorder %s134, %s150
    %p152 = scmp.eq.s32.totalorder %s20, 0
    %p153 = por %p151, %p152
    %s155 = sadd.s32 %s154, 1
    %p158 = scmp.eq.s32.totalorder %s14, 1
    %p159 = scmp.ne.s32.totalorder %s154, %s156
    %p160 = scmp.eq.s32.totalorder %s14, 0
    %p161 = por %p159, %p160
    %p162 = scmp.ne.s32.totalorder %s154, %s156
    %p163 = scmp.eq.s32.totalorder %s19, 1
    %p164 = por %p162, %p163
    %p165 = scmp.ne.s32.totalorder %s156, %s157
    %p166 = scmp.eq.s32.totalorder %s19, 0
    %p167 = por %p165, %p166
    %p168 = scmp.ne.s32.totalorder %s156, %s157
    %p169 = scmp.eq.s32.totalorder %s20, 1
    %p170 = por %p168, %p169
    %p172 = scmp.ne.s32.totalorder %s157, %s171
    %p173 = scmp.eq.s32.totalorder %s20, 0
    %p174 = por %p172, %p173
    %s176 = sadd.s32 %s175, 1
    %p179 = scmp.eq.s32.totalorder %s14, 1
    %p180 = scmp.ne.s32.totalorder %s175, %s177
    %p181 = scmp.eq.s32.totalorder %s14, 0
    %p182 = por %p180, %p181
    %p183 = scmp.ne.s32.totalorder %s175, %s177
    %p184 = scmp.eq.s32.totalorder %s19, 1
    %p185 = por %p183, %p184
    %p186 = scmp.ne.s32.totalorder %s177, %s178
    %p187 = scmp.eq.s32.totalorder %s19, 0
    %p188 = por %p186, %p187
    %p189 = scmp.ne.s32.totalorder %s177, %s178
    %p190 = scmp.eq.s32.totalorder %s20, 1
    %p191 = por %p189, %p190
    %p193 = scmp.ne.s32.totalorder %s178, %s192
    %p194 = scmp.eq.s32.totalorder %s20, 0
    %p195 = por %p193, %p194
    %s197 = sadd.s32 %s196, 1
    %p200 = scmp.eq.s32.totalorder %s14, 1
    %p201 = scmp.ne.s32.totalorder %s196, %s198
    %p202 = scmp.eq.s32.totalorder %s14, 0
    %p203 = por %p201, %p202
    %p204 = scmp.ne.s32.totalorder %s196, %s198
    %p205 = scmp.eq.s32.totalorder %s19, 1
    %p206 = por %p204, %p205
    %p207 = scmp.ne.s32.totalorder %s198, %s199
    %p208 = scmp.eq.s32.totalorder %s19, 0
    %p209 = por %p207, %p208
    %p210 = scmp.ne.s32.totalorder %s198, %s199
    %p211 = scmp.eq.s32.totalorder %s20, 1
    %p212 = por %p210, %p211
    %p214 = scmp.ne.s32.totalorder %s199, %s213
    %p215 = scmp.eq.s32.totalorder %s20, 0
    %p216 = por %p214, %p215
    %s218 = sadd.s32 %s217, 1
    %p221 = scmp.eq.s32.totalorder %s14, 1
    %p222 = scmp.ne.s32.totalorder %s217, %s219
    %p223 = scmp.eq.s32.totalorder %s14, 0
    %p224 = por %p222, %p223
    %p225 = scmp.ne.s32.totalorder %s217, %s219
    %p226 = scmp.eq.s32.totalorder %s19, 1
    %p227 = por %p225, %p226
    %p228 = scmp.ne.s32.totalorder %s219, %s220
    %p229 = scmp.eq.s32.totalorder %s19, 0
    %p230 = por %p228, %p229
    %p231 = scmp.ne.s32.totalorder %s219, %s220
    %p232 = scmp.eq.s32.totalorder %s20, 1
    %p233 = por %p231, %p232
    %p235 = scmp.ne.s32.totalorder %s220, %s234
    %p236 = scmp.eq.s32.totalorder %s20, 0
    %p237 = por %p235, %p236
    %p238 = scmp.le.s32.totalorder 1, %s14
    %p239 = scmp.lt.s32.totalorder %s14, 3
    %p240 = pnand %p238, %p239
    %p241 = pneg %p240
    // Predicated region
    $region9: #{_lambda_.3} parent=5 // pred_check
      _
    $region10: #{_lambda_.3} parent=5 // pred_check_branch
      %243 = sbr.rel (%p240) target = $region12
    $region11: #{_lambda_.3} parent=5 // pred_region
      %s244 = ssub.s32 %s14, 1
      // Predicated region
      $region13: #{_lambda_.3} parent=11 // pred_check
        %p245 = pneg %p167
      $region14: #{_lambda_.3} parent=11 // pred_check_branch
        %247 = sbr.rel (%p245) target = $region16
      $region15: #{_lambda_.3} parent=11 // pred_region
        _
      $region16: #{_lambda_.3} parent=11 // pred_fallthru
        _
      // Predicated region
      $region17: #{_lambda_.3} parent=11 // pred_check
        %p248 = pneg %p188
      $region18: #{_lambda_.3} parent=11 // pred_check_branch
        %250 = sbr.rel (%p248) target = $region20
      $region19: #{_lambda_.3} parent=11 // pred_region
        _
      $region20: #{_lambda_.3} parent=11 // pred_fallthru
        _
    $region12: #{_lambda_.3} parent=5 // pred_fallthru
      _
    %p251 = scmp.lt.s32.totalorder %s14, 2
    // Predicated region
    $region21: #{_lambda_.3} parent=5 // pred_check
      %p252 = pneg %p251
    $region22: #{_lambda_.3} parent=5 // pred_check_branch
      %254 = sbr.rel (%p252) target = $region24
    $region23: #{_lambda_.3} parent=5 // pred_region
      // Predicated region
      $region25: #{_lambda_.3} parent=23 // pred_check
        %p255 = pneg %p48
      $region26: #{_lambda_.3} parent=23 // pred_check_branch
        %257 = sbr.rel (%p255) target = $region28
      $region27: #{_lambda_.3} parent=23 // pred_region
        %s258 = smul.u32 5, %s22
        %s259 = ssub.s32 6, %s258
        %p260 = scmp.lt.s32.totalorder %s259, 5
        %s261 = scalar_select %p260, %s259, 5
        %s262 = smul.u32 64, %s261
        %p263 = scmp.lt.s32.totalorder %s21, 1
        %s264 = scalar_select %p263, %s21, 1
        %p265 = scmp.lt.s32.totalorder %s258, 5
        %s266 = scalar_select %p265, %s258, 5
        %s267 = smul.addr %s264, 6
        %s268 = sadd.s32 %s266, %s267
        %s269 = smul.addr %s268, 4
        %s270 = scalar_lea.vmem %s0, %s269
        %s271 = smul.u32 5, %s22
        %s272 = ssub.s32 6, %s271
        %p273 = scmp.lt.s32.totalorder %s272, 5
        %s274 = scalar_select %p273, %s272, 5
        %s275 = smul.u32 64, %s274
      $region28: #{_lambda_.3} parent=23 // pred_fallthru
        _
      // Predicated region
      $region29: #{_lambda_.3} parent=23 // pred_check
        %p276 = pneg %p80
      $region30: #{_lambda_.3} parent=23 // pred_check_branch
        %278 = sbr.rel (%p276) target = $region32
      $region31: #{_lambda_.3} parent=23 // pred_region
        %s279 = sadd.s32 %s22, 1
        %s280 = smul.u32 %s279, 5
        %p281 = scmp.lt.s32.totalorder %s21, 1
        %s282 = scalar_select %p281, %s21, 1
        %p283 = scmp.lt.s32.totalorder %s280, 5
        %s284 = scalar_select %p283, %s280, 5
        %s285 = smul.addr %s282, 6
        %s286 = sadd.s32 %s284, %s285
        %s287 = smul.addr %s286, 4
        %s288 = scalar_lea.vmem %s1, %s287
        %s289 = sadd.s32 %s22, 1
        %s290 = smul.u32 %s289, 5
      $region32: #{_lambda_.3} parent=23 // pred_fallthru
        _
      // Predicated region
      $region33: #{_lambda_.3} parent=23 // pred_check
        %p291 = pneg %p108
      $region34: #{_lambda_.3} parent=23 // pred_check_branch
        %293 = sbr.rel (%p291) target = $region36
      $region35: #{_lambda_.3} parent=23 // pred_region
        %s294 = smul.u32 5, %s22
        %s295 = ssub.s32 6, %s294
        %p296 = scmp.lt.s32.totalorder %s295, 5
        %s297 = scalar_select %p296, %s295, 5
        %s298 = smul.u32 64, %s297
        %p299 = scmp.lt.s32.totalorder %s21, 1
        %s300 = scalar_select %p299, %s21, 1
        %p301 = scmp.lt.s32.totalorder %s294, 5
        %s302 = scalar_select %p301, %s294, 5
        %s303 = smul.addr %s300, 6
        %s304 = sadd.s32 %s302, %s303
        %s305 = smul.addr %s304, 4
        %s306 = scalar_lea.vmem %s2, %s305
        %s307 = smul.u32 5, %s22
        %s308 = ssub.s32 6, %s307
        %p309 = scmp.lt.s32.totalorder %s308, 5
        %s310 = scalar_select %p309, %s308, 5
        %s311 = smul.u32 64, %s310
      $region36: #{_lambda_.3} parent=23 // pred_fallthru
        _
      // Predicated region
      $region37: #{_lambda_.3} parent=23 // pred_check
        %p312 = pneg %p140
      $region38: #{_lambda_.3} parent=23 // pred_check_branch
        %314 = sbr.rel (%p312) target = $region40
      $region39: #{_lambda_.3} parent=23 // pred_region
        %s315 = sadd.s32 %s22, 1
        %s316 = smul.u32 %s315, 5
        %p317 = scmp.lt.s32.totalorder %s21, 1
        %s318 = scalar_select %p317, %s21, 1
        %p319 = scmp.lt.s32.totalorder %s316, 5
        %s320 = scalar_select %p319, %s316, 5
        %s321 = smul.addr %s318, 6
        %s322 = sadd.s32 %s320, %s321
        %s323 = smul.addr %s322, 4
        %s324 = scalar_lea.vmem %s3, %s323
        %s325 = sadd.s32 %s22, 1
        %s326 = smul.u32 %s325, 5
      $region40: #{_lambda_.3} parent=23 // pred_fallthru
        _
    $region24: #{_lambda_.3} parent=5 // pred_fallthru
      _
    %p327 = scmp.le.s32.totalorder 1, %s14
    %p328 = scmp.lt.s32.totalorder %s14, 3
    %p329 = pnand %p327, %p328
    %p330 = pneg %p329
    // Predicated region
    $region41: #{_lambda_.3} parent=5 // pred_check
      _
    $region42: #{_lambda_.3} parent=5 // pred_check_branch
      %332 = sbr.rel (%p329) target = $region44
    $region43: #{_lambda_.3} parent=5 // pred_region
      %s333 = ssub.s32 %s14, 1
      %s334 = smul.u32 5, %s24
      %s335 = ssub.s32 6, %s334
      %p336 = scmp.lt.s32.totalorder %s335, 5
      %s337 = scalar_select %p336, %s335, 5
      %s338 = smul.u32 64, %s337
      %p339 = scmp.lt.s32.totalorder %s23, 1
      %s340 = scalar_select %p339, %s23, 1
      %p341 = scmp.lt.s32.totalorder %s334, 5
      %s342 = scalar_select %p341, %s334, 5
      %s343 = smul.addr %s340, 6
      %s344 = sadd.s32 %s342, %s343
      %s345 = smul.addr %s344, 4
      %s346 = scalar_lea.vmem %s0, %s345
      %p347 = pneg %p54
      %p348 = pneg %p51
      %s349 = sadd.s32 %s24, 1
      %s350 = smul.u32 %s349, 5
      %p351 = scmp.lt.s32.totalorder %s23, 1
      %s352 = scalar_select %p351, %s23, 1
      %p353 = scmp.lt.s32.totalorder %s350, 5
      %s354 = scalar_select %p353, %s350, 5
      %s355 = smul.addr %s352, 6
      %s356 = sadd.s32 %s354, %s355
      %s357 = smul.addr %s356, 4
      %s358 = scalar_lea.vmem %s1, %s357
      %p359 = pneg %p86
      %p360 = pneg %p83
      %s361 = smul.u32 5, %s24
      %s362 = ssub.s32 6, %s361
      %p363 = scmp.lt.s32.totalorder %s362, 5
      %s364 = scalar_select %p363, %s362, 5
      %s365 = smul.u32 64, %s364
      %p366 = scmp.lt.s32.totalorder %s23, 1
      %s367 = scalar_select %p366, %s23, 1
      %p368 = scmp.lt.s32.totalorder %s361, 5
      %s369 = scalar_select %p368, %s361, 5
      %s370 = smul.addr %s367, 6
      %s371 = sadd.s32 %s369, %s370
      %s372 = smul.addr %s371, 4
      %s373 = scalar_lea.vmem %s2, %s372
      %p374 = pneg %p114
      %p375 = pneg %p111
      %s376 = sadd.s32 %s24, 1
      %s377 = smul.u32 %s376, 5
      %p378 = scmp.lt.s32.totalorder %s23, 1
      %s379 = scalar_select %p378, %s23, 1
      %p380 = scmp.lt.s32.totalorder %s377, 5
      %s381 = scalar_select %p380, %s377, 5
      %s382 = smul.addr %s379, 6
      %s383 = sadd.s32 %s381, %s382
      %s384 = smul.addr %s383, 4
      %s385 = scalar_lea.vmem %s3, %s384
      %p386 = pneg %p146
      %p387 = pneg %p143
      %p388 = pneg %p167
      %p389 = pneg %p164
      %p390 = pneg %p188
      %p391 = pneg %p185
      %p392 = pneg %p209
      %p393 = pneg %p206
      %p394 = pneg %p230
      %p395 = pneg %p227
      %s396 = smul.u32 5, %s24
      %s397 = ssub.s32 6, %s396
      %p398 = scmp.lt.s32.totalorder %s397, 5
      %s399 = scalar_select %p398, %s397, 5
      %s400 = smul.u32 64, %s399
      %p401 = scmp.lt.s32.totalorder %s23, 1
      %s402 = scalar_select %p401, %s23, 1
      %p403 = scmp.lt.s32.totalorder %s396, 5
      %s404 = scalar_select %p403, %s396, 5
      %s405 = smul.addr %s402, 6
      %s406 = sadd.s32 %s404, %s405
      %s407 = smul.addr %s406, 4
      %s408 = scalar_lea.vmem %s0, %s407
      %s409 = smul.u32 5, %s24
      %s410 = ssub.s32 6, %s409
      %p411 = scmp.lt.s32.totalorder %s410, 5
      %s412 = scalar_select %p411, %s410, 5
      %s413 = smul.u32 64, %s412
      %s414 = sadd.s32 %s24, 1
      %s415 = smul.u32 %s414, 5
      %p416 = scmp.lt.s32.totalorder %s23, 1
      %s417 = scalar_select %p416, %s23, 1
      %p418 = scmp.lt.s32.totalorder %s415, 5
      %s419 = scalar_select %p418, %s415, 5
      %s420 = smul.addr %s417, 6
      %s421 = sadd.s32 %s419, %s420
      %s422 = smul.addr %s421, 4
      %s423 = scalar_lea.vmem %s1, %s422
      %s424 = sadd.s32 %s24, 1
      %s425 = smul.u32 %s424, 5
      %s426 = smul.u32 5, %s24
      %s427 = ssub.s32 6, %s426
      %p428 = scmp.lt.s32.totalorder %s427, 5
      %s429 = scalar_select %p428, %s427, 5
      %s430 = smul.u32 64, %s429
      %p431 = scmp.lt.s32.totalorder %s23, 1
      %s432 = scalar_select %p431, %s23, 1
      %p433 = scmp.lt.s32.totalorder %s426, 5
      %s434 = scalar_select %p433, %s426, 5
      %s435 = smul.addr %s432, 6
      %s436 = sadd.s32 %s434, %s435
      %s437 = smul.addr %s436, 4
      %s438 = scalar_lea.vmem %s2, %s437
      %s439 = smul.u32 5, %s24
      %s440 = ssub.s32 6, %s439
      %p441 = scmp.lt.s32.totalorder %s440, 5
      %s442 = scalar_select %p441, %s440, 5
      %s443 = smul.u32 64, %s442
      %s444 = sadd.s32 %s24, 1
      %s445 = smul.u32 %s444, 5
      %p446 = scmp.lt.s32.totalorder %s23, 1
      %s447 = scalar_select %p446, %s23, 1
      %p448 = scmp.lt.s32.totalorder %s445, 5
      %s449 = scalar_select %p448, %s445, 5
      %s450 = smul.addr %s447, 6
      %s451 = sadd.s32 %s449, %s450
      %s452 = smul.addr %s451, 4
      %s453 = scalar_lea.vmem %s3, %s452
      %s454 = sadd.s32 %s24, 1
      %s455 = smul.u32 %s454, 5
      %p457 = scmp.eq.s32.totalorder %s23, 0
      %p458 = scmp.eq.s32.totalorder %s24, 0
      %p459 = pnand %p457, %p458
      %p460 = pneg %p459
      // Predicated region
      $region45: #{_lambda_.3} parent=43 // pred_check
        _
      $region46: #{_lambda_.3} parent=43 // pred_check_branch
        %462 = sbr.rel (%p459) target = $region48
      $region47: #{_lambda_.3} parent=43 // pred_region
        %463 = vst [vmem:[%s6] sm:$0xff] 0.0
        %464 = vst [vmem:[%s7] sm:$0xff] 0.0
      $region48: #{_lambda_.3} parent=43 // pred_fallthru
        _
      %v465 = vld [vmem:[%s408] sm:$0xf]
      %v466 = vld [vmem:[%s408 + $0x4] sm:$0xf]
      %v467 = vld [vmem:[%s408 + $0x8] sm:$0xf]
      %v468 = vld [vmem:[%s408 + $0xc] sm:$0xf]
      %v469 = vld [vmem:[%s408 + $0x10] sm:$0xf]
      %v470 = vld [vmem:[%s423] sm:$0xf]
      %v476 = vunpack.c.l.b16 %v465
      %v477 = vunpack.c.l.b16 %v466
      %v478 = vunpack.c.l.b16 %v467
      %v479 = vunpack.c.l.b16 %v468
      %v480 = vunpack.c.l.b16 %v469
      %v481 = vpack.c.b16 %v477, %v476
      %v482 = vpack.c.b16 %v479, %v478
      %v483 = vpack.c.b16 %v480, %v480
      %v485 = vunpack.c.l.b16 %v470
      %v486 = vpack.c.b16 %v485, %v485
      %vm487 = vcmask 1043456
      %v490 = vsel %vm487, %v483, %v486
      %vm491 = vsmask.f32 7424
      %v493 = vshrl.u32 %v481, 16
      %v495 = vshll.u32 %v481, 16
      %v497 = vrot.slane %v495, 1
      %v498 = vor.u32 %v493, %v497
      %v500 = vshll.u32 %v482, 16
      %v502 = vrot.slane %v500, 1
      %v503 = vsel %vm491, %v498, %v502
      %v504 = vshrl.u32 %v482, 16
      %v506 = vor.u32 %v504, %v502
      %v507 = vshll.u32 %v490, 16
      %v509 = vrot.slane %v507, 1
      %v510 = vsel %vm491, %v506, %v509
      %v511 = vshrl.u32 %v490, 16
      %v513 = vor.u32 %v511, %v509
      %514 = vrot.lane.b32.xlu0 %v503, 32
      %v515 = vpop.permute.xlu0 %514
      %516 = vrot.lane.b32.xlu0 %v510, 32
      %v517 = vpop.permute.xlu0 %516
      %518 = vrot.lane.b32.xlu0 %v513, 32
      %v519 = vpop.permute.xlu0 %518
      %vm521 = vcmask 1046528
      %v522 = vrot.slane %v481, 1
      %v523 = vrot.slane %v482, 1
      %v524 = vsel %vm521, %v522, %v523
      %v525 = vrot.slane %v490, 1
      %v526 = vsel %vm521, %v523, %v525
      %527 = vrot.lane.b32.xlu0 %v524, 64
      %v528 = vpop.permute.xlu0 %527
      %529 = vrot.lane.b32.xlu0 %v526, 64
      %v530 = vpop.permute.xlu0 %529
      %531 = vrot.lane.b32.xlu0 %v525, 64
      %v532 = vpop.permute.xlu0 %531
      %vm533 = vsmask.f32 6400
      %v534 = vrot.slane %v493, 1
      %v535 = vrot.slane %v495, 2
      %v536 = vor.u32 %v534, %v535
      %v537 = vrot.slane %v504, 1
      %v538 = vrot.slane %v500, 2
      %v539 = vor.u32 %v537, %v538
      %v540 = vsel %vm533, %v536, %v539
      %v541 = vrot.slane %v511, 1
      %v542 = vrot.slane %v507, 2
      %v543 = vor.u32 %v541, %v542
      %v544 = vsel %vm533, %v539, %v543
      %545 = vrot.lane.b32.xlu0 %v540, 96
      %v546 = vpop.permute.xlu0 %545
      %547 = vrot.lane.b32.xlu0 %v544, 96
      %v548 = vpop.permute.xlu0 %547
      %549 = vrot.lane.b32.xlu0 %v543, 96
      %v550 = vpop.permute.xlu0 %549
      %vm551 = vcmask 261120
      %v553 = vsel %vm551, %v481, %v515
      %v555 = vsel %vm551, %v482, %v517
      %v557 = vsel %vm551, %v490, %v519
      %vm558 = vcmask 523264
      %v560 = vsel %vm558, %v553, %v528
      %v562 = vsel %vm558, %v555, %v530
      %v564 = vsel %vm558, %v557, %v532
      %vm565 = vcmask 785408
      %v567 = vsel %vm565, %v560, %v546
      %v570 = vsel %vm565, %v562, %v548
      %v573 = vsel %vm565, %v564, %v550
      %v575 = vld [vmem:[%s438] sm:$0xf]
      %v576 = vld [vmem:[%s438 + $0x4] sm:$0xf]
      %v577 = vld [vmem:[%s438 + $0x8] sm:$0xf]
      %v578 = vld [vmem:[%s438 + $0xc] sm:$0xf]
      %v579 = vld [vmem:[%s438 + $0x10] sm:$0xf]
      %v580 = vld [vmem:[%s453] sm:$0xf]
      %v586 = vunpack.c.l.b16 %v575
      %v587 = vunpack.c.l.b16 %v576
      %v588 = vunpack.c.l.b16 %v577
      %v589 = vunpack.c.l.b16 %v578
      %v590 = vunpack.c.l.b16 %v579
      %v591 = vpack.c.b16 %v587, %v586
      %v592 = vpack.c.b16 %v589, %v588
      %v593 = vpack.c.b16 %v590, %v590
      %v595 = vunpack.c.l.b16 %v580
      %v596 = vpack.c.b16 %v595, %v595
      %v599 = vsel %vm487, %v593, %v596
      %v601 = vshrl.u32 %v591, 16
      %v603 = vshll.u32 %v591, 16
      %v605 = vrot.slane %v603, 1
      %v606 = vor.u32 %v601, %v605
      %v608 = vshll.u32 %v592, 16
      %v610 = vrot.slane %v608, 1
      %v611 = vsel %vm491, %v606, %v610
      %v612 = vshrl.u32 %v592, 16
      %v614 = vor.u32 %v612, %v610
      %v615 = vshll.u32 %v599, 16
      %v617 = vrot.slane %v615, 1
      %v618 = vsel %vm491, %v614, %v617
      %v619 = vshrl.u32 %v599, 16
      %v621 = vor.u32 %v619, %v617
      %622 = vrot.lane.b32.xlu0 %v611, 32
      %v623 = vpop.permute.xlu0 %622
      %624 = vrot.lane.b32.xlu0 %v618, 32
      %v625 = vpop.permute.xlu0 %624
      %626 = vrot.lane.b32.xlu0 %v621, 32
      %v627 = vpop.permute.xlu0 %626
      %v629 = vrot.slane %v591, 1
      %v630 = vrot.slane %v592, 1
      %v631 = vsel %vm521, %v629, %v630
      %v632 = vrot.slane %v599, 1
      %v633 = vsel %vm521, %v630, %v632
      %634 = vrot.lane.b32.xlu0 %v631, 64
      %v635 = vpop.permute.xlu0 %634
      %636 = vrot.lane.b32.xlu0 %v633, 64
      %v637 = vpop.permute.xlu0 %636
      %638 = vrot.lane.b32.xlu0 %v632, 64
      %v639 = vpop.permute.xlu0 %638
      %v640 = vrot.slane %v601, 1
      %v641 = vrot.slane %v603, 2
      %v642 = vor.u32 %v640, %v641
      %v643 = vrot.slane %v612, 1
      %v644 = vrot.slane %v608, 2
      %v645 = vor.u32 %v643, %v644
      %v646 = vsel %vm533, %v642, %v645
      %v647 = vrot.slane %v619, 1
      %v648 = vrot.slane %v615, 2
      %v649 = vor.u32 %v647, %v648
      %v650 = vsel %vm533, %v645, %v649
      %651 = vrot.lane.b32.xlu0 %v646, 96
      %v652 = vpop.permute.xlu0 %651
      %653 = vrot.lane.b32.xlu0 %v650, 96
      %v654 = vpop.permute.xlu0 %653
      %655 = vrot.lane.b32.xlu0 %v649, 96
      %v656 = vpop.permute.xlu0 %655
      %v658 = vsel %vm551, %v591, %v623
      %v660 = vsel %vm551, %v592, %v625
      %v662 = vsel %vm551, %v599, %v627
      %v664 = vsel %vm558, %v658, %v635
      %v666 = vsel %vm558, %v660, %v637
      %v668 = vsel %vm558, %v662, %v639
      %v670 = vsel %vm565, %v664, %v652
      %v673 = vsel %vm565, %v666, %v654
      %v676 = vsel %vm565, %v668, %v656
      %v678 = vld [vmem:[%s4] sm:$0xff]
      %v679 = vld [vmem:[%s4 + $0x8] sm:$0xff]
      %v680 = vld [vmem:[%s4 + $0x10] sm:$0xff]
      %v681 = vld [vmem:[%s4 + $0x18] sm:$0xff]
      %v682 = vld [vmem:[%s4 + $0x20] sm:$0xff]
      %v683 = vld [vmem:[%s4 + $0x28] sm:$0xff]
      %v684 = vld [vmem:[%s4 + $0x30] sm:$0xff]
      %v685 = vld [vmem:[%s4 + $0x38] sm:$0xff]
      %v686 = vld [vmem:[%s4 + $0x40] sm:$0xff]
      %v687 = vld [vmem:[%s4 + $0x48] sm:$0xff]
      %v688 = vld [vmem:[%s4 + $0x50] sm:$0xff]
      %v689 = vld [vmem:[%s4 + $0x58] sm:$0xff]
      %v690 = vld [vmem:[%s4 + $0x60] sm:$0xff]
      %v691 = vld [vmem:[%s4 + $0x68] sm:$0xff]
      %v692 = vld [vmem:[%s4 + $0x70] sm:$0xff]
      %v693 = vld [vmem:[%s4 + $0x78] sm:$0xff]
      %v710 = vunpack.c.l.b16 %v678
      %v711 = vunpack.c.h.b16 %v678
      %v712 = vunpack.c.l.b16 %v679
      %v713 = vunpack.c.h.b16 %v679
      %v714 = vunpack.c.l.b16 %v680
      %v715 = vunpack.c.h.b16 %v680
      %v716 = vunpack.c.l.b16 %v681
      %v717 = vunpack.c.h.b16 %v681
      %v718 = vunpack.c.l.b16 %v682
      %v719 = vunpack.c.h.b16 %v682
      %v720 = vunpack.c.l.b16 %v683
      %v721 = vunpack.c.h.b16 %v683
      %v722 = vunpack.c.l.b16 %v684
      %v723 = vunpack.c.h.b16 %v684
      %v724 = vunpack.c.l.b16 %v685
      %v725 = vunpack.c.h.b16 %v685
      %v726 = vunpack.c.l.b16 %v686
      %v727 = vunpack.c.h.b16 %v686
      %v728 = vunpack.c.l.b16 %v687
      %v729 = vunpack.c.h.b16 %v687
      %v730 = vunpack.c.l.b16 %v688
      %v731 = vunpack.c.h.b16 %v688
      %v732 = vunpack.c.l.b16 %v689
      %v733 = vunpack.c.h.b16 %v689
      %v734 = vunpack.c.l.b16 %v690
      %v735 = vunpack.c.h.b16 %v690
      %v736 = vunpack.c.l.b16 %v691
      %v737 = vunpack.c.h.b16 %v691
      %v738 = vunpack.c.l.b16 %v692
      %v739 = vunpack.c.h.b16 %v692
      %v740 = vunpack.c.l.b16 %v693
      %v741 = vunpack.c.h.b16 %v693
      %v742 = vpack.c.b16 %v712, %v710
      %v743 = vpack.c.b16 %v713, %v711
      %v744 = vpack.c.b16 %v716, %v714
      %v745 = vpack.c.b16 %v717, %v715
      %v746 = vpack.c.b16 %v720, %v718
      %v747 = vpack.c.b16 %v721, %v719
      %v748 = vpack.c.b16 %v724, %v722
      %v749 = vpack.c.b16 %v725, %v723
      %v750 = vpack.c.b16 %v728, %v726
      %v751 = vpack.c.b16 %v729, %v727
      %v752 = vpack.c.b16 %v732, %v730
      %v753 = vpack.c.b16 %v733, %v731
      %v754 = vpack.c.b16 %v736, %v734
      %v755 = vpack.c.b16 %v737, %v735
      %v756 = vpack.c.b16 %v740, %v738
      %v757 = vpack.c.b16 %v741, %v739
      %774 = vmatprep.subr.bf16.mxu0 %v743
      %775 = vmatpush1.bf16.msra.mxu0 %v742
      %776 = vmatprep.subr.bf16.mxu0 %v745
      %777 = vmatpush1.bf16.msra.mxu0 %v744
      %778 = vmatprep.subr.bf16.mxu0 %v747
      %779 = vmatpush1.bf16.msra.mxu0 %v746
      %780 = vmatprep.subr.bf16.mxu0 %v749
      %781 = vmatpush1.bf16.msra.mxu0 %v748
      %782 = vmatprep.subr.bf16.mxu0 %v751
      %783 = vmatpush1.bf16.msra.mxu0 %v750
      %784 = vmatprep.subr.bf16.mxu0 %v753
      %785 = vmatpush1.bf16.msra.mxu0 %v752
      %786 = vmatprep.subr.bf16.mxu0 %v755
      %787 = vmatpush1.bf16.msra.mxu0 %v754
      %788 = vmatprep.subr.bf16.mxu0 %v757
      %789 = vmatpush1.bf16.msra.mxu0 %v756
      %790 = vmatprep.subr.bf16.mxu0 0
      %791 = vmatpush1.bf16.msra.mxu0 0
      %792 = vmatprep.subr.bf16.mxu0 0
      %793 = vmatpush1.bf16.msra.mxu0 0
      %794 = vmatprep.subr.bf16.mxu0 0
      %795 = vmatpush1.bf16.msra.mxu0 0
      %796 = vmatprep.subr.bf16.mxu0 0
      %797 = vmatpush1.bf16.msra.mxu0 0
      %798 = vmatprep.subr.bf16.mxu0 0
      %799 = vmatpush1.bf16.msra.mxu0 0
      %800 = vmatprep.subr.bf16.mxu0 0
      %801 = vmatpush1.bf16.msra.mxu0 0
      %802 = vmatprep.subr.bf16.mxu0 0
      %803 = vmatpush1.bf16.msra.mxu0 0
      %804 = vmatprep.subr.bf16.mxu0 0
      %805 = vmatpush1.bf16.msra.mxu0 0
      %806 = vmatprep.mubr.bf16.mxu0 0
      %807 = vmatmul.mubr.bf16.gmra.mrb[0].mxu0 %v567
      %v808 = vpop.f32.mrb[0].mxu0
      %v809 = vadd.f32 0.0, %v808
      %v810 = vpop.f32.mrb[0].mxu0
      %v811 = vadd.f32 0.0, %v810
      %v812 = vpop.f32.mrb[0].mxu0
      %v813 = vadd.f32 0.0, %v812
      %v814 = vpop.f32.mrb[0].mxu0
      %v815 = vadd.f32 0.0, %v814
      %816 = vmatprep.mubr.bf16.mxu0 0
      %817 = vmatmul.mubr.bf16.gmra.mrb[0].mxu0 %v570
      %v818 = vpop.f32.mrb[0].mxu0
      %v819 = vadd.f32 0.0, %v818
      %v820 = vpop.f32.mrb[0].mxu0
      %v821 = vadd.f32 0.0, %v820
      %v822 = vpop.f32.mrb[0].mxu0
      %v823 = vadd.f32 0.0, %v822
      %v824 = vpop.f32.mrb[0].mxu0
      %v825 = vadd.f32 0.0, %v824
      %826 = vmatprep.mubr.bf16.mxu0 0
      %827 = vmatmul.mubr.bf16.gmra.mrb[0].mxu0 %v573
      %v828 = vpop.f32.mrb[0].mxu0
      %v829 = vadd.f32 0.0, %v828
      %v830 = vpop.f32.mrb[0].mxu0
      %v831 = vadd.f32 0.0, %v830
      %v832 = vpop.f32.mrb[0].mxu0
      %v833 = vpop.f32.mrb[0].mxu0
      %834 = vdwg.mxu0
      %835 = vmatprep.subr.bf16.mxu0 %v743
      %836 = vmatpush1.bf16.msra.mxu0 %v742
      %837 = vmatprep.subr.bf16.mxu0 %v745
      %838 = vmatpush1.bf16.msra.mxu0 %v744
      %839 = vmatprep.subr.bf16.mxu0 %v747
      %840 = vmatpush1.bf16.msra.mxu0 %v746
      %841 = vmatprep.subr.bf16.mxu0 %v749
      %842 = vmatpush1.bf16.msra.mxu0 %v748
      %843 = vmatprep.subr.bf16.mxu0 %v751
      %844 = vmatpush1.bf16.msra.mxu0 %v750
      %845 = vmatprep.subr.bf16.mxu0 %v753
      %846 = vmatpush1.bf16.msra.mxu0 %v752
      %847 = vmatprep.subr.bf16.mxu0 %v755
      %848 = vmatpush1.bf16.msra.mxu0 %v754
      %849 = vmatprep.subr.bf16.mxu0 %v757
      %850 = vmatpush1.bf16.msra.mxu0 %v756
      %851 = vmatprep.subr.bf16.mxu0 0
      %852 = vmatpush1.bf16.msra.mxu0 0
      %853 = vmatprep.subr.bf16.mxu0 0
      %854 = vmatpush1.bf16.msra.mxu0 0
      %855 = vmatprep.subr.bf16.mxu0 0
      %856 = vmatpush1.bf16.msra.mxu0 0
      %857 = vmatprep.subr.bf16.mxu0 0
      %858 = vmatpush1.bf16.msra.mxu0 0
      %859 = vmatprep.subr.bf16.mxu0 0
      %860 = vmatpush1.bf16.msra.mxu0 0
      %861 = vmatprep.subr.bf16.mxu0 0
      %862 = vmatpush1.bf16.msra.mxu0 0
      %863 = vmatprep.subr.bf16.mxu0 0
      %864 = vmatpush1.bf16.msra.mxu0 0
      %865 = vmatprep.subr.bf16.mxu0 0
      %866 = vmatpush1.bf16.msra.mxu0 0
      %867 = vmatprep.mubr.bf16.mxu0 0
      %868 = vmatmul.mubr.bf16.gmra.mrb[0].mxu0 %v670
      %v869 = vpop.f32.mrb[0].mxu0
      %v870 = vadd.f32 0.0, %v869
      %v871 = vpop.f32.mrb[0].mxu0
      %v872 = vadd.f32 0.0, %v871
      %v873 = vpop.f32.mrb[0].mxu0
      %v874 = vadd.f32 0.0, %v873
      %v875 = vpop.f32.mrb[0].mxu0
      %v876 = vadd.f32 0.0, %v875
      %877 = vmatprep.mubr.bf16.mxu0 0
      %878 = vmatmul.mubr.bf16.gmra.mrb[0].mxu0 %v673
      %v879 = vpop.f32.mrb[0].mxu0
      %v880 = vadd.f32 0.0, %v879
      %v881 = vpop.f32.mrb[0].mxu0
      %v882 = vadd.f32 0.0, %v881
      %v883 = vpop.f32.mrb[0].mxu0
      %v884 = vadd.f32 0.0, %v883
      %v885 = vpop.f32.mrb[0].mxu0
      %v886 = vadd.f32 0.0, %v885
      %887 = vmatprep.mubr.bf16.mxu0 0
      %888 = vmatmul.mubr.bf16.gmra.mrb[0].mxu0 %v676
      %v889 = vpop.f32.mrb[0].mxu0
      %v890 = vadd.f32 0.0, %v889
      %v891 = vpop.f32.mrb[0].mxu0
      %v892 = vadd.f32 0.0, %v891
      %v893 = vpop.f32.mrb[0].mxu0
      %v894 = vpop.f32.mrb[0].mxu0
      %895 = vdwg.mxu0
      %v896 = vmul.f32 %v809, %v809
      %v897 = vmul.f32 %v813, %v813
      %v898 = vmul.f32 %v819, %v819
      %v899 = vmul.f32 %v823, %v823
      %v900 = vmul.f32 %v829, %v829
      %v901 = vmul.f32 %v811, %v811
      %v902 = vmul.f32 %v815, %v815
      %v903 = vmul.f32 %v821, %v821
      %v904 = vmul.f32 %v825, %v825
      %v905 = vmul.f32 %v831, %v831
      %v906 = vadd.f32 %v896, %v901
      %v907 = vadd.f32 %v897, %v902
      %v908 = vadd.f32 %v898, %v903
      %v909 = vadd.f32 %v899, %v904
      %v910 = vadd.f32 %v900, %v905
      %v911 = vmul.f32 %v870, %v870
      %v912 = vmul.f32 %v874, %v874
      %v913 = vmul.f32 %v880, %v880
      %v914 = vmul.f32 %v884, %v884
      %v915 = vmul.f32 %v890, %v890
      %v916 = vmul.f32 %v872, %v872
      %v917 = vmul.f32 %v876, %v876
      %v918 = vmul.f32 %v882, %v882
      %v919 = vmul.f32 %v886, %v886
      %v920 = vmul.f32 %v892, %v892
      %v921 = vadd.f32 %v911, %v916
      %v922 = vadd.f32 %v912, %v917
      %v923 = vadd.f32 %v913, %v918
      %v924 = vadd.f32 %v914, %v919
      %v925 = vadd.f32 %v915, %v920
      %v926 = vpack.c.bf16 %v907, %v906
      %v927 = vpack.c.bf16 %v909, %v908
      %v928 = vpack.c.bf16 %v910, %v910
      %v929 = vrsqrt.bf16.pop %v926
      %v930 = vmul.bf16 %v926, %v929
      %vm932 = vcmp.eq.bf16.partialorder %v926, 2139127680
      %v933 = vsel %vm932, %v926, %v930
      %vm935 = vcmp.eq.bf16.partialorder %v926, 0
      %v936 = vand.u32 2147450879, 0
      %v937 = vand.u32 %v926, 2147516416
      %v938 = vor.u32 %v936, %v937
      %v939 = vsel %vm935, %v938, %v933
      %v940 = vrsqrt.bf16.pop %v927
      %v941 = vmul.bf16 %v927, %v940
      %vm943 = vcmp.eq.bf16.partialorder %v927, 2139127680
      %v944 = vsel %vm943, %v927, %v941
      %vm946 = vcmp.eq.bf16.partialorder %v927, 0
      %v947 = vand.u32 2147450879, 0
      %v948 = vand.u32 %v927, 2147516416
      %v949 = vor.u32 %v947, %v948
      %v950 = vsel %vm946, %v949, %v944
      %v951 = vrsqrt.bf16.pop %v928
      %v952 = vmul.bf16 %v928, %v951
      %vm954 = vcmp.eq.bf16.partialorder %v928, 2139127680
      %v955 = vsel %vm954, %v928, %v952
      %vm957 = vcmp.eq.bf16.partialorder %v928, 0
      %v958 = vand.u32 2147450879, 0
      %v959 = vand.u32 %v928, 2147516416
      %v960 = vor.u32 %v958, %v959
      %v961 = vsel %vm957, %v960, %v955
      %v962 = vpack.c.bf16 %v922, %v921
      %v963 = vpack.c.bf16 %v924, %v923
      %v964 = vpack.c.bf16 %v925, %v925
      %v965 = vrsqrt.bf16.pop %v962
      %v966 = vmul.bf16 %v962, %v965
      %vm968 = vcmp.eq.bf16.partialorder %v962, 2139127680
      %v969 = vsel %vm968, %v962, %v966
      %vm971 = vcmp.eq.bf16.partialorder %v962, 0
      %v972 = vand.u32 2147450879, 0
      %v973 = vand.u32 %v962, 2147516416
      %v974 = vor.u32 %v972, %v973
      %v975 = vsel %vm971, %v974, %v969
      %v976 = vrsqrt.bf16.pop %v963
      %v977 = vmul.bf16 %v963, %v976
      %vm979 = vcmp.eq.bf16.partialorder %v963, 2139127680
      %v980 = vsel %vm979, %v963, %v977
      %vm982 = vcmp.eq.bf16.partialorder %v963, 0
      %v983 = vand.u32 2147450879, 0
      %v984 = vand.u32 %v963, 2147516416
      %v985 = vor.u32 %v983, %v984
      %v986 = vsel %vm982, %v985, %v980
      %v987 = vrsqrt.bf16.pop %v964
      %v988 = vmul.bf16 %v964, %v987
      %vm990 = vcmp.eq.bf16.partialorder %v964, 2139127680
      %v991 = vsel %vm990, %v964, %v988
      %vm993 = vcmp.eq.bf16.partialorder %v964, 0
      %v994 = vand.u32 2147450879, 0
      %v995 = vand.u32 %v964, 2147516416
      %v996 = vor.u32 %v994, %v995
      %v997 = vsel %vm993, %v996, %v991
      %v998 = vld [vmem:[%s5] sm:$0xf]
      %v999 = vld [vmem:[%s5 + $0x4] sm:$0xf]
      %v1000 = vld [vmem:[%s5 + $0x8] sm:$0xf]
      %v1001 = vld [vmem:[%s5 + $0xc] sm:$0xf]
      %v1002 = vld [vmem:[%s5 + $0x10] sm:$0xf]
      %v1003 = vld [vmem:[%s5 + $0x14] sm:$0xf]
      %v1004 = vld [vmem:[%s5 + $0x18] sm:$0xf]
      %v1005 = vld [vmem:[%s5 + $0x1c] sm:$0xf]
      %v1006 = vld [vmem:[%s5 + $0x20] sm:$0xf]
      %v1007 = vld [vmem:[%s5 + $0x24] sm:$0xf]
      %v1008 = vld [vmem:[%s5 + $0x28] sm:$0xf]
      %v1009 = vld [vmem:[%s5 + $0x2c] sm:$0xf]
      %v1010 = vld [vmem:[%s5 + $0x30] sm:$0xf]
      %v1011 = vld [vmem:[%s5 + $0x34] sm:$0xf]
      %v1012 = vld [vmem:[%s5 + $0x38] sm:$0xf]
      %v1013 = vld [vmem:[%s5 + $0x3c] sm:$0xf]
      %v1030 = vunpack.c.l.b16 %v998
      %v1031 = vunpack.c.l.b16 %v999
      %v1032 = vunpack.c.l.b16 %v1000
      %v1033 = vunpack.c.l.b16 %v1001
      %v1034 = vunpack.c.l.b16 %v1002
      %v1035 = vunpack.c.l.b16 %v1003
      %v1036 = vunpack.c.l.b16 %v1004
      %v1037 = vunpack.c.l.b16 %v1005
      %v1038 = vunpack.c.l.b16 %v1006
      %v1039 = vunpack.c.l.b16 %v1007
      %v1040 = vunpack.c.l.b16 %v1008
      %v1041 = vunpack.c.l.b16 %v1009
      %v1042 = vunpack.c.l.b16 %v1010
      %v1043 = vunpack.c.l.b16 %v1011
      %v1044 = vunpack.c.l.b16 %v1012
      %v1045 = vunpack.c.l.b16 %v1013
      %v1046 = vpack.c.b16 %v1031, %v1030
      %v1047 = vpack.c.b16 %v1033, %v1032
      %v1048 = vpack.c.b16 %v1035, %v1034
      %v1049 = vpack.c.b16 %v1037, %v1036
      %v1050 = vpack.c.b16 %v1039, %v1038
      %v1051 = vpack.c.b16 %v1041, %v1040
      %v1052 = vpack.c.b16 %v1043, %v1042
      %v1053 = vpack.c.b16 %v1045, %v1044
      %1062 = vmatprep.subr.bf16.mxu0 0
      %1063 = vmatpush1.bf16.msra.mxu0 %v1046
      %1064 = vmatprep.subr.bf16.mxu0 0
      %1065 = vmatpush1.bf16.msra.mxu0 %v1047
      %1066 = vmatprep.subr.bf16.mxu0 0
      %1067 = vmatpush1.bf16.msra.mxu0 %v1048
      %1068 = vmatprep.subr.bf16.mxu0 0
      %1069 = vmatpush1.bf16.msra.mxu0 %v1049
      %1070 = vmatprep.subr.bf16.mxu0 0
      %1071 = vmatpush1.bf16.msra.mxu0 %v1050
      %1072 = vmatprep.subr.bf16.mxu0 0
      %1073 = vmatpush1.bf16.msra.mxu0 %v1051
      %1074 = vmatprep.subr.bf16.mxu0 0
      %1075 = vmatpush1.bf16.msra.mxu0 %v1052
      %1076 = vmatprep.subr.bf16.mxu0 0
      %1077 = vmatpush1.bf16.msra.mxu0 %v1053
      %1078 = vmatprep.subr.bf16.mxu0 0
      %1079 = vmatpush1.bf16.msra.mxu0 0
      %1080 = vmatprep.subr.bf16.mxu0 0
      %1081 = vmatpush1.bf16.msra.mxu0 0
      %1082 = vmatprep.subr.bf16.mxu0 0
      %1083 = vmatpush1.bf16.msra.mxu0 0
      %1084 = vmatprep.subr.bf16.mxu0 0
      %1085 = vmatpush1.bf16.msra.mxu0 0
      %1086 = vmatprep.subr.bf16.mxu0 0
      %1087 = vmatpush1.bf16.msra.mxu0 0
      %1088 = vmatprep.subr.bf16.mxu0 0
      %1089 = vmatpush1.bf16.msra.mxu0 0
      %1090 = vmatprep.subr.bf16.mxu0 0
      %1091 = vmatpush1.bf16.msra.mxu0 0
      %1092 = vmatprep.subr.bf16.mxu0 0
      %1093 = vmatpush1.bf16.msra.mxu0 0
      %1094 = vmatprep.mubr.bf16.mxu0 0
      %1095 = vmatmul.mubr.bf16.gmra.mrb[0].mxu0 %v939
      %v1096 = vpop.f32.mrb[0].mxu0
      %v1097 = vadd.f32 0.0, %v1096
      %v1098 = vpop.f32.mrb[0].mxu0
      %v1099 = vpop.f32.mrb[0].mxu0
      %v1100 = vadd.f32 0.0, %v1099
      %v1101 = vpop.f32.mrb[0].mxu0
      %1102 = vmatprep.mubr.bf16.mxu0 0
      %1103 = vmatmul.mubr.bf16.gmra.mrb[0].mxu0 %v950
      %v1104 = vpop.f32.mrb[0].mxu0
      %v1105 = vadd.f32 0.0, %v1104
      %v1106 = vpop.f32.mrb[0].mxu0
      %v1107 = vpop.f32.mrb[0].mxu0
      %v1108 = vadd.f32 0.0, %v1107
      %v1109 = vpop.f32.mrb[0].mxu0
      %1110 = vmatprep.mubr.bf16.mxu0 0
      %1111 = vmatmul.mubr.bf16.gmra.mrb[0].mxu0 %v961
      %v1112 = vpop.f32.mrb[0].mxu0
      %v1113 = vadd.f32 0.0, %v1112
      %v1114 = vpop.f32.mrb[0].mxu0
      %v1115 = vpop.f32.mrb[0].mxu0
      %v1116 = vpop.f32.mrb[0].mxu0
      %1117 = vdwg.mxu0
      %1118 = vmatprep.subr.bf16.mxu0 0
      %1119 = vmatpush1.bf16.msra.mxu0 %v1046
      %1120 = vmatprep.subr.bf16.mxu0 0
      %1121 = vmatpush1.bf16.msra.mxu0 %v1047
      %1122 = vmatprep.subr.bf16.mxu0 0
      %1123 = vmatpush1.bf16.msra.mxu0 %v1048
      %1124 = vmatprep.subr.bf16.mxu0 0
      %1125 = vmatpush1.bf16.msra.mxu0 %v1049
      %1126 = vmatprep.subr.bf16.mxu0 0
      %1127 = vmatpush1.bf16.msra.mxu0 %v1050
      %1128 = vmatprep.subr.bf16.mxu0 0
      %1129 = vmatpush1.bf16.msra.mxu0 %v1051
      %1130 = vmatprep.subr.bf16.mxu0 0
      %1131 = vmatpush1.bf16.msra.mxu0 %v1052
      %1132 = vmatprep.subr.bf16.mxu0 0
      %1133 = vmatpush1.bf16.msra.mxu0 %v1053
      %1134 = vmatprep.subr.bf16.mxu0 0
      %1135 = vmatpush1.bf16.msra.mxu0 0
      %1136 = vmatprep.subr.bf16.mxu0 0
      %1137 = vmatpush1.bf16.msra.mxu0 0
      %1138 = vmatprep.subr.bf16.mxu0 0
      %1139 = vmatpush1.bf16.msra.mxu0 0
      %1140 = vmatprep.subr.bf16.mxu0 0
      %1141 = vmatpush1.bf16.msra.mxu0 0
      %1142 = vmatprep.subr.bf16.mxu0 0
      %1143 = vmatpush1.bf16.msra.mxu0 0
      %1144 = vmatprep.subr.bf16.mxu0 0
      %1145 = vmatpush1.bf16.msra.mxu0 0
      %1146 = vmatprep.subr.bf16.mxu0 0
      %1147 = vmatpush1.bf16.msra.mxu0 0
      %1148 = vmatprep.subr.bf16.mxu0 0
      %1149 = vmatpush1.bf16.msra.mxu0 0
      %1150 = vmatprep.mubr.bf16.mxu0 0
      %1151 = vmatmul.mubr.bf16.gmra.mrb[0].mxu0 %v975
      %v1152 = vpop.f32.mrb[0].mxu0
      %v1153 = vadd.f32 0.0, %v1152
      %v1154 = vpop.f32.mrb[0].mxu0
      %v1155 = vpop.f32.mrb[0].mxu0
      %v1156 = vadd.f32 0.0, %v1155
      %v1157 = vpop.f32.mrb[0].mxu0
      %1158 = vmatprep.mubr.bf16.mxu0 0
      %1159 = vmatmul.mubr.bf16.gmra.mrb[0].mxu0 %v986
      %v1160 = vpop.f32.mrb[0].mxu0
      %v1161 = vadd.f32 0.0, %v1160
      %v1162 = vpop.f32.mrb[0].mxu0
      %v1163 = vpop.f32.mrb[0].mxu0
      %v1164 = vadd.f32 0.0, %v1163
      %v1165 = vpop.f32.mrb[0].mxu0
      %1166 = vmatprep.mubr.bf16.mxu0 0
      %1167 = vmatmul.mubr.bf16.gmra.mrb[0].mxu0 %v997
      %v1168 = vpop.f32.mrb[0].mxu0
      %v1169 = vadd.f32 0.0, %v1168
      %v1170 = vpop.f32.mrb[0].mxu0
      %v1171 = vpop.f32.mrb[0].mxu0
      %v1172 = vpop.f32.mrb[0].mxu0
      %1173 = vdwg.mxu0
      %s1174 = smul.u32 %s24, 40
      %v1175 = vlaneseq
      %v1176 = vshrl.u32 %v1175, 7
      %v1177 = vadd.s32 %v1176, 8
      %v1178 = vadd.s32 %v1176, 16
      %v1179 = vadd.s32 %v1176, 24
      %v1180 = vadd.s32 %v1176, 32
      %v1181 = vstv %s1174
      %v1182 = vadd.s32 %v1181, %v1176
      %v1183 = vadd.s32 %v1181, %v1177
      %v1184 = vadd.s32 %v1181, %v1178
      %v1185 = vadd.s32 %v1181, %v1179
      %v1186 = vadd.s32 %v1181, %v1180
      %vm1187 = vcmp.lt.s32.totalorder %v1182, 33
      %vm1188 = vcmp.lt.s32.totalorder %v1183, 33
      %vm1189 = vcmp.lt.s32.totalorder %v1184, 33
      %vm1190 = vcmp.lt.s32.totalorder %v1185, 33
      %vm1191 = vcmp.lt.s32.totalorder %v1186, 33
      %v1192 = vsub.f32 %v1097, %v1153
      %v1193 = vsub.f32 %v1100, %v1156
      %v1194 = vsub.f32 %v1105, %v1161
      %v1195 = vsub.f32 %v1108, %v1164
      %v1196 = vsub.f32 %v1113, %v1169
      %v1197 = vand.u32 2147483647, %v1192
      %v1198 = vand.u32 2147483647, %v1193
      %v1199 = vand.u32 2147483647, %v1194
      %v1200 = vand.u32 2147483647, %v1195
      %v1201 = vand.u32 2147483647, %v1196
      %v1202 = vsel %vm1187, %v1197, 0.0
      %v1203 = vsel %vm1188, %v1198, 0.0
      %v1204 = vsel %vm1189, %v1199, 0.0
      %v1205 = vsel %vm1190, %v1200, 0.0
      %v1206 = vsel %vm1191, %v1201, 0.0
      %v1207 = vmax.f32 %v1097, 1e-05
      %v1208 = vmax.f32 %v1100, 1e-05
      %v1209 = vmax.f32 %v1105, 1e-05
      %v1210 = vmax.f32 %v1108, 1e-05
      %v1211 = vmax.f32 %v1113, 1e-05
      %v1212 = vlog2.pop %v1207
      %v1213 = vmul.f32 %v1212, 0.6931472
      %v1214 = vlog2.pop %v1208
      %v1215 = vmul.f32 %v1214, 0.6931472
      %v1216 = vlog2.pop %v1209
      %v1217 = vmul.f32 %v1216, 0.6931472
      %v1218 = vlog2.pop %v1210
      %v1219 = vmul.f32 %v1218, 0.6931472
      %v1220 = vlog2.pop %v1211
      %v1221 = vmul.f32 %v1220, 0.6931472
      %v1222 = vmul.f32 %v1213, 0.4342945
      %v1223 = vmul.f32 %v1215, 0.4342945
      %v1224 = vmul.f32 %v1217, 0.4342945
      %v1225 = vmul.f32 %v1219, 0.4342945
      %v1226 = vmul.f32 %v1221, 0.4342945
      %v1227 = vmul.f32 %v1222, 2.0
      %v1228 = vmul.f32 %v1223, 2.0
      %v1229 = vmul.f32 %v1224, 2.0
      %v1230 = vmul.f32 %v1225, 2.0
      %v1231 = vmul.f32 %v1226, 2.0
      %v1232 = vmax.f32 %v1153, 1e-05
      %v1233 = vmax.f32 %v1156, 1e-05
      %v1234 = vmax.f32 %v1161, 1e-05
      %v1235 = vmax.f32 %v1164, 1e-05
      %v1236 = vmax.f32 %v1169, 1e-05
      %v1237 = vlog2.pop %v1232
      %v1238 = vmul.f32 %v1237, 0.6931472
      %v1239 = vlog2.pop %v1233
      %v1240 = vmul.f32 %v1239, 0.6931472
      %v1241 = vlog2.pop %v1234
      %v1242 = vmul.f32 %v1241, 0.6931472
      %v1243 = vlog2.pop %v1235
      %v1244 = vmul.f32 %v1243, 0.6931472
      %v1245 = vlog2.pop %v1236
      %v1246 = vmul.f32 %v1245, 0.6931472
      %v1247 = vmul.f32 %v1238, 0.4342945
      %v1248 = vmul.f32 %v1240, 0.4342945
      %v1249 = vmul.f32 %v1242, 0.4342945
      %v1250 = vmul.f32 %v1244, 0.4342945
      %v1251 = vmul.f32 %v1246, 0.4342945
      %v1252 = vmul.f32 %v1247, 2.0
      %v1253 = vmul.f32 %v1248, 2.0
      %v1254 = vmul.f32 %v1249, 2.0
      %v1255 = vmul.f32 %v1250, 2.0
      %v1256 = vmul.f32 %v1251, 2.0
      %v1257 = vsub.f32 %v1227, %v1252
      %v1258 = vsub.f32 %v1228, %v1253
      %v1259 = vsub.f32 %v1229, %v1254
      %v1260 = vsub.f32 %v1230, %v1255
      %v1261 = vsub.f32 %v1231, %v1256
      %v1262 = vand.u32 2147483647, %v1257
      %v1263 = vand.u32 2147483647, %v1258
      %v1264 = vand.u32 2147483647, %v1259
      %v1265 = vand.u32 2147483647, %v1260
      %v1266 = vand.u32 2147483647, %v1261
      %v1267 = vsel %vm1187, %v1262, 0.0
      %v1268 = vsel %vm1188, %v1263, 0.0
      %v1269 = vsel %vm1189, %v1264, 0.0
      %v1270 = vsel %vm1190, %v1265, 0.0
      %v1271 = vsel %vm1191, %v1266, 0.0
      %v1272 = vld [vmem:[%s6] sm:$0xff]
      %v1273 = vadd.f32 %v1202, %v1203
      %v1274 = vadd.f32 %v1273, %v1204
      %v1275 = vadd.f32 %v1274, %v1205
      %v1276 = vadd.f32 %v1275, %v1206
      %v1277 = vadd.f32 %v1272, %v1276
      %1278 = vst [vmem:[%s6] sm:$0xff] %v1277
      %v1279 = vld [vmem:[%s7] sm:$0xff]
      %v1280 = vadd.f32 %v1267, %v1268
      %v1281 = vadd.f32 %v1280, %v1269
      %v1282 = vadd.f32 %v1281, %v1270
      %v1283 = vadd.f32 %v1282, %v1271
      %v1284 = vadd.f32 %v1279, %v1283
      %1285 = vst [vmem:[%s7] sm:$0xff] %v1284
      // Predicated region
      $region49: #{_lambda_.3} parent=43 // pred_check
        %p1286 = pneg %p206
      $region50: #{_lambda_.3} parent=43 // pred_check_branch
        %1288 = sbr.rel (%p1286) target = $region52
      $region51: #{_lambda_.3} parent=43 // pred_region
        _
      $region52: #{_lambda_.3} parent=43 // pred_fallthru
        _
      // Predicated region
      $region53: #{_lambda_.3} parent=43 // pred_check
        %p1289 = pneg %p227
      $region54: #{_lambda_.3} parent=43 // pred_check_branch
        %1291 = sbr.rel (%p1289) target = $region56
      $region55: #{_lambda_.3} parent=43 // pred_region
        _
      $region56: #{_lambda_.3} parent=43 // pred_fallthru
        _
      // Predicated region
      $region57: #{_lambda_.3} parent=43 // pred_check
        %p1292 = pneg %p206
      $region58: #{_lambda_.3} parent=43 // pred_check_branch
        %1294 = sbr.rel (%p1292) target = $region60
      $region59: #{_lambda_.3} parent=43 // pred_region
        _
      $region60: #{_lambda_.3} parent=43 // pred_fallthru
        _
      // Predicated region
      $region61: #{_lambda_.3} parent=43 // pred_check
        %p1295 = pneg %p227
      $region62: #{_lambda_.3} parent=43 // pred_check_branch
        %1297 = sbr.rel (%p1295) target = $region64
      $region63: #{_lambda_.3} parent=43 // pred_region
        _
      $region64: #{_lambda_.3} parent=43 // pred_fallthru
        _
    $region44: #{_lambda_.3} parent=5 // pred_fallthru
      _
    %p1298 = scmp.le.s32.totalorder 2, %s14
    // Predicated region
    $region65: #{_lambda_.3} parent=5 // pred_check
      %p1299 = pneg %p1298
    $region66: #{_lambda_.3} parent=5 // pred_check_branch
      %1301 = sbr.rel (%p1299) target = $region68
    $region67: #{_lambda_.3} parent=5 // pred_region
      %s1302 = ssub.s32 %s14, 2
    $region68: #{_lambda_.3} parent=5 // pred_fallthru
      _
  $region6: #{_lambda_.3} parent=0 // loop_footer
    %s18 = sadd.s32 1, %s14
  $region7: #{_lambda_.3} parent=0 // loop_footer_branch
    %13 = sbr.rel target = $region3
  $region8: #{_lambda_.3} parent=0 // loop_exit
    _

// kernel: _lambda_.2
$region0: #{_lambda_.2}
  #allocation0 [shape = 'u32[]', space=smem, size = 0x4, offset = 0x4, fixed_abs, tag = 'smem constant byte address 0x4 - core index']
  #allocation1 [shape = 'u32[144,128]{1,0:T(1,128)}', space=vmem, size = 0x12000, scoped, tag = 'internal scratch']
  %s0 = inlined_call_operand.vmem [shape: bf16[2,32,64], index: 0, kind: input, shape index: {}, may-alias: {0,1}]
  %s1 = inlined_call_operand.vmem [shape: bf16[2,32,64], index: 1, kind: input, shape index: {}, may-alias: {0,1}]
  %s2 = inlined_call_operand.vmem [shape: bf16[2,32,64], index: 2, kind: input, shape index: {}, may-alias: {2,3}]
  %s3 = inlined_call_operand.vmem [shape: bf16[2,32,64], index: 3, kind: input, shape index: {}, may-alias: {2,3}]
  %s4 = inlined_call_operand.vmem [shape: bf16[256,512], index: 4, kind: input, shape index: {}]
  %s5 = inlined_call_operand.vmem [shape: bf16[256,128], index: 5, kind: input, shape index: {}]
  %s6 = inlined_call_operand.vmem [shape: f32[8,128], index: 6, kind: output, shape index: {0}]
  %s7 = inlined_call_operand.vmem [shape: f32[8,128], index: 7, kind: output, shape index: {1}]
  %8 = xla_tuple %s6, %s7
  %s9 = sld [smem:[#allocation0]]
  $region69: #{_lambda_.2} parent=0
    _
  %s11 = ssub.s32 1, %s9
  %s12 = scalar_select 0, %s11, %s9
  loop: start=0, step=1, limit=4
  $region2: #{_lambda_.2} parent=0 // loop_pre_header
    _
  $region3: #{_lambda_.2} parent=0 // loop_header
    %s14 = sphi 0, %s18
    %p15 = scmp.ge.s32.totalorder %s14, 4
    %s21 = sphi 0, %s33
    %s22 = sphi 0, %s29
    %s23 = sphi 0, %s21
    %s24 = sphi 0, %s22
    %s25 = sphi 0, %s23
    %s26 = sphi 0, %s24
    %s38 = sphi 0, %s40
    %s41 = sphi 0, %s38
    %s42 = sphi 0, %s41
    %s58 = sphi 0, %s42
    %s70 = sphi 0, %s72
    %s73 = sphi 0, %s70
    %s74 = sphi 0, %s73
    %s90 = sphi 0, %s74
    %s98 = sphi 0, %s100
    %s101 = sphi 0, %s98
    %s102 = sphi 0, %s101
    %s118 = sphi 0, %s102
    %s130 = sphi 0, %s132
    %s133 = sphi 0, %s130
    %s134 = sphi 0, %s133
    %s150 = sphi 0, %s134
    %s154 = sphi 0, %s154
    %s156 = sphi 0, %s154
    %s157 = sphi 0, %s156
    %s171 = sphi 0, %s157
    %s175 = sphi 0, %s175
    %s177 = sphi 0, %s175
    %s178 = sphi 0, %s177
    %s192 = sphi 0, %s178
    %s196 = sphi 0, %s196
    %s198 = sphi 0, %s196
    %s199 = sphi 0, %s198
    %s213 = sphi 0, %s199
    %s217 = sphi 0, %s217
    %s219 = sphi 0, %s217
    %s220 = sphi 0, %s219
    %s234 = sphi 0, %s220
  $region4: #{_lambda_.2} parent=0 // loop_header_branch
    %17 = sbr.rel (%p15) target = $region8
  $region5: #{_lambda_.2} parent=0 // loop_body
    %s19 = ssub.s32 %s14, 1
    %s20 = ssub.s32 %s14, 2
    %s27 = sadd.s32 1, %s22
    %p28 = scmp.ge.s32.totalorder %s27, 1
    %s29 = scalar_select %p28, 0, %s27
    %s30 = sadd.s32 1, %s21
    %s31 = scalar_select %p28, %s30, %s21
    %p32 = scmp.ge.s32.totalorder %s31, 2
    %s33 = scalar_select %p32, 0, %s31
    %s34 = ssub.s32 %s21, %s33
    %s35 = ssub.s32 %s22, %s29
    %s36 = sor.u32 %s34, %s35
    %p37 = scmp.eq.s32.totalorder %s36, 0
    %s39 = sadd.s32 %s38, 1
    %s40 = scalar_select %p37, %s38, %s39
    %p43 = pneg %p37
    %p44 = scmp.eq.s32.totalorder %s14, 1
    %p45 = por %p43, %p44
    %p46 = scmp.ne.s32.totalorder %s38, %s41
    %p47 = scmp.eq.s32.totalorder %s14, 0
    %p48 = por %p46, %p47
    %p49 = scmp.ne.s32.totalorder %s38, %s41
    %p50 = scmp.eq.s32.totalorder %s19, 1
    %p51 = por %p49, %p50
    %p52 = scmp.ne.s32.totalorder %s41, %s42
    %p53 = scmp.eq.s32.totalorder %s19, 0
    %p54 = por %p52, %p53
    %p55 = scmp.ne.s32.totalorder %s41, %s42
    %p56 = scmp.eq.s32.totalorder %s20, 1
    %p57 = por %p55, %p56
    %p59 = scmp.ne.s32.totalorder %s42, %s58
    %p60 = scmp.eq.s32.totalorder %s20, 0
    %p61 = por %p59, %p60
    %s62 = sadd.s32 %s22, 1
    %s63 = smul.u32 %s62, 3
    %s64 = sadd.s32 %s29, 1
    %s65 = smul.u32 %s64, 3
    %s66 = ssub.s32 %s21, %s33
    %s67 = ssub.s32 %s63, %s65
    %s68 = sor.u32 %s66, %s67
    %p69 = scmp.eq.s32.totalorder %s68, 0
    %s71 = sadd.s32 %s70, 1
    %s72 = scalar_select %p69, %s70, %s71
    %p75 = pneg %p69
    %p76 = scmp.eq.s32.totalorder %s14, 1
    %p77 = por %p75, %p76
    %p78 = scmp.ne.s32.totalorder %s70, %s73
    %p79 = scmp.eq.s32.totalorder %s14, 0
    %p80 = por %p78, %p79
    %p81 = scmp.ne.s32.totalorder %s70, %s73
    %p82 = scmp.eq.s32.totalorder %s19, 1
    %p83 = por %p81, %p82
    %p84 = scmp.ne.s32.totalorder %s73, %s74
    %p85 = scmp.eq.s32.totalorder %s19, 0
    %p86 = por %p84, %p85
    %p87 = scmp.ne.s32.totalorder %s73, %s74
    %p88 = scmp.eq.s32.totalorder %s20, 1
    %p89 = por %p87, %p88
    %p91 = scmp.ne.s32.totalorder %s74, %s90
    %p92 = scmp.eq.s32.totalorder %s20, 0
    %p93 = por %p91, %p92
    %s94 = ssub.s32 %s21, %s33
    %s95 = ssub.s32 %s22, %s29
    %s96 = sor.u32 %s94, %s95
    %p97 = scmp.eq.s32.totalorder %s96, 0
    %s99 = sadd.s32 %s98, 1
    %s100 = scalar_select %p97, %s98, %s99
    %p103 = pneg %p97
    %p104 = scmp.eq.s32.totalorder %s14, 1
    %p105 = por %p103, %p104
    %p106 = scmp.ne.s32.totalorder %s98, %s101
    %p107 = scmp.eq.s32.totalorder %s14, 0
    %p108 = por %p106, %p107
    %p109 = scmp.ne.s32.totalorder %s98, %s101
    %p110 = scmp.eq.s32.totalorder %s19, 1
    %p111 = por %p109, %p110
    %p112 = scmp.ne.s32.totalorder %s101, %s102
    %p113 = scmp.eq.s32.totalorder %s19, 0
    %p114 = por %p112, %p113
    %p115 = scmp.ne.s32.totalorder %s101, %s102
    %p116 = scmp.eq.s32.totalorder %s20, 1
    %p117 = por %p115, %p116
    %p119 = scmp.ne.s32.totalorder %s102, %s118
    %p120 = scmp.eq.s32.totalorder %s20, 0
    %p121 = por %p119, %p120
    %s122 = sadd.s32 %s22, 1
    %s123 = smul.u32 %s122, 3
    %s124 = sadd.s32 %s29, 1
    %s125 = smul.u32 %s124, 3
    %s126 = ssub.s32 %s21, %s33
    %s127 = ssub.s32 %s123, %s125
    %s128 = sor.u32 %s126, %s127
    %p129 = scmp.eq.s32.totalorder %s128, 0
    %s131 = sadd.s32 %s130, 1
    %s132 = scalar_select %p129, %s130, %s131
    %p135 = pneg %p129
    %p136 = scmp.eq.s32.totalorder %s14, 1
    %p137 = por %p135, %p136
    %p138 = scmp.ne.s32.totalorder %s130, %s133
    %p139 = scmp.eq.s32.totalorder %s14, 0
    %p140 = por %p138, %p139
    %p141 = scmp.ne.s32.totalorder %s130, %s133
    %p142 = scmp.eq.s32.totalorder %s19, 1
    %p143 = por %p141, %p142
    %p144 = scmp.ne.s32.totalorder %s133, %s134
    %p145 = scmp.eq.s32.totalorder %s19, 0
    %p146 = por %p144, %p145
    %p147 = scmp.ne.s32.totalorder %s133, %s134
    %p148 = scmp.eq.s32.totalorder %s20, 1
    %p149 = por %p147, %p148
    %p151 = scmp.ne.s32.totalorder %s134, %s150
    %p152 = scmp.eq.s32.totalorder %s20, 0
    %p153 = por %p151, %p152
    %s155 = sadd.s32 %s154, 1
    %p158 = scmp.eq.s32.totalorder %s14, 1
    %p159 = scmp.ne.s32.totalorder %s154, %s156
    %p160 = scmp.eq.s32.totalorder %s14, 0
    %p161 = por %p159, %p160
    %p162 = scmp.ne.s32.totalorder %s154, %s156
    %p163 = scmp.eq.s32.totalorder %s19, 1
    %p164 = por %p162, %p163
    %p165 = scmp.ne.s32.totalorder %s156, %s157
    %p166 = scmp.eq.s32.totalorder %s19, 0
    %p167 = por %p165, %p166
    %p168 = scmp.ne.s32.totalorder %s156, %s157
    %p169 = scmp.eq.s32.totalorder %s20, 1
    %p170 = por %p168, %p169
    %p172 = scmp.ne.s32.totalorder %s157, %s171
    %p173 = scmp.eq.s32.totalorder %s20, 0
    %p174 = por %p172, %p173
    %s176 = sadd.s32 %s175, 1
    %p179 = scmp.eq.s32.totalorder %s14, 1
    %p180 = scmp.ne.s32.totalorder %s175, %s177
    %p181 = scmp.eq.s32.totalorder %s14, 0
    %p182 = por %p180, %p181
    %p183 = scmp.ne.s32.totalorder %s175, %s177
    %p184 = scmp.eq.s32.totalorder %s19, 1
    %p185 = por %p183, %p184
    %p186 = scmp.ne.s32.totalorder %s177, %s178
    %p187 = scmp.eq.s32.totalorder %s19, 0
    %p188 = por %p186, %p187
    %p189 = scmp.ne.s32.totalorder %s177, %s178
    %p190 = scmp.eq.s32.totalorder %s20, 1
    %p191 = por %p189, %p190
    %p193 = scmp.ne.s32.totalorder %s178, %s192
    %p194 = scmp.eq.s32.totalorder %s20, 0
    %p195 = por %p193, %p194
    %s197 = sadd.s32 %s196, 1
    %p200 = scmp.eq.s32.totalorder %s14, 1
    %p201 = scmp.ne.s32.totalorder %s196, %s198
    %p202 = scmp.eq.s32.totalorder %s14, 0
    %p203 = por %p201, %p202
    %p204 = scmp.ne.s32.totalorder %s196, %s198
    %p205 = scmp.eq.s32.totalorder %s19, 1
    %p206 = por %p204, %p205
    %p207 = scmp.ne.s32.totalorder %s198, %s199
    %p208 = scmp.eq.s32.totalorder %s19, 0
    %p209 = por %p207, %p208
    %p210 = scmp.ne.s32.totalorder %s198, %s199
    %p211 = scmp.eq.s32.totalorder %s20, 1
    %p212 = por %p210, %p211
    %p214 = scmp.ne.s32.totalorder %s199, %s213
    %p215 = scmp.eq.s32.totalorder %s20, 0
    %p216 = por %p214, %p215
    %s218 = sadd.s32 %s217, 1
    %p221 = scmp.eq.s32.totalorder %s14, 1
    %p222 = scmp.ne.s32.totalorder %s217, %s219
    %p223 = scmp.eq.s32.totalorder %s14, 0
    %p224 = por %p222, %p223
    %p225 = scmp.ne.s32.totalorder %s217, %s219
    %p226 = scmp.eq.s32.totalorder %s19, 1
    %p227 = por %p225, %p226
    %p228 = scmp.ne.s32.totalorder %s219, %s220
    %p229 = scmp.eq.s32.totalorder %s19, 0
    %p230 = por %p228, %p229
    %p231 = scmp.ne.s32.totalorder %s219, %s220
    %p232 = scmp.eq.s32.totalorder %s20, 1
    %p233 = por %p231, %p232
    %p235 = scmp.ne.s32.totalorder %s220, %s234
    %p236 = scmp.eq.s32.totalorder %s20, 0
    %p237 = por %p235, %p236
    %p238 = scmp.le.s32.totalorder 1, %s14
    %p239 = scmp.lt.s32.totalorder %s14, 3
    %p240 = pnand %p238, %p239
    %p241 = pneg %p240
    // Predicated region
    $region9: #{_lambda_.2} parent=5 // pred_check
      _
    $region10: #{_lambda_.2} parent=5 // pred_check_branch
      %243 = sbr.rel (%p240) target = $region12
    $region11: #{_lambda_.2} parent=5 // pred_region
      %s244 = ssub.s32 %s14, 1
      // Predicated region
      $region13: #{_lambda_.2} parent=11 // pred_check
        %p245 = pneg %p167
      $region14: #{_lambda_.2} parent=11 // pred_check_branch
        %247 = sbr.rel (%p245) target = $region16
      $region15: #{_lambda_.2} parent=11 // pred_region
        _
      $region16: #{_lambda_.2} parent=11 // pred_fallthru
        _
      // Predicated region
      $region17: #{_lambda_.2} parent=11 // pred_check
        %p248 = pneg %p188
      $region18: #{_lambda_.2} parent=11 // pred_check_branch
        %250 = sbr.rel (%p248) target = $region20
      $region19: #{_lambda_.2} parent=11 // pred_region
        _
      $region20: #{_lambda_.2} parent=11 // pred_fallthru
        _
    $region12: #{_lambda_.2} parent=5 // pred_fallthru
      _
    %p251 = scmp.lt.s32.totalorder %s14, 2
    // Predicated region
    $region21: #{_lambda_.2} parent=5 // pred_check
      %p252 = pneg %p251
    $region22: #{_lambda_.2} parent=5 // pred_check_branch
      %254 = sbr.rel (%p252) target = $region24
    $region23: #{_lambda_.2} parent=5 // pred_region
      // Predicated region
      $region25: #{_lambda_.2} parent=23 // pred_check
        %p255 = pneg %p48
      $region26: #{_lambda_.2} parent=23 // pred_check_branch
        %257 = sbr.rel (%p255) target = $region28
      $region27: #{_lambda_.2} parent=23 // pred_region
        %s258 = smul.u32 3, %s22
        %s259 = ssub.s32 4, %s258
        %p260 = scmp.lt.s32.totalorder %s259, 3
        %s261 = scalar_select %p260, %s259, 3
        %s262 = smul.u32 64, %s261
        %p263 = scmp.lt.s32.totalorder %s21, 1
        %s264 = scalar_select %p263, %s21, 1
        %p265 = scmp.lt.s32.totalorder %s258, 3
        %s266 = scalar_select %p265, %s258, 3
        %s267 = smul.addr %s264, 4
        %s268 = sadd.s32 %s266, %s267
        %s269 = smul.addr %s268, 4
        %s270 = scalar_lea.vmem %s0, %s269
        %s271 = smul.u32 3, %s22
        %s272 = ssub.s32 4, %s271
        %p273 = scmp.lt.s32.totalorder %s272, 3
        %s274 = scalar_select %p273, %s272, 3
        %s275 = smul.u32 64, %s274
      $region28: #{_lambda_.2} parent=23 // pred_fallthru
        _
      // Predicated region
      $region29: #{_lambda_.2} parent=23 // pred_check
        %p276 = pneg %p80
      $region30: #{_lambda_.2} parent=23 // pred_check_branch
        %278 = sbr.rel (%p276) target = $region32
      $region31: #{_lambda_.2} parent=23 // pred_region
        %s279 = sadd.s32 %s22, 1
        %s280 = smul.u32 %s279, 3
        %p281 = scmp.lt.s32.totalorder %s21, 1
        %s282 = scalar_select %p281, %s21, 1
        %p283 = scmp.lt.s32.totalorder %s280, 3
        %s284 = scalar_select %p283, %s280, 3
        %s285 = smul.addr %s282, 4
        %s286 = sadd.s32 %s284, %s285
        %s287 = smul.addr %s286, 4
        %s288 = scalar_lea.vmem %s1, %s287
        %s289 = sadd.s32 %s22, 1
        %s290 = smul.u32 %s289, 3
      $region32: #{_lambda_.2} parent=23 // pred_fallthru
        _
      // Predicated region
      $region33: #{_lambda_.2} parent=23 // pred_check
        %p291 = pneg %p108
      $region34: #{_lambda_.2} parent=23 // pred_check_branch
        %293 = sbr.rel (%p291) target = $region36
      $region35: #{_lambda_.2} parent=23 // pred_region
        %s294 = smul.u32 3, %s22
        %s295 = ssub.s32 4, %s294
        %p296 = scmp.lt.s32.totalorder %s295, 3
        %s297 = scalar_select %p296, %s295, 3
        %s298 = smul.u32 64, %s297
        %p299 = scmp.lt.s32.totalorder %s21, 1
        %s300 = scalar_select %p299, %s21, 1
        %p301 = scmp.lt.s32.totalorder %s294, 3
        %s302 = scalar_select %p301, %s294, 3
        %s303 = smul.addr %s300, 4
        %s304 = sadd.s32 %s302, %s303
        %s305 = smul.addr %s304, 4
        %s306 = scalar_lea.vmem %s2, %s305
        %s307 = smul.u32 3, %s22
        %s308 = ssub.s32 4, %s307
        %p309 = scmp.lt.s32.totalorder %s308, 3
        %s310 = scalar_select %p309, %s308, 3
        %s311 = smul.u32 64, %s310
      $region36: #{_lambda_.2} parent=23 // pred_fallthru
        _
      // Predicated region
      $region37: #{_lambda_.2} parent=23 // pred_check
        %p312 = pneg %p140
      $region38: #{_lambda_.2} parent=23 // pred_check_branch
        %314 = sbr.rel (%p312) target = $region40
      $region39: #{_lambda_.2} parent=23 // pred_region
        %s315 = sadd.s32 %s22, 1
        %s316 = smul.u32 %s315, 3
        %p317 = scmp.lt.s32.totalorder %s21, 1
        %s318 = scalar_select %p317, %s21, 1
        %p319 = scmp.lt.s32.totalorder %s316, 3
        %s320 = scalar_select %p319, %s316, 3
        %s321 = smul.addr %s318, 4
        %s322 = sadd.s32 %s320, %s321
        %s323 = smul.addr %s322, 4
        %s324 = scalar_lea.vmem %s3, %s323
        %s325 = sadd.s32 %s22, 1
        %s326 = smul.u32 %s325, 3
      $region40: #{_lambda_.2} parent=23 // pred_fallthru
        _
    $region24: #{_lambda_.2} parent=5 // pred_fallthru
      _
    %p327 = scmp.le.s32.totalorder 1, %s14
    %p328 = scmp.lt.s32.totalorder %s14, 3
    %p329 = pnand %p327, %p328
    %p330 = pneg %p329
    // Predicated region
    $region41: #{_lambda_.2} parent=5 // pred_check
      _
    $region42: #{_lambda_.2} parent=5 // pred_check_branch
      %332 = sbr.rel (%p329) target = $region44
    $region43: #{_lambda_.2} parent=5 // pred_region
      %s333 = ssub.s32 %s14, 1
      %s334 = smul.u32 3, %s24
      %s335 = ssub.s32 4, %s334
      %p336 = scmp.lt.s32.totalorder %s335, 3
      %s337 = scalar_select %p336, %s335, 3
      %s338 = smul.u32 64, %s337
      %p339 = scmp.lt.s32.totalorder %s23, 1
      %s340 = scalar_select %p339, %s23, 1
      %p341 = scmp.lt.s32.totalorder %s334, 3
      %s342 = scalar_select %p341, %s334, 3
      %s343 = smul.addr %s340, 4
      %s344 = sadd.s32 %s342, %s343
      %s345 = smul.addr %s344, 4
      %s346 = scalar_lea.vmem %s0, %s345
      %p347 = pneg %p54
      %p348 = pneg %p51
      %s349 = sadd.s32 %s24, 1
      %s350 = smul.u32 %s349, 3
      %p351 = scmp.lt.s32.totalorder %s23, 1
      %s352 = scalar_select %p351, %s23, 1
      %p353 = scmp.lt.s32.totalorder %s350, 3
      %s354 = scalar_select %p353, %s350, 3
      %s355 = smul.addr %s352, 4
      %s356 = sadd.s32 %s354, %s355
      %s357 = smul.addr %s356, 4
      %s358 = scalar_lea.vmem %s1, %s357
      %p359 = pneg %p86
      %p360 = pneg %p83
      %s361 = smul.u32 3, %s24
      %s362 = ssub.s32 4, %s361
      %p363 = scmp.lt.s32.totalorder %s362, 3
      %s364 = scalar_select %p363, %s362, 3
      %s365 = smul.u32 64, %s364
      %p366 = scmp.lt.s32.totalorder %s23, 1
      %s367 = scalar_select %p366, %s23, 1
      %p368 = scmp.lt.s32.totalorder %s361, 3
      %s369 = scalar_select %p368, %s361, 3
      %s370 = smul.addr %s367, 4
      %s371 = sadd.s32 %s369, %s370
      %s372 = smul.addr %s371, 4
      %s373 = scalar_lea.vmem %s2, %s372
      %p374 = pneg %p114
      %p375 = pneg %p111
      %s376 = sadd.s32 %s24, 1
      %s377 = smul.u32 %s376, 3
      %p378 = scmp.lt.s32.totalorder %s23, 1
      %s379 = scalar_select %p378, %s23, 1
      %p380 = scmp.lt.s32.totalorder %s377, 3
      %s381 = scalar_select %p380, %s377, 3
      %s382 = smul.addr %s379, 4
      %s383 = sadd.s32 %s381, %s382
      %s384 = smul.addr %s383, 4
      %s385 = scalar_lea.vmem %s3, %s384
      %p386 = pneg %p146
      %p387 = pneg %p143
      %p388 = pneg %p167
      %p389 = pneg %p164
      %p390 = pneg %p188
      %p391 = pneg %p185
      %p392 = pneg %p209
      %p393 = pneg %p206
      %p394 = pneg %p230
      %p395 = pneg %p227
      %s396 = smul.u32 3, %s24
      %s397 = ssub.s32 4, %s396
      %p398 = scmp.lt.s32.totalorder %s397, 3
      %s399 = scalar_select %p398, %s397, 3
      %s400 = smul.u32 64, %s399
      %p401 = scmp.lt.s32.totalorder %s23, 1
      %s402 = scalar_select %p401, %s23, 1
      %p403 = scmp.lt.s32.totalorder %s396, 3
      %s404 = scalar_select %p403, %s396, 3
      %s405 = smul.addr %s402, 4
      %s406 = sadd.s32 %s404, %s405
      %s407 = smul.addr %s406, 4
      %s408 = scalar_lea.vmem %s0, %s407
      %s409 = smul.u32 3, %s24
      %s410 = ssub.s32 4, %s409
      %p411 = scmp.lt.s32.totalorder %s410, 3
      %s412 = scalar_select %p411, %s410, 3
      %s413 = smul.u32 64, %s412
      %s414 = sadd.s32 %s24, 1
      %s415 = smul.u32 %s414, 3
      %p416 = scmp.lt.s32.totalorder %s23, 1
      %s417 = scalar_select %p416, %s23, 1
      %p418 = scmp.lt.s32.totalorder %s415, 3
      %s419 = scalar_select %p418, %s415, 3
      %s420 = smul.addr %s417, 4
      %s421 = sadd.s32 %s419, %s420
      %s422 = smul.addr %s421, 4
      %s423 = scalar_lea.vmem %s1, %s422
      %s424 = sadd.s32 %s24, 1
      %s425 = smul.u32 %s424, 3
      %s426 = smul.u32 3, %s24
      %s427 = ssub.s32 4, %s426
      %p428 = scmp.lt.s32.totalorder %s427, 3
      %s429 = scalar_select %p428, %s427, 3
      %s430 = smul.u32 64, %s429
      %p431 = scmp.lt.s32.totalorder %s23, 1
      %s432 = scalar_select %p431, %s23, 1
      %p433 = scmp.lt.s32.totalorder %s426, 3
      %s434 = scalar_select %p433, %s426, 3
      %s435 = smul.addr %s432, 4
      %s436 = sadd.s32 %s434, %s435
      %s437 = smul.addr %s436, 4
      %s438 = scalar_lea.vmem %s2, %s437
      %s439 = smul.u32 3, %s24
      %s440 = ssub.s32 4, %s439
      %p441 = scmp.lt.s32.totalorder %s440, 3
      %s442 = scalar_select %p441, %s440, 3
      %s443 = smul.u32 64, %s442
      %s444 = sadd.s32 %s24, 1
      %s445 = smul.u32 %s444, 3
      %p446 = scmp.lt.s32.totalorder %s23, 1
      %s447 = scalar_select %p446, %s23, 1
      %p448 = scmp.lt.s32.totalorder %s445, 3
      %s449 = scalar_select %p448, %s445, 3
      %s450 = smul.addr %s447, 4
      %s451 = sadd.s32 %s449, %s450
      %s452 = smul.addr %s451, 4
      %s453 = scalar_lea.vmem %s3, %s452
      %s454 = sadd.s32 %s24, 1
      %s455 = smul.u32 %s454, 3
      %p457 = scmp.eq.s32.totalorder %s23, 0
      %p458 = scmp.eq.s32.totalorder %s24, 0
      %p459 = pnand %p457, %p458
      %p460 = pneg %p459
      // Predicated region
      $region45: #{_lambda_.2} parent=43 // pred_check
        _
      $region46: #{_lambda_.2} parent=43 // pred_check_branch
        %462 = sbr.rel (%p459) target = $region48
      $region47: #{_lambda_.2} parent=43 // pred_region
        %463 = vst [vmem:[%s6] sm:$0xff] 0.0
        %464 = vst [vmem:[%s7] sm:$0xff] 0.0
      $region48: #{_lambda_.2} parent=43 // pred_fallthru
        _
      %v465 = vld [vmem:[%s408] sm:$0xf]
      %v466 = vld [vmem:[%s408 + $0x4] sm:$0xf]
      %v467 = vld [vmem:[%s408 + $0x8] sm:$0xf]
      %v468 = vld [vmem:[%s423] sm:$0xf]
      %v472 = vunpack.c.l.b16 %v465
      %v473 = vunpack.c.l.b16 %v466
      %v474 = vunpack.c.l.b16 %v467
      %v475 = vpack.c.b16 %v473, %v472
      %v476 = vpack.c.b16 %v474, %v474
      %v478 = vunpack.c.l.b16 %v468
      %v479 = vpack.c.b16 %v478, %v478
      %vm480 = vcmask 1043456
      %v483 = vsel %vm480, %v476, %v479
      %vm484 = vsmask.f32 7424
      %v486 = vshrl.u32 %v475, 16
      %v488 = vshll.u32 %v475, 16
      %v490 = vrot.slane %v488, 1
      %v491 = vor.u32 %v486, %v490
      %v492 = vshll.u32 %v483, 16
      %v494 = vrot.slane %v492, 1
      %v495 = vsel %vm484, %v491, %v494
      %v496 = vshrl.u32 %v483, 16
      %v498 = vor.u32 %v496, %v494
      %499 = vrot.lane.b32.xlu0 %v495, 64
      %v500 = vpop.permute.xlu0 %499
      %501 = vrot.lane.b32.xlu0 %v498, 64
      %v502 = vpop.permute.xlu0 %501
      %vm504 = vcmask 1046528
      %v505 = vrot.slane %v475, 1
      %v506 = vrot.slane %v483, 1
      %v507 = vsel %vm504, %v505, %v506
      %vm508 = vsmask.f32 6400
      %v509 = vrot.slane %v486, 1
      %v510 = vrot.slane %v488, 2
      %v511 = vor.u32 %v509, %v510
      %v512 = vrot.slane %v496, 1
      %v513 = vrot.slane %v492, 2
      %v514 = vor.u32 %v512, %v513
      %v515 = vsel %vm508, %v511, %v514
      %516 = vrot.lane.b32.xlu0 %v515, 64
      %v517 = vpop.permute.xlu0 %516
      %518 = vrot.lane.b32.xlu0 %v514, 64
      %v519 = vpop.permute.xlu0 %518
      %vm520 = vcmask 523264
      %v522 = vsel %vm520, %v475, %v500
      %v525 = vsel %vm520, %v483, %v502
      %v529 = vsel %vm520, %v507, %v517
      %v533 = vsel %vm520, %v506, %v519
      %v535 = vld [vmem:[%s438] sm:$0xf]
      %v536 = vld [vmem:[%s438 + $0x4] sm:$0xf]
      %v537 = vld [vmem:[%s438 + $0x8] sm:$0xf]
      %v538 = vld [vmem:[%s453] sm:$0xf]
      %v542 = vunpack.c.l.b16 %v535
      %v543 = vunpack.c.l.b16 %v536
      %v544 = vunpack.c.l.b16 %v537
      %v545 = vpack.c.b16 %v543, %v542
      %v546 = vpack.c.b16 %v544, %v544
      %v548 = vunpack.c.l.b16 %v538
      %v549 = vpack.c.b16 %v548, %v548
      %v552 = vsel %vm480, %v546, %v549
      %v554 = vshrl.u32 %v545, 16
      %v556 = vshll.u32 %v545, 16
      %v558 = vrot.slane %v556, 1
      %v559 = vor.u32 %v554, %v558
      %v560 = vshll.u32 %v552, 16
      %v562 = vrot.slane %v560, 1
      %v563 = vsel %vm484, %v559, %v562
      %v564 = vshrl.u32 %v552, 16
      %v566 = vor.u32 %v564, %v562
      %567 = vrot.lane.b32.xlu0 %v563, 64
      %v568 = vpop.permute.xlu0 %567
      %569 = vrot.lane.b32.xlu0 %v566, 64
      %v570 = vpop.permute.xlu0 %569
      %v572 = vrot.slane %v545, 1
      %v573 = vrot.slane %v552, 1
      %v574 = vsel %vm504, %v572, %v573
      %v575 = vrot.slane %v554, 1
      %v576 = vrot.slane %v556, 2
      %v577 = vor.u32 %v575, %v576
      %v578 = vrot.slane %v564, 1
      %v579 = vrot.slane %v560, 2
      %v580 = vor.u32 %v578, %v579
      %v581 = vsel %vm508, %v577, %v580
      %582 = vrot.lane.b32.xlu0 %v581, 64
      %v583 = vpop.permute.xlu0 %582
      %584 = vrot.lane.b32.xlu0 %v580, 64
      %v585 = vpop.permute.xlu0 %584
      %v587 = vsel %vm520, %v545, %v568
      %v590 = vsel %vm520, %v552, %v570
      %v594 = vsel %vm520, %v574, %v583
      %v598 = vsel %vm520, %v573, %v585
      %v600 = vld [vmem:[%s4] sm:$0xff]
      %v601 = vld [vmem:[%s4 + $0x8] sm:$0xff]
      %v602 = vld [vmem:[%s4 + $0x10] sm:$0xff]
      %v603 = vld [vmem:[%s4 + $0x18] sm:$0xff]
      %v604 = vld [vmem:[%s4 + $0x20] sm:$0xff]
      %v605 = vld [vmem:[%s4 + $0x28] sm:$0xff]
      %v606 = vld [vmem:[%s4 + $0x30] sm:$0xff]
      %v607 = vld [vmem:[%s4 + $0x38] sm:$0xff]
      %v608 = vld [vmem:[%s4 + $0x40] sm:$0xff]
      %v609 = vld [vmem:[%s4 + $0x48] sm:$0xff]
      %v610 = vld [vmem:[%s4 + $0x50] sm:$0xff]
      %v611 = vld [vmem:[%s4 + $0x58] sm:$0xff]
      %v612 = vld [vmem:[%s4 + $0x60] sm:$0xff]
      %v613 = vld [vmem:[%s4 + $0x68] sm:$0xff]
      %v614 = vld [vmem:[%s4 + $0x70] sm:$0xff]
      %v615 = vld [vmem:[%s4 + $0x78] sm:$0xff]
      %v616 = vld [vmem:[%s4 + $0x80] sm:$0xff]
      %v617 = vld [vmem:[%s4 + $0x88] sm:$0xff]
      %v618 = vld [vmem:[%s4 + $0x90] sm:$0xff]
      %v619 = vld [vmem:[%s4 + $0x98] sm:$0xff]
      %v620 = vld [vmem:[%s4 + $0xa0] sm:$0xff]
      %v621 = vld [vmem:[%s4 + $0xa8] sm:$0xff]
      %v622 = vld [vmem:[%s4 + $0xb0] sm:$0xff]
      %v623 = vld [vmem:[%s4 + $0xb8] sm:$0xff]
      %v624 = vld [vmem:[%s4 + $0xc0] sm:$0xff]
      %v625 = vld [vmem:[%s4 + $0xc8] sm:$0xff]
      %v626 = vld [vmem:[%s4 + $0xd0] sm:$0xff]
      %v627 = vld [vmem:[%s4 + $0xd8] sm:$0xff]
      %v628 = vld [vmem:[%s4 + $0xe0] sm:$0xff]
      %v629 = vld [vmem:[%s4 + $0xe8] sm:$0xff]
      %v630 = vld [vmem:[%s4 + $0xf0] sm:$0xff]
      %v631 = vld [vmem:[%s4 + $0xf8] sm:$0xff]
      %v632 = vld [vmem:[%s4 + $0x100] sm:$0xff]
      %v633 = vld [vmem:[%s4 + $0x108] sm:$0xff]
      %v634 = vld [vmem:[%s4 + $0x110] sm:$0xff]
      %v635 = vld [vmem:[%s4 + $0x118] sm:$0xff]
      %v636 = vld [vmem:[%s4 + $0x120] sm:$0xff]
      %v637 = vld [vmem:[%s4 + $0x128] sm:$0xff]
      %v638 = vld [vmem:[%s4 + $0x130] sm:$0xff]
      %v639 = vld [vmem:[%s4 + $0x138] sm:$0xff]
      %v640 = vld [vmem:[%s4 + $0x140] sm:$0xff]
      %v641 = vld [vmem:[%s4 + $0x148] sm:$0xff]
      %v642 = vld [vmem:[%s4 + $0x150] sm:$0xff]
      %v643 = vld [vmem:[%s4 + $0x158] sm:$0xff]
      %v644 = vld [vmem:[%s4 + $0x160] sm:$0xff]
      %v645 = vld [vmem:[%s4 + $0x168] sm:$0xff]
      %v646 = vld [vmem:[%s4 + $0x170] sm:$0xff]
      %v647 = vld [vmem:[%s4 + $0x178] sm:$0xff]
      %v648 = vld [vmem:[%s4 + $0x180] sm:$0xff]
      %v649 = vld [vmem:[%s4 + $0x188] sm:$0xff]
      %v650 = vld [vmem:[%s4 + $0x190] sm:$0xff]
      %v651 = vld [vmem:[%s4 + $0x198] sm:$0xff]
      %v652 = vld [vmem:[%s4 + $0x1a0] sm:$0xff]
      %v653 = vld [vmem:[%s4 + $0x1a8] sm:$0xff]
      %v654 = vld [vmem:[%s4 + $0x1b0] sm:$0xff]
      %v655 = vld [vmem:[%s4 + $0x1b8] sm:$0xff]
      %v656 = vld [vmem:[%s4 + $0x1c0] sm:$0xff]
      %v657 = vld [vmem:[%s4 + $0x1c8] sm:$0xff]
      %v658 = vld [vmem:[%s4 + $0x1d0] sm:$0xff]
      %v659 = vld [vmem:[%s4 + $0x1d8] sm:$0xff]
      %v660 = vld [vmem:[%s4 + $0x1e0] sm:$0xff]
      %v661 = vld [vmem:[%s4 + $0x1e8] sm:$0xff]
      %v662 = vld [vmem:[%s4 + $0x1f0] sm:$0xff]
      %v663 = vld [vmem:[%s4 + $0x1f8] sm:$0xff]
      %v728 = vunpack.c.l.b16 %v600
      %v729 = vunpack.c.h.b16 %v600
      %v730 = vunpack.c.l.b16 %v601
      %v731 = vunpack.c.h.b16 %v601
      %v732 = vunpack.c.l.b16 %v602
      %v733 = vunpack.c.h.b16 %v602
      %v734 = vunpack.c.l.b16 %v603
      %v735 = vunpack.c.h.b16 %v603
      %v736 = vunpack.c.l.b16 %v604
      %v737 = vunpack.c.h.b16 %v604
      %v738 = vunpack.c.l.b16 %v605
      %v739 = vunpack.c.h.b16 %v605
      %v740 = vunpack.c.l.b16 %v606
      %v741 = vunpack.c.h.b16 %v606
      %v742 = vunpack.c.l.b16 %v607
      %v743 = vunpack.c.h.b16 %v607
      %v744 = vunpack.c.l.b16 %v608
      %v745 = vunpack.c.h.b16 %v608
      %v746 = vunpack.c.l.b16 %v609
      %v747 = vunpack.c.h.b16 %v609
      %v748 = vunpack.c.l.b16 %v610
      %v749 = vunpack.c.h.b16 %v610
      %v750 = vunpack.c.l.b16 %v611
      %v751 = vunpack.c.h.b16 %v611
      %v752 = vunpack.c.l.b16 %v612
      %v753 = vunpack.c.h.b16 %v612
      %v754 = vunpack.c.l.b16 %v613
      %v755 = vunpack.c.h.b16 %v613
      %v756 = vunpack.c.l.b16 %v614
      %v757 = vunpack.c.h.b16 %v614
      %v758 = vunpack.c.l.b16 %v615
      %v759 = vunpack.c.h.b16 %v615
      %v760 = vunpack.c.l.b16 %v616
      %v761 = vunpack.c.h.b16 %v616
      %v762 = vunpack.c.l.b16 %v617
      %v763 = vunpack.c.h.b16 %v617
      %v764 = vunpack.c.l.b16 %v618
      %v765 = vunpack.c.h.b16 %v618
      %v766 = vunpack.c.l.b16 %v619
      %v767 = vunpack.c.h.b16 %v619
      %v768 = vunpack.c.l.b16 %v620
      %v769 = vunpack.c.h.b16 %v620
      %v770 = vunpack.c.l.b16 %v621
      %v771 = vunpack.c.h.b16 %v621
      %v772 = vunpack.c.l.b16 %v622
      %v773 = vunpack.c.h.b16 %v622
      %v774 = vunpack.c.l.b16 %v623
      %v775 = vunpack.c.h.b16 %v623
      %v776 = vunpack.c.l.b16 %v624
      %v777 = vunpack.c.h.b16 %v624
      %v778 = vunpack.c.l.b16 %v625
      %v779 = vunpack.c.h.b16 %v625
      %v780 = vunpack.c.l.b16 %v626
      %v781 = vunpack.c.h.b16 %v626
      %v782 = vunpack.c.l.b16 %v627
      %v783 = vunpack.c.h.b16 %v627
      %v784 = vunpack.c.l.b16 %v628
      %v785 = vunpack.c.h.b16 %v628
      %v786 = vunpack.c.l.b16 %v629
      %v787 = vunpack.c.h.b16 %v629
      %v788 = vunpack.c.l.b16 %v630
      %v789 = vunpack.c.h.b16 %v630
      %v790 = vunpack.c.l.b16 %v631
      %v791 = vunpack.c.h.b16 %v631
      %v792 = vunpack.c.l.b16 %v632
      %v793 = vunpack.c.h.b16 %v632
      %v794 = vunpack.c.l.b16 %v633
      %v795 = vunpack.c.h.b16 %v633
      %v796 = vunpack.c.l.b16 %v634
      %v797 = vunpack.c.h.b16 %v634
      %v798 = vunpack.c.l.b16 %v635
      %v799 = vunpack.c.h.b16 %v635
      %v800 = vunpack.c.l.b16 %v636
      %v801 = vunpack.c.h.b16 %v636
      %v802 = vunpack.c.l.b16 %v637
      %v803 = vunpack.c.h.b16 %v637
      %v804 = vunpack.c.l.b16 %v638
      %v805 = vunpack.c.h.b16 %v638
      %v806 = vunpack.c.l.b16 %v639
      %v807 = vunpack.c.h.b16 %v639
      %v808 = vunpack.c.l.b16 %v640
      %v809 = vunpack.c.h.b16 %v640
      %v810 = vunpack.c.l.b16 %v641
      %v811 = vunpack.c.h.b16 %v641
      %v812 = vunpack.c.l.b16 %v642
      %v813 = vunpack.c.h.b16 %v642
      %v814 = vunpack.c.l.b16 %v643
      %v815 = vunpack.c.h.b16 %v643
      %v816 = vunpack.c.l.b16 %v644
      %v817 = vunpack.c.h.b16 %v644
      %v818 = vunpack.c.l.b16 %v645
      %v819 = vunpack.c.h.b16 %v645
      %v820 = vunpack.c.l.b16 %v646
      %v821 = vunpack.c.h.b16 %v646
      %v822 = vunpack.c.l.b16 %v647
      %v823 = vunpack.c.h.b16 %v647
      %v824 = vunpack.c.l.b16 %v648
      %v825 = vunpack.c.h.b16 %v648
      %v826 = vunpack.c.l.b16 %v649
      %v827 = vunpack.c.h.b16 %v649
      %v828 = vunpack.c.l.b16 %v650
      %v829 = vunpack.c.h.b16 %v650
      %v830 = vunpack.c.l.b16 %v651
      %v831 = vunpack.c.h.b16 %v651
      %v832 = vunpack.c.l.b16 %v652
      %v833 = vunpack.c.h.b16 %v652
      %v834 = vunpack.c.l.b16 %v653
      %v835 = vunpack.c.h.b16 %v653
      %v836 = vunpack.c.l.b16 %v654
      %v837 = vunpack.c.h.b16 %v654
      %v838 = vunpack.c.l.b16 %v655
      %v839 = vunpack.c.h.b16 %v655
      %v840 = vunpack.c.l.b16 %v656
      %v841 = vunpack.c.h.b16 %v656
      %v842 = vunpack.c.l.b16 %v657
      %v843 = vunpack.c.h.b16 %v657
      %v844 = vunpack.c.l.b16 %v658
      %v845 = vunpack.c.h.b16 %v658
      %v846 = vunpack.c.l.b16 %v659
      %v847 = vunpack.c.h.b16 %v659
      %v848 = vunpack.c.l.b16 %v660
      %v849 = vunpack.c.h.b16 %v660
      %v850 = vunpack.c.l.b16 %v661
      %v851 = vunpack.c.h.b16 %v661
      %v852 = vunpack.c.l.b16 %v662
      %v853 = vunpack.c.h.b16 %v662
      %v854 = vunpack.c.l.b16 %v663
      %v855 = vunpack.c.h.b16 %v663
      %v856 = vpack.c.b16 %v732, %v728
      %v857 = vpack.c.b16 %v733, %v729
      %v858 = vpack.c.b16 %v734, %v730
      %v859 = vpack.c.b16 %v735, %v731
      %v860 = vpack.c.b16 %v740, %v736
      %v861 = vpack.c.b16 %v741, %v737
      %v862 = vpack.c.b16 %v742, %v738
      %v863 = vpack.c.b16 %v743, %v739
      %v864 = vpack.c.b16 %v748, %v744
      %v865 = vpack.c.b16 %v749, %v745
      %v866 = vpack.c.b16 %v750, %v746
      %v867 = vpack.c.b16 %v751, %v747
      %v868 = vpack.c.b16 %v756, %v752
      %v869 = vpack.c.b16 %v757, %v753
      %v870 = vpack.c.b16 %v758, %v754
      %v871 = vpack.c.b16 %v759, %v755
      %v872 = vpack.c.b16 %v764, %v760
      %v873 = vpack.c.b16 %v765, %v761
      %v874 = vpack.c.b16 %v766, %v762
      %v875 = vpack.c.b16 %v767, %v763
      %v876 = vpack.c.b16 %v772, %v768
      %v877 = vpack.c.b16 %v773, %v769
      %v878 = vpack.c.b16 %v774, %v770
      %v879 = vpack.c.b16 %v775, %v771
      %v880 = vpack.c.b16 %v780, %v776
      %v881 = vpack.c.b16 %v781, %v777
      %v882 = vpack.c.b16 %v782, %v778
      %v883 = vpack.c.b16 %v783, %v779
      %v884 = vpack.c.b16 %v788, %v784
      %v885 = vpack.c.b16 %v789, %v785
      %v886 = vpack.c.b16 %v790, %v786
      %v887 = vpack.c.b16 %v791, %v787
      %v888 = vpack.c.b16 %v796, %v792
      %v889 = vpack.c.b16 %v797, %v793
      %v890 = vpack.c.b16 %v798, %v794
      %v891 = vpack.c.b16 %v799, %v795
      %v892 = vpack.c.b16 %v804, %v800
      %v893 = vpack.c.b16 %v805, %v801
      %v894 = vpack.c.b16 %v806, %v802
      %v895 = vpack.c.b16 %v807, %v803
      %v896 = vpack.c.b16 %v812, %v808
      %v897 = vpack.c.b16 %v813, %v809
      %v898 = vpack.c.b16 %v814, %v810
      %v899 = vpack.c.b16 %v815, %v811
      %v900 = vpack.c.b16 %v820, %v816
      %v901 = vpack.c.b16 %v821, %v817
      %v902 = vpack.c.b16 %v822, %v818
      %v903 = vpack.c.b16 %v823, %v819
      %v904 = vpack.c.b16 %v828, %v824
      %v905 = vpack.c.b16 %v829, %v825
      %v906 = vpack.c.b16 %v830, %v826
      %v907 = vpack.c.b16 %v831, %v827
      %v908 = vpack.c.b16 %v836, %v832
      %v909 = vpack.c.b16 %v837, %v833
      %v910 = vpack.c.b16 %v838, %v834
      %v911 = vpack.c.b16 %v839, %v835
      %v912 = vpack.c.b16 %v844, %v840
      %v913 = vpack.c.b16 %v845, %v841
      %v914 = vpack.c.b16 %v846, %v842
      %v915 = vpack.c.b16 %v847, %v843
      %v916 = vpack.c.b16 %v852, %v848
      %v917 = vpack.c.b16 %v853, %v849
      %v918 = vpack.c.b16 %v854, %v850
      %v919 = vpack.c.b16 %v855, %v851
      %984 = vmatprep.subr.bf16.mxu0 %v857
      %985 = vmatpush1.bf16.msra.mxu0 %v856
      %986 = vmatprep.subr.bf16.mxu0 %v861
      %987 = vmatpush1.bf16.msra.mxu0 %v860
      %988 = vmatprep.subr.bf16.mxu0 %v865
      %989 = vmatpush1.bf16.msra.mxu0 %v864
      %990 = vmatprep.subr.bf16.mxu0 %v869
      %991 = vmatpush1.bf16.msra.mxu0 %v868
      %992 = vmatprep.subr.bf16.mxu0 %v873
      %993 = vmatpush1.bf16.msra.mxu0 %v872
      %994 = vmatprep.subr.bf16.mxu0 %v877
      %995 = vmatpush1.bf16.msra.mxu0 %v876
      %996 = vmatprep.subr.bf16.mxu0 %v881
      %997 = vmatpush1.bf16.msra.mxu0 %v880
      %998 = vmatprep.subr.bf16.mxu0 %v885
      %999 = vmatpush1.bf16.msra.mxu0 %v884
      %1000 = vmatprep.subr.bf16.mxu0 %v889
      %1001 = vmatpush1.bf16.msra.mxu0 %v888
      %1002 = vmatprep.subr.bf16.mxu0 %v893
      %1003 = vmatpush1.bf16.msra.mxu0 %v892
      %1004 = vmatprep.subr.bf16.mxu0 %v897
      %1005 = vmatpush1.bf16.msra.mxu0 %v896
      %1006 = vmatprep.subr.bf16.mxu0 %v901
      %1007 = vmatpush1.bf16.msra.mxu0 %v900
      %1008 = vmatprep.subr.bf16.mxu0 %v905
      %1009 = vmatpush1.bf16.msra.mxu0 %v904
      %1010 = vmatprep.subr.bf16.mxu0 %v909
      %1011 = vmatpush1.bf16.msra.mxu0 %v908
      %1012 = vmatprep.subr.bf16.mxu0 %v913
      %1013 = vmatpush1.bf16.msra.mxu0 %v912
      %1014 = vmatprep.subr.bf16.mxu0 %v917
      %1015 = vmatpush1.bf16.msra.mxu0 %v916
      %1016 = vmatprep.mubr.bf16.mxu0 %v529
      %1017 = vmatmul.mubr.bf16.gmra.mrb[0].mxu0 %v522
      %v1018 = vpop.f32.mrb[0].mxu0
      %v1019 = vadd.f32 0.0, %v1018
      %v1020 = vpop.f32.mrb[0].mxu0
      %v1021 = vadd.f32 0.0, %v1020
      %v1022 = vpop.f32.mrb[0].mxu0
      %v1023 = vadd.f32 0.0, %v1022
      %v1024 = vpop.f32.mrb[0].mxu0
      %v1025 = vadd.f32 0.0, %v1024
      %1026 = vmatprep.mubr.bf16.mxu0 %v533
      %1027 = vmatmul.mubr.bf16.gmra.mrb[0].mxu0 %v525
      %v1028 = vpop.f32.mrb[0].mxu0
      %v1029 = vadd.f32 0.0, %v1028
      %v1030 = vpop.f32.mrb[0].mxu0
      %v1031 = vadd.f32 0.0, %v1030
      %v1032 = vpop.f32.mrb[0].mxu0
      %v1033 = vpop.f32.mrb[0].mxu0
      %1034 = vdwg.mxu0
      %1035 = vmatprep.subr.bf16.mxu0 %v859
      %1036 = vmatpush1.bf16.msra.mxu0 %v858
      %1037 = vmatprep.subr.bf16.mxu0 %v863
      %1038 = vmatpush1.bf16.msra.mxu0 %v862
      %1039 = vmatprep.subr.bf16.mxu0 %v867
      %1040 = vmatpush1.bf16.msra.mxu0 %v866
      %1041 = vmatprep.subr.bf16.mxu0 %v871
      %1042 = vmatpush1.bf16.msra.mxu0 %v870
      %1043 = vmatprep.subr.bf16.mxu0 %v875
      %1044 = vmatpush1.bf16.msra.mxu0 %v874
      %1045 = vmatprep.subr.bf16.mxu0 %v879
      %1046 = vmatpush1.bf16.msra.mxu0 %v878
      %1047 = vmatprep.subr.bf16.mxu0 %v883
      %1048 = vmatpush1.bf16.msra.mxu0 %v882
      %1049 = vmatprep.subr.bf16.mxu0 %v887
      %1050 = vmatpush1.bf16.msra.mxu0 %v886
      %1051 = vmatprep.subr.bf16.mxu0 %v891
      %1052 = vmatpush1.bf16.msra.mxu0 %v890
      %1053 = vmatprep.subr.bf16.mxu0 %v895
      %1054 = vmatpush1.bf16.msra.mxu0 %v894
      %1055 = vmatprep.subr.bf16.mxu0 %v899
      %1056 = vmatpush1.bf16.msra.mxu0 %v898
      %1057 = vmatprep.subr.bf16.mxu0 %v903
      %1058 = vmatpush1.bf16.msra.mxu0 %v902
      %1059 = vmatprep.subr.bf16.mxu0 %v907
      %1060 = vmatpush1.bf16.msra.mxu0 %v906
      %1061 = vmatprep.subr.bf16.mxu0 %v911
      %1062 = vmatpush1.bf16.msra.mxu0 %v910
      %1063 = vmatprep.subr.bf16.mxu0 %v915
      %1064 = vmatpush1.bf16.msra.mxu0 %v914
      %1065 = vmatprep.subr.bf16.mxu0 %v919
      %1066 = vmatpush1.bf16.msra.mxu0 %v918
      %1067 = vmatprep.mubr.bf16.mxu0 %v529
      %1068 = vmatmul.mubr.bf16.gmra.mrb[0].mxu0 %v522
      %v1069 = vpop.f32.mrb[0].mxu0
      %v1070 = vadd.f32 0.0, %v1069
      %v1071 = vpop.f32.mrb[0].mxu0
      %v1072 = vadd.f32 0.0, %v1071
      %v1073 = vpop.f32.mrb[0].mxu0
      %v1074 = vadd.f32 0.0, %v1073
      %v1075 = vpop.f32.mrb[0].mxu0
      %v1076 = vadd.f32 0.0, %v1075
      %1077 = vmatprep.mubr.bf16.mxu0 %v533
      %1078 = vmatmul.mubr.bf16.gmra.mrb[0].mxu0 %v525
      %v1079 = vpop.f32.mrb[0].mxu0
      %v1080 = vadd.f32 0.0, %v1079
      %v1081 = vpop.f32.mrb[0].mxu0
      %v1082 = vadd.f32 0.0, %v1081
      %v1083 = vpop.f32.mrb[0].mxu0
      %v1084 = vpop.f32.mrb[0].mxu0
      %1085 = vdwg.mxu0
      %1086 = vmatprep.subr.bf16.mxu0 %v857
      %1087 = vmatpush1.bf16.msra.mxu0 %v856
      %1088 = vmatprep.subr.bf16.mxu0 %v861
      %1089 = vmatpush1.bf16.msra.mxu0 %v860
      %1090 = vmatprep.subr.bf16.mxu0 %v865
      %1091 = vmatpush1.bf16.msra.mxu0 %v864
      %1092 = vmatprep.subr.bf16.mxu0 %v869
      %1093 = vmatpush1.bf16.msra.mxu0 %v868
      %1094 = vmatprep.subr.bf16.mxu0 %v873
      %1095 = vmatpush1.bf16.msra.mxu0 %v872
      %1096 = vmatprep.subr.bf16.mxu0 %v877
      %1097 = vmatpush1.bf16.msra.mxu0 %v876
      %1098 = vmatprep.subr.bf16.mxu0 %v881
      %1099 = vmatpush1.bf16.msra.mxu0 %v880
      %1100 = vmatprep.subr.bf16.mxu0 %v885
      %1101 = vmatpush1.bf16.msra.mxu0 %v884
      %1102 = vmatprep.subr.bf16.mxu0 %v889
      %1103 = vmatpush1.bf16.msra.mxu0 %v888
      %1104 = vmatprep.subr.bf16.mxu0 %v893
      %1105 = vmatpush1.bf16.msra.mxu0 %v892
      %1106 = vmatprep.subr.bf16.mxu0 %v897
      %1107 = vmatpush1.bf16.msra.mxu0 %v896
      %1108 = vmatprep.subr.bf16.mxu0 %v901
      %1109 = vmatpush1.bf16.msra.mxu0 %v900
      %1110 = vmatprep.subr.bf16.mxu0 %v905
      %1111 = vmatpush1.bf16.msra.mxu0 %v904
      %1112 = vmatprep.subr.bf16.mxu0 %v909
      %1113 = vmatpush1.bf16.msra.mxu0 %v908
      %1114 = vmatprep.subr.bf16.mxu0 %v913
      %1115 = vmatpush1.bf16.msra.mxu0 %v912
      %1116 = vmatprep.subr.bf16.mxu0 %v917
      %1117 = vmatpush1.bf16.msra.mxu0 %v916
      %1118 = vmatprep.mubr.bf16.mxu0 %v594
      %1119 = vmatmul.mubr.bf16.gmra.mrb[0].mxu0 %v587
      %v1120 = vpop.f32.mrb[0].mxu0
      %v1121 = vadd.f32 0.0, %v1120
      %v1122 = vpop.f32.mrb[0].mxu0
      %v1123 = vadd.f32 0.0, %v1122
      %v1124 = vpop.f32.mrb[0].mxu0
      %v1125 = vadd.f32 0.0, %v1124
      %v1126 = vpop.f32.mrb[0].mxu0
      %v1127 = vadd.f32 0.0, %v1126
      %1128 = vmatprep.mubr.bf16.mxu0 %v598
      %1129 = vmatmul.mubr.bf16.gmra.mrb[0].mxu0 %v590
      %v1130 = vpop.f32.mrb[0].mxu0
      %v1131 = vadd.f32 0.0, %v1130
      %v1132 = vpop.f32.mrb[0].mxu0
      %v1133 = vadd.f32 0.0, %v1132
      %v1134 = vpop.f32.mrb[0].mxu0
      %v1135 = vpop.f32.mrb[0].mxu0
      %1136 = vdwg.mxu0
      %1137 = vmatprep.subr.bf16.mxu0 %v859
      %1138 = vmatpush1.bf16.msra.mxu0 %v858
      %1139 = vmatprep.subr.bf16.mxu0 %v863
      %1140 = vmatpush1.bf16.msra.mxu0 %v862
      %1141 = vmatprep.subr.bf16.mxu0 %v867
      %1142 = vmatpush1.bf16.msra.mxu0 %v866
      %1143 = vmatprep.subr.bf16.mxu0 %v871
      %1144 = vmatpush1.bf16.msra.mxu0 %v870
      %1145 = vmatprep.subr.bf16.mxu0 %v875
      %1146 = vmatpush1.bf16.msra.mxu0 %v874
      %1147 = vmatprep.subr.bf16.mxu0 %v879
      %1148 = vmatpush1.bf16.msra.mxu0 %v878
      %1149 = vmatprep.subr.bf16.mxu0 %v883
      %1150 = vmatpush1.bf16.msra.mxu0 %v882
      %1151 = vmatprep.subr.bf16.mxu0 %v887
      %1152 = vmatpush1.bf16.msra.mxu0 %v886
      %1153 = vmatprep.subr.bf16.mxu0 %v891
      %1154 = vmatpush1.bf16.msra.mxu0 %v890
      %1155 = vmatprep.subr.bf16.mxu0 %v895
      %1156 = vmatpush1.bf16.msra.mxu0 %v894
      %1157 = vmatprep.subr.bf16.mxu0 %v899
      %1158 = vmatpush1.bf16.msra.mxu0 %v898
      %1159 = vmatprep.subr.bf16.mxu0 %v903
      %1160 = vmatpush1.bf16.msra.mxu0 %v902
      %1161 = vmatprep.subr.bf16.mxu0 %v907
      %1162 = vmatpush1.bf16.msra.mxu0 %v906
      %1163 = vmatprep.subr.bf16.mxu0 %v911
      %1164 = vmatpush1.bf16.msra.mxu0 %v910
      %1165 = vmatprep.subr.bf16.mxu0 %v915
      %1166 = vmatpush1.bf16.msra.mxu0 %v914
      %1167 = vmatprep.subr.bf16.mxu0 %v919
      %1168 = vmatpush1.bf16.msra.mxu0 %v918
      %1169 = vmatprep.mubr.bf16.mxu0 %v594
      %1170 = vmatmul.mubr.bf16.gmra.mrb[0].mxu0 %v587
      %v1171 = vpop.f32.mrb[0].mxu0
      %v1172 = vadd.f32 0.0, %v1171
      %v1173 = vpop.f32.mrb[0].mxu0
      %v1174 = vadd.f32 0.0, %v1173
      %v1175 = vpop.f32.mrb[0].mxu0
      %v1176 = vadd.f32 0.0, %v1175
      %v1177 = vpop.f32.mrb[0].mxu0
      %v1178 = vadd.f32 0.0, %v1177
      %1179 = vmatprep.mubr.bf16.mxu0 %v598
      %1180 = vmatmul.mubr.bf16.gmra.mrb[0].mxu0 %v590
      %v1181 = vpop.f32.mrb[0].mxu0
      %v1182 = vadd.f32 0.0, %v1181
      %v1183 = vpop.f32.mrb[0].mxu0
      %v1184 = vadd.f32 0.0, %v1183
      %v1185 = vpop.f32.mrb[0].mxu0
      %v1186 = vpop.f32.mrb[0].mxu0
      %1187 = vdwg.mxu0
      %v1188 = vmul.f32 %v1019, %v1019
      %v1189 = vmul.f32 %v1021, %v1021
      %v1190 = vmul.f32 %v1023, %v1023
      %v1191 = vmul.f32 %v1025, %v1025
      %v1192 = vmul.f32 %v1029, %v1029
      %v1193 = vmul.f32 %v1031, %v1031
      %v1194 = vmul.f32 %v1070, %v1070
      %v1195 = vmul.f32 %v1072, %v1072
      %v1196 = vmul.f32 %v1074, %v1074
      %v1197 = vmul.f32 %v1076, %v1076
      %v1198 = vmul.f32 %v1080, %v1080
      %v1199 = vmul.f32 %v1082, %v1082
      %v1200 = vadd.f32 %v1188, %v1194
      %v1201 = vadd.f32 %v1189, %v1195
      %v1202 = vadd.f32 %v1190, %v1196
      %v1203 = vadd.f32 %v1191, %v1197
      %v1204 = vadd.f32 %v1192, %v1198
      %v1205 = vadd.f32 %v1193, %v1199
      %v1206 = vmul.f32 %v1121, %v1121
      %v1207 = vmul.f32 %v1123, %v1123
      %v1208 = vmul.f32 %v1125, %v1125
      %v1209 = vmul.f32 %v1127, %v1127
      %v1210 = vmul.f32 %v1131, %v1131
      %v1211 = vmul.f32 %v1133, %v1133
      %v1212 = vmul.f32 %v1172, %v1172
      %v1213 = vmul.f32 %v1174, %v1174
      %v1214 = vmul.f32 %v1176, %v1176
      %v1215 = vmul.f32 %v1178, %v1178
      %v1216 = vmul.f32 %v1182, %v1182
      %v1217 = vmul.f32 %v1184, %v1184
      %v1218 = vadd.f32 %v1206, %v1212
      %v1219 = vadd.f32 %v1207, %v1213
      %v1220 = vadd.f32 %v1208, %v1214
      %v1221 = vadd.f32 %v1209, %v1215
      %v1222 = vadd.f32 %v1210, %v1216
      %v1223 = vadd.f32 %v1211, %v1217
      %v1224 = vpack.c.bf16 %v1202, %v1200
      %v1225 = vpack.c.bf16 %v1203, %v1201
      %v1226 = vpack.c.bf16 %v1204, %v1204
      %v1227 = vpack.c.bf16 %v1205, %v1205
      %v1228 = vrsqrt.bf16.pop %v1224
      %v1229 = vmul.bf16 %v1224, %v1228
      %vm1231 = vcmp.eq.bf16.partialorder %v1224, 2139127680
      %v1232 = vsel %vm1231, %v1224, %v1229
      %vm1234 = vcmp.eq.bf16.partialorder %v1224, 0
      %v1235 = vand.u32 2147450879, 0
      %v1236 = vand.u32 %v1224, 2147516416
      %v1237 = vor.u32 %v1235, %v1236
      %v1238 = vsel %vm1234, %v1237, %v1232
      %v1239 = vrsqrt.bf16.pop %v1225
      %v1240 = vmul.bf16 %v1225, %v1239
      %vm1242 = vcmp.eq.bf16.partialorder %v1225, 2139127680
      %v1243 = vsel %vm1242, %v1225, %v1240
      %vm1245 = vcmp.eq.bf16.partialorder %v1225, 0
      %v1246 = vand.u32 2147450879, 0
      %v1247 = vand.u32 %v1225, 2147516416
      %v1248 = vor.u32 %v1246, %v1247
      %v1249 = vsel %vm1245, %v1248, %v1243
      %v1250 = vrsqrt.bf16.pop %v1226
      %v1251 = vmul.bf16 %v1226, %v1250
      %vm1253 = vcmp.eq.bf16.partialorder %v1226, 2139127680
      %v1254 = vsel %vm1253, %v1226, %v1251
      %vm1256 = vcmp.eq.bf16.partialorder %v1226, 0
      %v1257 = vand.u32 2147450879, 0
      %v1258 = vand.u32 %v1226, 2147516416
      %v1259 = vor.u32 %v1257, %v1258
      %v1260 = vsel %vm1256, %v1259, %v1254
      %v1261 = vrsqrt.bf16.pop %v1227
      %v1262 = vmul.bf16 %v1227, %v1261
      %vm1264 = vcmp.eq.bf16.partialorder %v1227, 2139127680
      %v1265 = vsel %vm1264, %v1227, %v1262
      %vm1267 = vcmp.eq.bf16.partialorder %v1227, 0
      %v1268 = vand.u32 2147450879, 0
      %v1269 = vand.u32 %v1227, 2147516416
      %v1270 = vor.u32 %v1268, %v1269
      %v1271 = vsel %vm1267, %v1270, %v1265
      %v1272 = vpack.c.bf16 %v1220, %v1218
      %v1273 = vpack.c.bf16 %v1221, %v1219
      %v1274 = vpack.c.bf16 %v1222, %v1222
      %v1275 = vpack.c.bf16 %v1223, %v1223
      %v1276 = vrsqrt.bf16.pop %v1272
      %v1277 = vmul.bf16 %v1272, %v1276
      %vm1279 = vcmp.eq.bf16.partialorder %v1272, 2139127680
      %v1280 = vsel %vm1279, %v1272, %v1277
      %vm1282 = vcmp.eq.bf16.partialorder %v1272, 0
      %v1283 = vand.u32 2147450879, 0
      %v1284 = vand.u32 %v1272, 2147516416
      %v1285 = vor.u32 %v1283, %v1284
      %v1286 = vsel %vm1282, %v1285, %v1280
      %v1287 = vrsqrt.bf16.pop %v1273
      %v1288 = vmul.bf16 %v1273, %v1287
      %vm1290 = vcmp.eq.bf16.partialorder %v1273, 2139127680
      %v1291 = vsel %vm1290, %v1273, %v1288
      %vm1293 = vcmp.eq.bf16.partialorder %v1273, 0
      %v1294 = vand.u32 2147450879, 0
      %v1295 = vand.u32 %v1273, 2147516416
      %v1296 = vor.u32 %v1294, %v1295
      %v1297 = vsel %vm1293, %v1296, %v1291
      %v1298 = vrsqrt.bf16.pop %v1274
      %v1299 = vmul.bf16 %v1274, %v1298
      %vm1301 = vcmp.eq.bf16.partialorder %v1274, 2139127680
      %v1302 = vsel %vm1301, %v1274, %v1299
      %vm1304 = vcmp.eq.bf16.partialorder %v1274, 0
      %v1305 = vand.u32 2147450879, 0
      %v1306 = vand.u32 %v1274, 2147516416
      %v1307 = vor.u32 %v1305, %v1306
      %v1308 = vsel %vm1304, %v1307, %v1302
      %v1309 = vrsqrt.bf16.pop %v1275
      %v1310 = vmul.bf16 %v1275, %v1309
      %vm1312 = vcmp.eq.bf16.partialorder %v1275, 2139127680
      %v1313 = vsel %vm1312, %v1275, %v1310
      %vm1315 = vcmp.eq.bf16.partialorder %v1275, 0
      %v1316 = vand.u32 2147450879, 0
      %v1317 = vand.u32 %v1275, 2147516416
      %v1318 = vor.u32 %v1316, %v1317
      %v1319 = vsel %vm1315, %v1318, %v1313
      %v1320 = vld [vmem:[%s5] sm:$0xf]
      %v1321 = vld [vmem:[%s5 + $0x4] sm:$0xf]
      %v1322 = vld [vmem:[%s5 + $0x8] sm:$0xf]
      %v1323 = vld [vmem:[%s5 + $0xc] sm:$0xf]
      %v1324 = vld [vmem:[%s5 + $0x10] sm:$0xf]
      %v1325 = vld [vmem:[%s5 + $0x14] sm:$0xf]
      %v1326 = vld [vmem:[%s5 + $0x18] sm:$0xf]
      %v1327 = vld [vmem:[%s5 + $0x1c] sm:$0xf]
      %v1328 = vld [vmem:[%s5 + $0x20] sm:$0xf]
      %v1329 = vld [vmem:[%s5 + $0x24] sm:$0xf]
      %v1330 = vld [vmem:[%s5 + $0x28] sm:$0xf]
      %v1331 = vld [vmem:[%s5 + $0x2c] sm:$0xf]
      %v1332 = vld [vmem:[%s5 + $0x30] sm:$0xf]
      %v1333 = vld [vmem:[%s5 + $0x34] sm:$0xf]
      %v1334 = vld [vmem:[%s5 + $0x38] sm:$0xf]
      %v1335 = vld [vmem:[%s5 + $0x3c] sm:$0xf]
      %v1336 = vld [vmem:[%s5 + $0x40] sm:$0xf]
      %v1337 = vld [vmem:[%s5 + $0x44] sm:$0xf]
      %v1338 = vld [vmem:[%s5 + $0x48] sm:$0xf]
      %v1339 = vld [vmem:[%s5 + $0x4c] sm:$0xf]
      %v1340 = vld [vmem:[%s5 + $0x50] sm:$0xf]
      %v1341 = vld [vmem:[%s5 + $0x54] sm:$0xf]
      %v1342 = vld [vmem:[%s5 + $0x58] sm:$0xf]
      %v1343 = vld [vmem:[%s5 + $0x5c] sm:$0xf]
      %v1344 = vld [vmem:[%s5 + $0x60] sm:$0xf]
      %v1345 = vld [vmem:[%s5 + $0x64] sm:$0xf]
      %v1346 = vld [vmem:[%s5 + $0x68] sm:$0xf]
      %v1347 = vld [vmem:[%s5 + $0x6c] sm:$0xf]
      %v1348 = vld [vmem:[%s5 + $0x70] sm:$0xf]
      %v1349 = vld [vmem:[%s5 + $0x74] sm:$0xf]
      %v1350 = vld [vmem:[%s5 + $0x78] sm:$0xf]
      %v1351 = vld [vmem:[%s5 + $0x7c] sm:$0xf]
      %v1384 = vunpack.c.l.b16 %v1320
      %v1385 = vunpack.c.l.b16 %v1321
      %v1386 = vunpack.c.l.b16 %v1322
      %v1387 = vunpack.c.l.b16 %v1323
      %v1388 = vunpack.c.l.b16 %v1324
      %v1389 = vunpack.c.l.b16 %v1325
      %v1390 = vunpack.c.l.b16 %v1326
      %v1391 = vunpack.c.l.b16 %v1327
      %v1392 = vunpack.c.l.b16 %v1328
      %v1393 = vunpack.c.l.b16 %v1329
      %v1394 = vunpack.c.l.b16 %v1330
      %v1395 = vunpack.c.l.b16 %v1331
      %v1396 = vunpack.c.l.b16 %v1332
      %v1397 = vunpack.c.l.b16 %v1333
      %v1398 = vunpack.c.l.b16 %v1334
      %v1399 = vunpack.c.l.b16 %v1335
      %v1400 = vunpack.c.l.b16 %v1336
      %v1401 = vunpack.c.l.b16 %v1337
      %v1402 = vunpack.c.l.b16 %v1338
      %v1403 = vunpack.c.l.b16 %v1339
      %v1404 = vunpack.c.l.b16 %v1340
      %v1405 = vunpack.c.l.b16 %v1341
      %v1406 = vunpack.c.l.b16 %v1342
      %v1407 = vunpack.c.l.b16 %v1343
      %v1408 = vunpack.c.l.b16 %v1344
      %v1409 = vunpack.c.l.b16 %v1345
      %v1410 = vunpack.c.l.b16 %v1346
      %v1411 = vunpack.c.l.b16 %v1347
      %v1412 = vunpack.c.l.b16 %v1348
      %v1413 = vunpack.c.l.b16 %v1349
      %v1414 = vunpack.c.l.b16 %v1350
      %v1415 = vunpack.c.l.b16 %v1351
      %v1416 = vpack.c.b16 %v1385, %v1384
      %v1417 = vpack.c.b16 %v1387, %v1386
      %v1418 = vpack.c.b16 %v1389, %v1388
      %v1419 = vpack.c.b16 %v1391, %v1390
      %v1420 = vpack.c.b16 %v1393, %v1392
      %v1421 = vpack.c.b16 %v1395, %v1394
      %v1422 = vpack.c.b16 %v1397, %v1396
      %v1423 = vpack.c.b16 %v1399, %v1398
      %v1424 = vpack.c.b16 %v1401, %v1400
      %v1425 = vpack.c.b16 %v1403, %v1402
      %v1426 = vpack.c.b16 %v1405, %v1404
      %v1427 = vpack.c.b16 %v1407, %v1406
      %v1428 = vpack.c.b16 %v1409, %v1408
      %v1429 = vpack.c.b16 %v1411, %v1410
      %v1430 = vpack.c.b16 %v1413, %v1412
      %v1431 = vpack.c.b16 %v1415, %v1414
      %1448 = vmatprep.subr.bf16.mxu0 0
      %1449 = vmatpush1.bf16.msra.mxu0 %v1416
      %1450 = vmatprep.subr.bf16.mxu0 0
      %1451 = vmatpush1.bf16.msra.mxu0 %v1417
      %1452 = vmatprep.subr.bf16.mxu0 0
      %1453 = vmatpush1.bf16.msra.mxu0 %v1418
      %1454 = vmatprep.subr.bf16.mxu0 0
      %1455 = vmatpush1.bf16.msra.mxu0 %v1419
      %1456 = vmatprep.subr.bf16.mxu0 0
      %1457 = vmatpush1.bf16.msra.mxu0 %v1420
      %1458 = vmatprep.subr.bf16.mxu0 0
      %1459 = vmatpush1.bf16.msra.mxu0 %v1421
      %1460 = vmatprep.subr.bf16.mxu0 0
      %1461 = vmatpush1.bf16.msra.mxu0 %v1422
      %1462 = vmatprep.subr.bf16.mxu0 0
      %1463 = vmatpush1.bf16.msra.mxu0 %v1423
      %1464 = vmatprep.subr.bf16.mxu0 0
      %1465 = vmatpush1.bf16.msra.mxu0 %v1424
      %1466 = vmatprep.subr.bf16.mxu0 0
      %1467 = vmatpush1.bf16.msra.mxu0 %v1425
      %1468 = vmatprep.subr.bf16.mxu0 0
      %1469 = vmatpush1.bf16.msra.mxu0 %v1426
      %1470 = vmatprep.subr.bf16.mxu0 0
      %1471 = vmatpush1.bf16.msra.mxu0 %v1427
      %1472 = vmatprep.subr.bf16.mxu0 0
      %1473 = vmatpush1.bf16.msra.mxu0 %v1428
      %1474 = vmatprep.subr.bf16.mxu0 0
      %1475 = vmatpush1.bf16.msra.mxu0 %v1429
      %1476 = vmatprep.subr.bf16.mxu0 0
      %1477 = vmatpush1.bf16.msra.mxu0 %v1430
      %1478 = vmatprep.subr.bf16.mxu0 0
      %1479 = vmatpush1.bf16.msra.mxu0 %v1431
      %1480 = vmatprep.mubr.bf16.mxu0 %v1249
      %1481 = vmatmul.mubr.bf16.gmra.mrb[0].mxu0 %v1238
      %v1482 = vpop.f32.mrb[0].mxu0
      %v1483 = vadd.f32 0.0, %v1482
      %v1484 = vpop.f32.mrb[0].mxu0
      %v1485 = vpop.f32.mrb[0].mxu0
      %v1486 = vadd.f32 0.0, %v1485
      %v1487 = vpop.f32.mrb[0].mxu0
      %1488 = vmatprep.mubr.bf16.mxu0 %v1271
      %1489 = vmatmul.mubr.bf16.gmra.mrb[0].mxu0 %v1260
      %v1490 = vpop.f32.mrb[0].mxu0
      %v1491 = vadd.f32 0.0, %v1490
      %v1492 = vpop.f32.mrb[0].mxu0
      %v1493 = vpop.f32.mrb[0].mxu0
      %v1494 = vpop.f32.mrb[0].mxu0
      %1495 = vdwg.mxu0
      %1496 = vmatprep.subr.bf16.mxu0 0
      %1497 = vmatpush1.bf16.msra.mxu0 %v1416
      %1498 = vmatprep.subr.bf16.mxu0 0
      %1499 = vmatpush1.bf16.msra.mxu0 %v1417
      %1500 = vmatprep.subr.bf16.mxu0 0
      %1501 = vmatpush1.bf16.msra.mxu0 %v1418
      %1502 = vmatprep.subr.bf16.mxu0 0
      %1503 = vmatpush1.bf16.msra.mxu0 %v1419
      %1504 = vmatprep.subr.bf16.mxu0 0
      %1505 = vmatpush1.bf16.msra.mxu0 %v1420
      %1506 = vmatprep.subr.bf16.mxu0 0
      %1507 = vmatpush1.bf16.msra.mxu0 %v1421
      %1508 = vmatprep.subr.bf16.mxu0 0
      %1509 = vmatpush1.bf16.msra.mxu0 %v1422
      %1510 = vmatprep.subr.bf16.mxu0 0
      %1511 = vmatpush1.bf16.msra.mxu0 %v1423
      %1512 = vmatprep.subr.bf16.mxu0 0
      %1513 = vmatpush1.bf16.msra.mxu0 %v1424
      %1514 = vmatprep.subr.bf16.mxu0 0
      %1515 = vmatpush1.bf16.msra.mxu0 %v1425
      %1516 = vmatprep.subr.bf16.mxu0 0
      %1517 = vmatpush1.bf16.msra.mxu0 %v1426
      %1518 = vmatprep.subr.bf16.mxu0 0
      %1519 = vmatpush1.bf16.msra.mxu0 %v1427
      %1520 = vmatprep.subr.bf16.mxu0 0
      %1521 = vmatpush1.bf16.msra.mxu0 %v1428
      %1522 = vmatprep.subr.bf16.mxu0 0
      %1523 = vmatpush1.bf16.msra.mxu0 %v1429
      %1524 = vmatprep.subr.bf16.mxu0 0
      %1525 = vmatpush1.bf16.msra.mxu0 %v1430
      %1526 = vmatprep.subr.bf16.mxu0 0
      %1527 = vmatpush1.bf16.msra.mxu0 %v1431
      %1528 = vmatprep.mubr.bf16.mxu0 %v1297
      %1529 = vmatmul.mubr.bf16.gmra.mrb[0].mxu0 %v1286
      %v1530 = vpop.f32.mrb[0].mxu0
      %v1531 = vadd.f32 0.0, %v1530
      %v1532 = vpop.f32.mrb[0].mxu0
      %v1533 = vpop.f32.mrb[0].mxu0
      %v1534 = vadd.f32 0.0, %v1533
      %v1535 = vpop.f32.mrb[0].mxu0
      %1536 = vmatprep.mubr.bf16.mxu0 %v1319
      %1537 = vmatmul.mubr.bf16.gmra.mrb[0].mxu0 %v1308
      %v1538 = vpop.f32.mrb[0].mxu0
      %v1539 = vadd.f32 0.0, %v1538
      %v1540 = vpop.f32.mrb[0].mxu0
      %v1541 = vpop.f32.mrb[0].mxu0
      %v1542 = vpop.f32.mrb[0].mxu0
      %1543 = vdwg.mxu0
      %s1544 = smul.u32 %s24, 24
      %v1545 = vlaneseq
      %v1546 = vshrl.u32 %v1545, 7
      %v1547 = vadd.s32 %v1546, 8
      %v1548 = vadd.s32 %v1546, 16
      %v1549 = vstv %s1544
      %v1550 = vadd.s32 %v1549, %v1546
      %v1551 = vadd.s32 %v1549, %v1547
      %v1552 = vadd.s32 %v1549, %v1548
      %vm1553 = vcmp.lt.s32.totalorder %v1550, 17
      %vm1554 = vcmp.lt.s32.totalorder %v1551, 17
      %vm1555 = vcmp.lt.s32.totalorder %v1552, 17
      %v1556 = vsub.f32 %v1483, %v1531
      %v1557 = vsub.f32 %v1486, %v1534
      %v1558 = vsub.f32 %v1491, %v1539
      %v1559 = vand.u32 2147483647, %v1556
      %v1560 = vand.u32 2147483647, %v1557
      %v1561 = vand.u32 2147483647, %v1558
      %v1562 = vsel %vm1553, %v1559, 0.0
      %v1563 = vsel %vm1554, %v1560, 0.0
      %v1564 = vsel %vm1555, %v1561, 0.0
      %v1565 = vmax.f32 %v1483, 1e-05
      %v1566 = vmax.f32 %v1486, 1e-05
      %v1567 = vmax.f32 %v1491, 1e-05
      %v1568 = vlog2.pop %v1565
      %v1569 = vmul.f32 %v1568, 0.6931472
      %v1570 = vlog2.pop %v1566
      %v1571 = vmul.f32 %v1570, 0.6931472
      %v1572 = vlog2.pop %v1567
      %v1573 = vmul.f32 %v1572, 0.6931472
      %v1574 = vmul.f32 %v1569, 0.4342945
      %v1575 = vmul.f32 %v1571, 0.4342945
      %v1576 = vmul.f32 %v1573, 0.4342945
      %v1577 = vmul.f32 %v1574, 2.0
      %v1578 = vmul.f32 %v1575, 2.0
      %v1579 = vmul.f32 %v1576, 2.0
      %v1580 = vmax.f32 %v1531, 1e-05
      %v1581 = vmax.f32 %v1534, 1e-05
      %v1582 = vmax.f32 %v1539, 1e-05
      %v1583 = vlog2.pop %v1580
      %v1584 = vmul.f32 %v1583, 0.6931472
      %v1585 = vlog2.pop %v1581
      %v1586 = vmul.f32 %v1585, 0.6931472
      %v1587 = vlog2.pop %v1582
      %v1588 = vmul.f32 %v1587, 0.6931472
      %v1589 = vmul.f32 %v1584, 0.4342945
      %v1590 = vmul.f32 %v1586, 0.4342945
      %v1591 = vmul.f32 %v1588, 0.4342945
      %v1592 = vmul.f32 %v1589, 2.0
      %v1593 = vmul.f32 %v1590, 2.0
      %v1594 = vmul.f32 %v1591, 2.0
      %v1595 = vsub.f32 %v1577, %v1592
      %v1596 = vsub.f32 %v1578, %v1593
      %v1597 = vsub.f32 %v1579, %v1594
      %v1598 = vand.u32 2147483647, %v1595
      %v1599 = vand.u32 2147483647, %v1596
      %v1600 = vand.u32 2147483647, %v1597
      %v1601 = vsel %vm1553, %v1598, 0.0
      %v1602 = vsel %vm1554, %v1599, 0.0
      %v1603 = vsel %vm1555, %v1600, 0.0
      %v1604 = vld [vmem:[%s6] sm:$0xff]
      %v1605 = vadd.f32 %v1562, %v1563
      %v1606 = vadd.f32 %v1605, %v1564
      %v1607 = vadd.f32 %v1604, %v1606
      %1608 = vst [vmem:[%s6] sm:$0xff] %v1607
      %v1609 = vld [vmem:[%s7] sm:$0xff]
      %v1610 = vadd.f32 %v1601, %v1602
      %v1611 = vadd.f32 %v1610, %v1603
      %v1612 = vadd.f32 %v1609, %v1611
      %1613 = vst [vmem:[%s7] sm:$0xff] %v1612
      // Predicated region
      $region49: #{_lambda_.2} parent=43 // pred_check
        %p1614 = pneg %p206
      $region50: #{_lambda_.2} parent=43 // pred_check_branch
        %1616 = sbr.rel (%p1614) target = $region52
      $region51: #{_lambda_.2} parent=43 // pred_region
        _
      $region52: #{_lambda_.2} parent=43 // pred_fallthru
        _
      // Predicated region
      $region53: #{_lambda_.2} parent=43 // pred_check
        %p1617 = pneg %p227
      $region54: #{_lambda_.2} parent=43 // pred_check_branch
        %1619 = sbr.rel (%p1617) target = $region56
      $region55: #{_lambda_.2} parent=43 // pred_region
        _
      $region56: #{_lambda_.2} parent=43 // pred_fallthru
        _
      // Predicated region
      $region57: #{_lambda_.2} parent=43 // pred_check
        %p1620 = pneg %p206
      $region58: #{_lambda_.2} parent=43 // pred_check_branch
        %1622 = sbr.rel (%p1620) target = $region60
      $region59: #{_lambda_.2} parent=43 // pred_region
        _
      $region60: #{_lambda_.2} parent=43 // pred_fallthru
        _
      // Predicated region
      $region61: #{_lambda_.2} parent=43 // pred_check
        %p1623 = pneg %p227
      $region62: #{_lambda_.2} parent=43 // pred_check_branch
        %1625 = sbr.rel (%p1623) target = $region64
      $region63: #{_lambda_.2} parent=43 // pred_region
        _
      $region64: #{_lambda_.2} parent=43 // pred_fallthru
        _
    $region44: #{_lambda_.2} parent=5 // pred_fallthru
      _
    %p1626 = scmp.le.s32.totalorder 2, %s14
    // Predicated region
    $region65: #{_lambda_.2} parent=5 // pred_check
      %p1627 = pneg %p1626
    $region66: #{_lambda_.2} parent=5 // pred_check_branch
      %1629 = sbr.rel (%p1627) target = $region68
    $region67: #{_lambda_.2} parent=5 // pred_region
      %s1630 = ssub.s32 %s14, 2
    $region68: #{_lambda_.2} parent=5 // pred_fallthru
      _
  $region6: #{_lambda_.2} parent=0 // loop_footer
    %s18 = sadd.s32 1, %s14
  $region7: #{_lambda_.2} parent=0 // loop_footer_branch
    %13 = sbr.rel target = $region3
  $region8: #{_lambda_.2} parent=0 // loop_exit
    _

</llo_original>
